<compile_context>
chip_gen: v6e
topology: v6e:2x2x1
jax: 0.10.0
libtpu: 0.0.40
codegen_flags: <defaults>
</compile_context>

<pallas_src>
import functools

import jax
import jax.numpy as jnp
from jax.experimental import pallas as pl
from jax.experimental.pallas import tpu as pltpu

# ---- small synthetic RoBERTa config -----------------------------------------
B, S, H = 2, 8, 128          # batch, seq, hidden
NH, DH = 2, 64               # heads, head dim (NH * DH == H)
INTER = 256                  # FFN intermediate size
LAYERS = 2                   # encoder layers
VOCAB = 100                  # vocab size
MAX_POS = S + 2              # RoBERTa position table size (padding_idx offset)
PAD_ID = 1                   # RoBERTa padding_idx
NUM_LABELS = 1
EPS = 1e-5                   # layer_norm_eps
OUT_PAD = 128                # lane-dense padded logits width

# rows of the packed per-layer vector array `vecs` (LAYERS, 9, H)
_BQ, _BK, _BV, _BO, _LN1G, _LN1B, _B2, _LN2G, _LN2B = range(9)
# rows of the packed misc vector array (3, H)
_EMB_G, _EMB_B, _HEAD_B = range(3)


# ---- in-kernel helpers (all f32) ---------------------------------------------
def _layernorm(x, g, b):
    mu = jnp.mean(x, axis=-1, keepdims=True)
    var = jnp.mean(jnp.square(x - mu), axis=-1, keepdims=True)
    return (x - mu) * jax.lax.rsqrt(var + EPS) * g + b


def _softmax_last(x):
    m = jnp.max(x, axis=-1, keepdims=True)
    e = jnp.exp(x - m)
    return e / jnp.sum(e, axis=-1, keepdims=True)


def _gelu(x):
    # TODO(synk): HF RoBERTa uses exact erf-GELU; tanh approximation used here
    # for robust Mosaic lowering (difference ~1e-3).
    c = 0.7978845608028654  # sqrt(2/pi)
    return 0.5 * x * (1.0 + jnp.tanh(c * (x + 0.044715 * x * x * x)))


# ---- the fused Pallas kernel (one batch element per grid step) ----------------
def roberta_cls_kernel(emb_ref, mask_ref, misc_ref,
                       wqkv_ref, wo_ref, wi_ref, w2_ref,
                       vecs_ref, bi_ref, headcat_ref, outb_ref,
                       out_ref):
    # embeddings LayerNorm (dropout is identity in eval)
    x = _layernorm(emb_ref[0], misc_ref[_EMB_G], misc_ref[_EMB_B])    # (S, H) f32

    # additive attention-mask bias, HF style: (1 - mask) * large_negative
    bias = ((1.0 - mask_ref[0, 0]) * -1e9)[None, None, :]             # (1, 1, S)
    scale = 1.0 / (DH ** 0.5)

    # TODO(synk): at real RoBERTa scale (H=768, 12 layers) this unrolled loop
    # should become an "arbitrary" grid axis with per-layer streamed weights.
    for l in range(LAYERS):
        # --- self attention: fused QKV, one (S,H)x(H,3H) MXU dot -------------
        xb = x.astype(jnp.bfloat16)
        qkv = jnp.dot(xb, wqkv_ref[l],
                      preferred_element_type=jnp.float32)             # (S, 3H)
        q = qkv[:, 0 * H:1 * H] + vecs_ref[l, _BQ]
        k = qkv[:, 1 * H:2 * H] + vecs_ref[l, _BK]
        v = qkv[:, 2 * H:3 * H] + vecs_ref[l, _BV]

        # head-batched attention (no per-head lane slicing / concat)
        qh = q.reshape(S, NH, DH).transpose(1, 0, 2)                  # (NH, S, DH)
        kh = k.reshape(S, NH, DH).transpose(1, 0, 2)
        vh = v.reshape(S, NH, DH).transpose(1, 0, 2)
        s = jnp.einsum('hqd,hkd->hqk', qh, kh,
                       preferred_element_type=jnp.float32) * scale + bias
        p = _softmax_last(s)                                          # (NH, S, S)
        ctx = jnp.einsum('hqk,hkd->hqd', p, vh,
                         preferred_element_type=jnp.float32)          # (NH, S, DH)
        ctx = ctx.transpose(1, 0, 2).reshape(S, H)                    # (S, H)

        attn = jnp.dot(ctx.astype(jnp.bfloat16), wo_ref[l],
                       preferred_element_type=jnp.float32) + vecs_ref[l, _BO]
        x = _layernorm(attn + x, vecs_ref[l, _LN1G], vecs_ref[l, _LN1B])

        # --- feed forward ------------------------------------------------------
        inter = jnp.dot(x.astype(jnp.bfloat16), wi_ref[l],
                        preferred_element_type=jnp.float32) + bi_ref[l]
        inter = _gelu(inter)                                          # (S, INTER)
        ffn = jnp.dot(inter.astype(jnp.bfloat16), w2_ref[l],
                      preferred_element_type=jnp.float32) + vecs_ref[l, _B2]
        x = _layernorm(ffn + x, vecs_ref[l, _LN2G], vecs_ref[l, _LN2B])

    # --- classification head on the <s> (first) token ---------------------------
    x0 = x[0:1, :]                                                    # (1, H)
    hcat = headcat_ref[...]                                           # (H, H+128) bf16
    pooled = jnp.tanh(
        jnp.dot(x0.astype(jnp.bfloat16), hcat[:, :H],
                preferred_element_type=jnp.float32) + misc_ref[_HEAD_B])  # (1, H)
    # out_proj weight lives (zero-padded) in lanes [H:H+128]; column 0 is real.
    logits = jnp.dot(pooled.astype(jnp.bfloat16), hcat[:, H:],
                     preferred_element_type=jnp.float32) + outb_ref[0, 0]  # (1, 128)
    out_ref[0] = logits                                               # lane-dense store


# ---- parameters (deterministic synthetic init, packed layout) ------------------
def init_params(key):
    std = 0.02
    ks = iter(jax.random.split(key, 16))

    def nrm(shape):
        return std * jax.random.normal(next(ks), shape, dtype=jnp.float32)

    word_emb = nrm((VOCAB, H))
    pos_emb = nrm((MAX_POS, H))
    type_emb = nrm((1, H))

    # fused / bf16 matmul weights
    wqkv = nrm((LAYERS, H, 3 * H)).astype(jnp.bfloat16)   # [wq | wk | wv]
    wo = nrm((LAYERS, H, H)).astype(jnp.bfloat16)
    wi = nrm((LAYERS, H, INTER)).astype(jnp.bfloat16)
    w2 = nrm((LAYERS, INTER, H)).astype(jnp.bfloat16)

    zeros_h = jnp.zeros((LAYERS, H), jnp.float32)
    ones_h = jnp.ones((LAYERS, H), jnp.float32)
    # packed per-layer vectors: [bq, bk, bv, bo, ln1_g, ln1_b, b2, ln2_g, ln2_b]
    vecs = jnp.stack([zeros_h, zeros_h, zeros_h, zeros_h,
                      ones_h, zeros_h, zeros_h, ones_h, zeros_h], axis=1)
    bi = jnp.zeros((LAYERS, INTER), jnp.float32)

    # misc (non-per-layer) vectors: [emb_ln_g, emb_ln_b, head_dense_bias]
    misc = jnp.stack([jnp.ones((H,), jnp.float32),
                      jnp.zeros((H,), jnp.float32),
                      jnp.zeros((H,), jnp.float32)], axis=0)          # (3, H)

    head_w = nrm((H, H))
    out_w = nrm((H, NUM_LABELS))
    out_w_pad = jnp.zeros((H, OUT_PAD), jnp.float32).at[:, :NUM_LABELS].set(out_w)
    head_cat = jnp.concatenate([head_w, out_w_pad], axis=1).astype(jnp.bfloat16)
    out_b = jnp.zeros((1, 1), jnp.float32)                            # SMEM scalar

    return dict(word_emb=word_emb, pos_emb=pos_emb, type_emb=type_emb,
                misc=misc, wqkv=wqkv, wo=wo, wi=wi, w2=w2,
                vecs=vecs, bi=bi, head_cat=head_cat, out_b=out_b)


def _cost_estimate(bytes_accessed):
    per_layer = (2 * S * H * 3 * H            # fused qkv
                 + 2 * NH * (2 * S * S * DH)  # scores + context
                 + 2 * S * H * H              # attn out proj
                 + 2 * 2 * S * H * INTER)     # FFN up + down
    flops = B * (LAYERS * per_layer + 2 * H * H + 2 * H * OUT_PAD)
    trans = B * (LAYERS * (NH * S * S + S * INTER) + H)
    return pl.CostEstimate(flops=int(flops), transcendentals=int(trans),
                           bytes_accessed=int(bytes_accessed))


# ---- wrapper (glue + pallas_call) ---------------------------------------------
def forward(input_ids, attention_mask, params):
    # embedding gathers + RoBERTa position ids (glue, plain JAX)
    word_e = params['word_emb'][input_ids]                            # (B, S, H)
    not_pad = (input_ids != PAD_ID).astype(jnp.int32)
    pos_ids = jnp.cumsum(not_pad, axis=1) * not_pad + PAD_ID
    pos_e = params['pos_emb'][pos_ids]                                # (B, S, H)
    type_e = params['type_emb'][jnp.zeros_like(input_ids)]            # (B, S, H)
    emb = (word_e + pos_e + type_e).astype(jnp.float32)
    amask = attention_mask.astype(jnp.float32).reshape(B, 1, S)

    inputs = [
        emb, amask, params['misc'],
        params['wqkv'], params['wo'], params['wi'], params['w2'],
        params['vecs'], params['bi'], params['head_cat'], params['out_b'],
    ]

    def full_block(a):
        nd = a.ndim
        return pl.BlockSpec(a.shape, lambda b, _nd=nd: (0,) * _nd)

    in_specs = [
        pl.BlockSpec((1, S, H), lambda b: (b, 0, 0)),   # embeddings, per batch
        pl.BlockSpec((1, 1, S), lambda b: (b, 0, 0)),   # attention mask, per batch
        full_block(params['misc']),
        full_block(params['wqkv']),
        full_block(params['wo']),
        full_block(params['wi']),
        full_block(params['w2']),
        full_block(params['vecs']),
        full_block(params['bi']),
        full_block(params['head_cat']),
        pl.BlockSpec(memory_space=pltpu.MemorySpace.SMEM),   # out_proj bias scalar
    ]
    out_specs = pl.BlockSpec((1, 1, OUT_PAD), lambda b: (b, 0, 0))

    bytes_in = sum(int(a.size) * a.dtype.itemsize for a in inputs)
    bytes_out = B * OUT_PAD * 4

    logits_pad = pl.pallas_call(
        roberta_cls_kernel,
        grid=(B,),
        out_shape=jax.ShapeDtypeStruct((B, 1, OUT_PAD), jnp.float32),
        in_specs=in_specs,
        out_specs=out_specs,
        compiler_params=pltpu.CompilerParams(
            dimension_semantics=("parallel",)),
        cost_estimate=_cost_estimate(bytes_in + bytes_out),
    )(*inputs)

    # outputs.logits.squeeze(-1): only lane 0 of the padded output is real
    return logits_pad[:, 0, 0]                                        # (B,)


# ---- main ---------------------------------------------------------------------
if __name__ == "__main__":
    key = jax.random.PRNGKey(0)
    k_param, k_ids = jax.random.split(key)

    params = init_params(k_param)
    input_ids = jax.random.randint(k_ids, (B, S), 0, VOCAB, dtype=jnp.int32)
    attention_mask = jnp.array(
        [[1] * S,
         [1] * (S - 2) + [0, 0]], dtype=jnp.int32)

    fwd = jax.jit(functools.partial(forward, params=params))
    out = fwd(input_ids, attention_mask)
    jax.block_until_ready(out)

    assert out.shape == (B,), out.shape
    assert out.dtype == jnp.float32
    assert bool(jnp.all(jnp.isfinite(out)))
    print("KERNEL_OK")
</pallas_src>

<mosaic_0001>
module attributes {stable_mosaic.version = 11 : i64} {
  func.func @roberta_cls_kernel(%arg0: i32, %arg1: memref<1x8x128xf32, #tpu.memory_space<vmem>>, %arg2: memref<1x1x8xf32, #tpu.memory_space<vmem>>, %arg3: memref<3x128xf32, #tpu.memory_space<vmem>>, %arg4: memref<2x128x384xbf16, #tpu.memory_space<vmem>>, %arg5: memref<2x128x128xbf16, #tpu.memory_space<vmem>>, %arg6: memref<2x128x256xbf16, #tpu.memory_space<vmem>>, %arg7: memref<2x256x128xbf16, #tpu.memory_space<vmem>>, %arg8: memref<2x9x128xf32, #tpu.memory_space<vmem>>, %arg9: memref<2x256xf32, #tpu.memory_space<vmem>>, %arg10: memref<128x256xbf16, #tpu.memory_space<vmem>>, %arg11: memref<1x1xf32, #tpu.memory_space<smem>>, %arg12: memref<1x1x128xf32, #tpu.memory_space<vmem>>) attributes {dimension_semantics = [#tpu.dimension_semantics<parallel>], iteration_bounds = array<i64: 2>, scalar_prefetch = 0 : i64, scratch_operands = 0 : i64, tpu.core_type = #tpu.core_type<tc>, window_params = [{transform_indices = @transform_0, window_bounds = array<i64: 1, 8, 128>}, {transform_indices = @transform_1, window_bounds = array<i64: 1, 1, 8>}, {pipeline_mode = #tpu.pipeline_mode<synchronous>, transform_indices = @transform_2, window_bounds = array<i64: 3, 128>}, {pipeline_mode = #tpu.pipeline_mode<synchronous>, transform_indices = @transform_3, window_bounds = array<i64: 2, 128, 384>}, {pipeline_mode = #tpu.pipeline_mode<synchronous>, transform_indices = @transform_4, window_bounds = array<i64: 2, 128, 128>}, {pipeline_mode = #tpu.pipeline_mode<synchronous>, transform_indices = @transform_5, window_bounds = array<i64: 2, 128, 256>}, {pipeline_mode = #tpu.pipeline_mode<synchronous>, transform_indices = @transform_6, window_bounds = array<i64: 2, 256, 128>}, {pipeline_mode = #tpu.pipeline_mode<synchronous>, transform_indices = @transform_7, window_bounds = array<i64: 2, 9, 128>}, {pipeline_mode = #tpu.pipeline_mode<synchronous>, transform_indices = @transform_8, window_bounds = array<i64: 2, 256>}, {pipeline_mode = #tpu.pipeline_mode<synchronous>, transform_indices = @transform_9, window_bounds = array<i64: 128, 256>}, {transform_indices = @transform_10, window_bounds = array<i64: 1, 1>}, {transform_indices = @transform_11, window_bounds = array<i64: 1, 1, 128>}]} {
    %c0 = arith.constant 0 : index
    %c0_0 = arith.constant 0 : index
    %c0_1 = arith.constant 0 : index
    %0 = vector.load %arg1[%c0, %c0_0, %c0_1] : memref<1x8x128xf32, #tpu.memory_space<vmem>>, vector<1x8x128xf32>
    %1 = vector.shape_cast %0 : vector<1x8x128xf32> to vector<8x128xf32>
    %c0_2 = arith.constant 0 : index
    %c0_3 = arith.constant 0 : index
    %2 = vector.load %arg3[%c0_2, %c0_3] : memref<3x128xf32, #tpu.memory_space<vmem>>, vector<1x128xf32>
    %3 = vector.shape_cast %2 : vector<1x128xf32> to vector<128xf32>
    %c1 = arith.constant 1 : index
    %c0_4 = arith.constant 0 : index
    %4 = vector.load %arg3[%c1, %c0_4] : memref<3x128xf32, #tpu.memory_space<vmem>>, vector<1x128xf32>
    %5 = vector.shape_cast %4 : vector<1x128xf32> to vector<128xf32>
    %cst = arith.constant dense<0.000000e+00> : vector<8xf32>
    %6 = vector.multi_reduction <add>, %1, %cst [1] : vector<8x128xf32> to vector<8xf32>
    %7 = vector.shape_cast %6 : vector<8xf32> to vector<8x1xf32>
    %cst_5 = arith.constant 1.280000e+02 : f32
    %8 = vector.broadcast %cst_5 : f32 to vector<8x1xf32>
    %9 = arith.divf %7, %8 : vector<8x1xf32>
    %10 = vector.broadcast %9 : vector<8x1xf32> to vector<8x128xf32>
    %11 = arith.subf %1, %10 : vector<8x128xf32>
    %12 = arith.mulf %11, %11 : vector<8x128xf32>
    %cst_6 = arith.constant dense<0.000000e+00> : vector<8xf32>
    %13 = vector.multi_reduction <add>, %12, %cst_6 [1] : vector<8x128xf32> to vector<8xf32>
    %14 = vector.shape_cast %13 : vector<8xf32> to vector<8x1xf32>
    %cst_7 = arith.constant 1.280000e+02 : f32
    %15 = vector.broadcast %cst_7 : f32 to vector<8x1xf32>
    %16 = arith.divf %14, %15 : vector<8x1xf32>
    %17 = vector.broadcast %9 : vector<8x1xf32> to vector<8x128xf32>
    %18 = arith.subf %1, %17 : vector<8x128xf32>
    %cst_8 = arith.constant 9.99999974E-6 : f32
    %19 = vector.broadcast %cst_8 : f32 to vector<8x1xf32>
    %20 = arith.addf %16, %19 : vector<8x1xf32>
    %21 = math.rsqrt %20 : vector<8x1xf32>
    %22 = vector.broadcast %21 : vector<8x1xf32> to vector<8x128xf32>
    %23 = arith.mulf %18, %22 : vector<8x128xf32>
    %24 = vector.shape_cast %3 : vector<128xf32> to vector<1x128xf32>
    %25 = vector.broadcast %24 : vector<1x128xf32> to vector<8x128xf32>
    %26 = arith.mulf %23, %25 : vector<8x128xf32>
    %27 = vector.shape_cast %5 : vector<128xf32> to vector<1x128xf32>
    %28 = vector.broadcast %27 : vector<1x128xf32> to vector<8x128xf32>
    %29 = arith.addf %26, %28 : vector<8x128xf32>
    %c0_9 = arith.constant 0 : index
    %c0_10 = arith.constant 0 : index
    %c0_11 = arith.constant 0 : index
    %30 = vector.load %arg2[%c0_9, %c0_10, %c0_11] : memref<1x1x8xf32, #tpu.memory_space<vmem>>, vector<1x1x8xf32>
    %31 = vector.shape_cast %30 : vector<1x1x8xf32> to vector<8xf32>
    %cst_12 = arith.constant 1.000000e+00 : f32
    %32 = vector.broadcast %cst_12 : f32 to vector<8xf32>
    %33 = arith.subf %32, %31 : vector<8xf32>
    %cst_13 = arith.constant -1.000000e+09 : f32
    %34 = vector.broadcast %cst_13 : f32 to vector<8xf32>
    %35 = arith.mulf %33, %34 : vector<8xf32>
    %36 = vector.shape_cast %35 : vector<8xf32> to vector<1x1x8xf32>
    %37 = arith.truncf %29 : vector<8x128xf32> to vector<8x128xbf16>
    %c0_14 = arith.constant 0 : index
    %c0_15 = arith.constant 0 : index
    %c0_16 = arith.constant 0 : index
    %38 = vector.load %arg4[%c0_14, %c0_15, %c0_16] : memref<2x128x384xbf16, #tpu.memory_space<vmem>>, vector<1x128x384xbf16>
    %39 = vector.shape_cast %38 : vector<1x128x384xbf16> to vector<128x384xbf16>
    %cst_17 = arith.constant dense<0.000000e+00> : vector<8x384xf32>
    %40 = tpu.matmul %37, %39, %cst_17 {dimension_numbers = #tpu.dot_dimension_numbers<[1], [0], [0], [1], [0, 0, 1, 1], [], []>} : vector<8x128xbf16>, vector<128x384xbf16>, vector<8x384xf32> -> vector<8x384xf32>
    %41 = vector.extract_strided_slice %40 {offsets = [0, 0], sizes = [8, 128], strides = [1, 1]} : vector<8x384xf32> to vector<8x128xf32>
    %c0_18 = arith.constant 0 : index
    %c0_19 = arith.constant 0 : index
    %c0_20 = arith.constant 0 : index
    %42 = vector.load %arg8[%c0_18, %c0_19, %c0_20] : memref<2x9x128xf32, #tpu.memory_space<vmem>>, vector<1x1x128xf32>
    %43 = vector.shape_cast %42 : vector<1x1x128xf32> to vector<128xf32>
    %44 = vector.shape_cast %43 : vector<128xf32> to vector<1x128xf32>
    %45 = vector.broadcast %44 : vector<1x128xf32> to vector<8x128xf32>
    %46 = arith.addf %41, %45 : vector<8x128xf32>
    %47 = vector.extract_strided_slice %40 {offsets = [0, 128], sizes = [8, 128], strides = [1, 1]} : vector<8x384xf32> to vector<8x128xf32>
    %c0_21 = arith.constant 0 : index
    %c1_22 = arith.constant 1 : index
    %c0_23 = arith.constant 0 : index
    %48 = vector.load %arg8[%c0_21, %c1_22, %c0_23] : memref<2x9x128xf32, #tpu.memory_space<vmem>>, vector<1x1x128xf32>
    %49 = vector.shape_cast %48 : vector<1x1x128xf32> to vector<128xf32>
    %50 = vector.shape_cast %49 : vector<128xf32> to vector<1x128xf32>
    %51 = vector.broadcast %50 : vector<1x128xf32> to vector<8x128xf32>
    %52 = arith.addf %47, %51 : vector<8x128xf32>
    %53 = vector.extract_strided_slice %40 {offsets = [0, 256], sizes = [8, 128], strides = [1, 1]} : vector<8x384xf32> to vector<8x128xf32>
    %c0_24 = arith.constant 0 : index
    %c2 = arith.constant 2 : index
    %c0_25 = arith.constant 0 : index
    %54 = vector.load %arg8[%c0_24, %c2, %c0_25] : memref<2x9x128xf32, #tpu.memory_space<vmem>>, vector<1x1x128xf32>
    %55 = vector.shape_cast %54 : vector<1x1x128xf32> to vector<128xf32>
    %56 = vector.shape_cast %55 : vector<128xf32> to vector<1x128xf32>
    %57 = vector.broadcast %56 : vector<1x128xf32> to vector<8x128xf32>
    %58 = arith.addf %53, %57 : vector<8x128xf32>
    %59 = vector.shape_cast %46 : vector<8x128xf32> to vector<8x2x64xf32>
    %60 = tpu.transpose %59, [1, 0, 2] : vector<8x2x64xf32> -> vector<2x8x64xf32>
    %61 = vector.shape_cast %52 : vector<8x128xf32> to vector<8x2x64xf32>
    %62 = tpu.transpose %61, [1, 0, 2] : vector<8x2x64xf32> -> vector<2x8x64xf32>
    %63 = vector.shape_cast %58 : vector<8x128xf32> to vector<8x2x64xf32>
    %64 = tpu.transpose %63, [1, 0, 2] : vector<8x2x64xf32> -> vector<2x8x64xf32>
    "tpu.trace_start"() <{level = 10 : i32, message = "hqd,hkd->hqk"}> : () -> ()
    %cst_26 = arith.constant dense<0.000000e+00> : vector<2x8x8xf32>
    %65 = tpu.matmul %60, %62, %cst_26 {dimension_numbers = #tpu.dot_dimension_numbers<[2], [2], [1], [1], [0, 0, 0, 1, 1, 1], [0], [0]>} : vector<2x8x64xf32>, vector<2x8x64xf32>, vector<2x8x8xf32> -> vector<2x8x8xf32>
    "tpu.trace_stop"() : () -> ()
    %cst_27 = arith.constant 1.250000e-01 : f32
    %66 = vector.broadcast %cst_27 : f32 to vector<2x8x8xf32>
    %67 = arith.mulf %65, %66 : vector<2x8x8xf32>
    %68 = vector.broadcast %36 : vector<1x1x8xf32> to vector<2x8x8xf32>
    %69 = arith.addf %67, %68 : vector<2x8x8xf32>
    %cst_28 = arith.constant dense<0xFF800000> : vector<2x8xf32>
    %70 = vector.multi_reduction <maximumf>, %69, %cst_28 [2] : vector<2x8x8xf32> to vector<2x8xf32>
    %71 = vector.shape_cast %70 : vector<2x8xf32> to vector<2x8x1xf32>
    %72 = vector.broadcast %71 : vector<2x8x1xf32> to vector<2x8x8xf32>
    %73 = arith.subf %69, %72 : vector<2x8x8xf32>
    %74 = math.exp %73 : vector<2x8x8xf32>
    %cst_29 = arith.constant dense<0.000000e+00> : vector<2x8xf32>
    %75 = vector.multi_reduction <add>, %74, %cst_29 [2] : vector<2x8x8xf32> to vector<2x8xf32>
    %76 = vector.shape_cast %75 : vector<2x8xf32> to vector<2x8x1xf32>
    %77 = vector.broadcast %76 : vector<2x8x1xf32> to vector<2x8x8xf32>
    %78 = arith.divf %74, %77 : vector<2x8x8xf32>
    "tpu.trace_start"() <{level = 10 : i32, message = "hqk,hkd->hqd"}> : () -> ()
    %cst_30 = arith.constant dense<0.000000e+00> : vector<2x8x64xf32>
    %79 = tpu.matmul %78, %64, %cst_30 {dimension_numbers = #tpu.dot_dimension_numbers<[2], [1], [1], [2], [0, 0, 0, 1, 1, 2], [0], [0]>} : vector<2x8x8xf32>, vector<2x8x64xf32>, vector<2x8x64xf32> -> vector<2x8x64xf32>
    "tpu.trace_stop"() : () -> ()
    %80 = tpu.transpose %79, [1, 0, 2] : vector<2x8x64xf32> -> vector<8x2x64xf32>
    %81 = vector.shape_cast %80 : vector<8x2x64xf32> to vector<8x128xf32>
    %82 = arith.truncf %81 : vector<8x128xf32> to vector<8x128xbf16>
    %c0_31 = arith.constant 0 : index
    %c0_32 = arith.constant 0 : index
    %c0_33 = arith.constant 0 : index
    %83 = vector.load %arg5[%c0_31, %c0_32, %c0_33] : memref<2x128x128xbf16, #tpu.memory_space<vmem>>, vector<1x128x128xbf16>
    %84 = vector.shape_cast %83 : vector<1x128x128xbf16> to vector<128x128xbf16>
    %cst_34 = arith.constant dense<0.000000e+00> : vector<8x128xf32>
    %85 = tpu.matmul %82, %84, %cst_34 {dimension_numbers = #tpu.dot_dimension_numbers<[1], [0], [0], [1], [0, 0, 1, 1], [], []>} : vector<8x128xbf16>, vector<128x128xbf16>, vector<8x128xf32> -> vector<8x128xf32>
    %c0_35 = arith.constant 0 : index
    %c3 = arith.constant 3 : index
    %c0_36 = arith.constant 0 : index
    %86 = vector.load %arg8[%c0_35, %c3, %c0_36] : memref<2x9x128xf32, #tpu.memory_space<vmem>>, vector<1x1x128xf32>
    %87 = vector.shape_cast %86 : vector<1x1x128xf32> to vector<128xf32>
    %88 = vector.shape_cast %87 : vector<128xf32> to vector<1x128xf32>
    %89 = vector.broadcast %88 : vector<1x128xf32> to vector<8x128xf32>
    %90 = arith.addf %85, %89 : vector<8x128xf32>
    %91 = arith.addf %90, %29 : vector<8x128xf32>
    %c0_37 = arith.constant 0 : index
    %c4 = arith.constant 4 : index
    %c0_38 = arith.constant 0 : index
    %92 = vector.load %arg8[%c0_37, %c4, %c0_38] : memref<2x9x128xf32, #tpu.memory_space<vmem>>, vector<1x1x128xf32>
    %93 = vector.shape_cast %92 : vector<1x1x128xf32> to vector<128xf32>
    %c0_39 = arith.constant 0 : index
    %c5 = arith.constant 5 : index
    %c0_40 = arith.constant 0 : index
    %94 = vector.load %arg8[%c0_39, %c5, %c0_40] : memref<2x9x128xf32, #tpu.memory_space<vmem>>, vector<1x1x128xf32>
    %95 = vector.shape_cast %94 : vector<1x1x128xf32> to vector<128xf32>
    %cst_41 = arith.constant dense<0.000000e+00> : vector<8xf32>
    %96 = vector.multi_reduction <add>, %91, %cst_41 [1] : vector<8x128xf32> to vector<8xf32>
    %97 = vector.shape_cast %96 : vector<8xf32> to vector<8x1xf32>
    %cst_42 = arith.constant 1.280000e+02 : f32
    %98 = vector.broadcast %cst_42 : f32 to vector<8x1xf32>
    %99 = arith.divf %97, %98 : vector<8x1xf32>
    %100 = vector.broadcast %99 : vector<8x1xf32> to vector<8x128xf32>
    %101 = arith.subf %91, %100 : vector<8x128xf32>
    %102 = arith.mulf %101, %101 : vector<8x128xf32>
    %cst_43 = arith.constant dense<0.000000e+00> : vector<8xf32>
    %103 = vector.multi_reduction <add>, %102, %cst_43 [1] : vector<8x128xf32> to vector<8xf32>
    %104 = vector.shape_cast %103 : vector<8xf32> to vector<8x1xf32>
    %cst_44 = arith.constant 1.280000e+02 : f32
    %105 = vector.broadcast %cst_44 : f32 to vector<8x1xf32>
    %106 = arith.divf %104, %105 : vector<8x1xf32>
    %107 = vector.broadcast %99 : vector<8x1xf32> to vector<8x128xf32>
    %108 = arith.subf %91, %107 : vector<8x128xf32>
    %cst_45 = arith.constant 9.99999974E-6 : f32
    %109 = vector.broadcast %cst_45 : f32 to vector<8x1xf32>
    %110 = arith.addf %106, %109 : vector<8x1xf32>
    %111 = math.rsqrt %110 : vector<8x1xf32>
    %112 = vector.broadcast %111 : vector<8x1xf32> to vector<8x128xf32>
    %113 = arith.mulf %108, %112 : vector<8x128xf32>
    %114 = vector.shape_cast %93 : vector<128xf32> to vector<1x128xf32>
    %115 = vector.broadcast %114 : vector<1x128xf32> to vector<8x128xf32>
    %116 = arith.mulf %113, %115 : vector<8x128xf32>
    %117 = vector.shape_cast %95 : vector<128xf32> to vector<1x128xf32>
    %118 = vector.broadcast %117 : vector<1x128xf32> to vector<8x128xf32>
    %119 = arith.addf %116, %118 : vector<8x128xf32>
    %120 = arith.truncf %119 : vector<8x128xf32> to vector<8x128xbf16>
    %c0_46 = arith.constant 0 : index
    %c0_47 = arith.constant 0 : index
    %c0_48 = arith.constant 0 : index
    %121 = vector.load %arg6[%c0_46, %c0_47, %c0_48] : memref<2x128x256xbf16, #tpu.memory_space<vmem>>, vector<1x128x256xbf16>
    %122 = vector.shape_cast %121 : vector<1x128x256xbf16> to vector<128x256xbf16>
    %cst_49 = arith.constant dense<0.000000e+00> : vector<8x256xf32>
    %123 = tpu.matmul %120, %122, %cst_49 {dimension_numbers = #tpu.dot_dimension_numbers<[1], [0], [0], [1], [0, 0, 1, 1], [], []>} : vector<8x128xbf16>, vector<128x256xbf16>, vector<8x256xf32> -> vector<8x256xf32>
    %c0_50 = arith.constant 0 : index
    %c0_51 = arith.constant 0 : index
    %124 = vector.load %arg9[%c0_50, %c0_51] : memref<2x256xf32, #tpu.memory_space<vmem>>, vector<1x256xf32>
    %125 = vector.shape_cast %124 : vector<1x256xf32> to vector<256xf32>
    %126 = vector.shape_cast %125 : vector<256xf32> to vector<1x256xf32>
    %127 = vector.broadcast %126 : vector<1x256xf32> to vector<8x256xf32>
    %128 = arith.addf %123, %127 : vector<8x256xf32>
    %cst_52 = arith.constant 5.000000e-01 : f32
    %129 = vector.broadcast %cst_52 : f32 to vector<8x256xf32>
    %130 = arith.mulf %129, %128 : vector<8x256xf32>
    %cst_53 = arith.constant 4.471500e-02 : f32
    %131 = vector.broadcast %cst_53 : f32 to vector<8x256xf32>
    %132 = arith.mulf %131, %128 : vector<8x256xf32>
    %133 = arith.mulf %132, %128 : vector<8x256xf32>
    %134 = arith.mulf %133, %128 : vector<8x256xf32>
    %135 = arith.addf %128, %134 : vector<8x256xf32>
    %cst_54 = arith.constant 0.797884583 : f32
    %136 = vector.broadcast %cst_54 : f32 to vector<8x256xf32>
    %137 = arith.mulf %136, %135 : vector<8x256xf32>
    %138 = math.tanh %137 : vector<8x256xf32>
    %cst_55 = arith.constant 1.000000e+00 : f32
    %139 = vector.broadcast %cst_55 : f32 to vector<8x256xf32>
    %140 = arith.addf %139, %138 : vector<8x256xf32>
    %141 = arith.mulf %130, %140 : vector<8x256xf32>
    %142 = arith.truncf %141 : vector<8x256xf32> to vector<8x256xbf16>
    %c0_56 = arith.constant 0 : index
    %c0_57 = arith.constant 0 : index
    %c0_58 = arith.constant 0 : index
    %143 = vector.load %arg7[%c0_56, %c0_57, %c0_58] : memref<2x256x128xbf16, #tpu.memory_space<vmem>>, vector<1x256x128xbf16>
    %144 = vector.shape_cast %143 : vector<1x256x128xbf16> to vector<256x128xbf16>
    %cst_59 = arith.constant dense<0.000000e+00> : vector<8x128xf32>
    %145 = tpu.matmul %142, %144, %cst_59 {dimension_numbers = #tpu.dot_dimension_numbers<[1], [0], [0], [1], [0, 0, 1, 1], [], []>} : vector<8x256xbf16>, vector<256x128xbf16>, vector<8x128xf32> -> vector<8x128xf32>
    %c0_60 = arith.constant 0 : index
    %c6 = arith.constant 6 : index
    %c0_61 = arith.constant 0 : index
    %146 = vector.load %arg8[%c0_60, %c6, %c0_61] : memref<2x9x128xf32, #tpu.memory_space<vmem>>, vector<1x1x128xf32>
    %147 = vector.shape_cast %146 : vector<1x1x128xf32> to vector<128xf32>
    %148 = vector.shape_cast %147 : vector<128xf32> to vector<1x128xf32>
    %149 = vector.broadcast %148 : vector<1x128xf32> to vector<8x128xf32>
    %150 = arith.addf %145, %149 : vector<8x128xf32>
    %151 = arith.addf %150, %119 : vector<8x128xf32>
    %c0_62 = arith.constant 0 : index
    %c7 = arith.constant 7 : index
    %c0_63 = arith.constant 0 : index
    %152 = vector.load %arg8[%c0_62, %c7, %c0_63] : memref<2x9x128xf32, #tpu.memory_space<vmem>>, vector<1x1x128xf32>
    %153 = vector.shape_cast %152 : vector<1x1x128xf32> to vector<128xf32>
    %c0_64 = arith.constant 0 : index
    %c8 = arith.constant 8 : index
    %c0_65 = arith.constant 0 : index
    %154 = vector.load %arg8[%c0_64, %c8, %c0_65] : memref<2x9x128xf32, #tpu.memory_space<vmem>>, vector<1x1x128xf32>
    %155 = vector.shape_cast %154 : vector<1x1x128xf32> to vector<128xf32>
    %cst_66 = arith.constant dense<0.000000e+00> : vector<8xf32>
    %156 = vector.multi_reduction <add>, %151, %cst_66 [1] : vector<8x128xf32> to vector<8xf32>
    %157 = vector.shape_cast %156 : vector<8xf32> to vector<8x1xf32>
    %cst_67 = arith.constant 1.280000e+02 : f32
    %158 = vector.broadcast %cst_67 : f32 to vector<8x1xf32>
    %159 = arith.divf %157, %158 : vector<8x1xf32>
    %160 = vector.broadcast %159 : vector<8x1xf32> to vector<8x128xf32>
    %161 = arith.subf %151, %160 : vector<8x128xf32>
    %162 = arith.mulf %161, %161 : vector<8x128xf32>
    %cst_68 = arith.constant dense<0.000000e+00> : vector<8xf32>
    %163 = vector.multi_reduction <add>, %162, %cst_68 [1] : vector<8x128xf32> to vector<8xf32>
    %164 = vector.shape_cast %163 : vector<8xf32> to vector<8x1xf32>
    %cst_69 = arith.constant 1.280000e+02 : f32
    %165 = vector.broadcast %cst_69 : f32 to vector<8x1xf32>
    %166 = arith.divf %164, %165 : vector<8x1xf32>
    %167 = vector.broadcast %159 : vector<8x1xf32> to vector<8x128xf32>
    %168 = arith.subf %151, %167 : vector<8x128xf32>
    %cst_70 = arith.constant 9.99999974E-6 : f32
    %169 = vector.broadcast %cst_70 : f32 to vector<8x1xf32>
    %170 = arith.addf %166, %169 : vector<8x1xf32>
    %171 = math.rsqrt %170 : vector<8x1xf32>
    %172 = vector.broadcast %171 : vector<8x1xf32> to vector<8x128xf32>
    %173 = arith.mulf %168, %172 : vector<8x128xf32>
    %174 = vector.shape_cast %153 : vector<128xf32> to vector<1x128xf32>
    %175 = vector.broadcast %174 : vector<1x128xf32> to vector<8x128xf32>
    %176 = arith.mulf %173, %175 : vector<8x128xf32>
    %177 = vector.shape_cast %155 : vector<128xf32> to vector<1x128xf32>
    %178 = vector.broadcast %177 : vector<1x128xf32> to vector<8x128xf32>
    %179 = arith.addf %176, %178 : vector<8x128xf32>
    %180 = arith.truncf %179 : vector<8x128xf32> to vector<8x128xbf16>
    %c1_71 = arith.constant 1 : index
    %c0_72 = arith.constant 0 : index
    %c0_73 = arith.constant 0 : index
    %181 = vector.load %arg4[%c1_71, %c0_72, %c0_73] : memref<2x128x384xbf16, #tpu.memory_space<vmem>>, vector<1x128x384xbf16>
    %182 = vector.shape_cast %181 : vector<1x128x384xbf16> to vector<128x384xbf16>
    %cst_74 = arith.constant dense<0.000000e+00> : vector<8x384xf32>
    %183 = tpu.matmul %180, %182, %cst_74 {dimension_numbers = #tpu.dot_dimension_numbers<[1], [0], [0], [1], [0, 0, 1, 1], [], []>} : vector<8x128xbf16>, vector<128x384xbf16>, vector<8x384xf32> -> vector<8x384xf32>
    %184 = vector.extract_strided_slice %183 {offsets = [0, 0], sizes = [8, 128], strides = [1, 1]} : vector<8x384xf32> to vector<8x128xf32>
    %c1_75 = arith.constant 1 : index
    %c0_76 = arith.constant 0 : index
    %c0_77 = arith.constant 0 : index
    %185 = vector.load %arg8[%c1_75, %c0_76, %c0_77] : memref<2x9x128xf32, #tpu.memory_space<vmem>>, vector<1x1x128xf32>
    %186 = vector.shape_cast %185 : vector<1x1x128xf32> to vector<128xf32>
    %187 = vector.shape_cast %186 : vector<128xf32> to vector<1x128xf32>
    %188 = vector.broadcast %187 : vector<1x128xf32> to vector<8x128xf32>
    %189 = arith.addf %184, %188 : vector<8x128xf32>
    %190 = vector.extract_strided_slice %183 {offsets = [0, 128], sizes = [8, 128], strides = [1, 1]} : vector<8x384xf32> to vector<8x128xf32>
    %c1_78 = arith.constant 1 : index
    %c1_79 = arith.constant 1 : index
    %c0_80 = arith.constant 0 : index
    %191 = vector.load %arg8[%c1_78, %c1_79, %c0_80] : memref<2x9x128xf32, #tpu.memory_space<vmem>>, vector<1x1x128xf32>
    %192 = vector.shape_cast %191 : vector<1x1x128xf32> to vector<128xf32>
    %193 = vector.shape_cast %192 : vector<128xf32> to vector<1x128xf32>
    %194 = vector.broadcast %193 : vector<1x128xf32> to vector<8x128xf32>
    %195 = arith.addf %190, %194 : vector<8x128xf32>
    %196 = vector.extract_strided_slice %183 {offsets = [0, 256], sizes = [8, 128], strides = [1, 1]} : vector<8x384xf32> to vector<8x128xf32>
    %c1_81 = arith.constant 1 : index
    %c2_82 = arith.constant 2 : index
    %c0_83 = arith.constant 0 : index
    %197 = vector.load %arg8[%c1_81, %c2_82, %c0_83] : memref<2x9x128xf32, #tpu.memory_space<vmem>>, vector<1x1x128xf32>
    %198 = vector.shape_cast %197 : vector<1x1x128xf32> to vector<128xf32>
    %199 = vector.shape_cast %198 : vector<128xf32> to vector<1x128xf32>
    %200 = vector.broadcast %199 : vector<1x128xf32> to vector<8x128xf32>
    %201 = arith.addf %196, %200 : vector<8x128xf32>
    %202 = vector.shape_cast %189 : vector<8x128xf32> to vector<8x2x64xf32>
    %203 = tpu.transpose %202, [1, 0, 2] : vector<8x2x64xf32> -> vector<2x8x64xf32>
    %204 = vector.shape_cast %195 : vector<8x128xf32> to vector<8x2x64xf32>
    %205 = tpu.transpose %204, [1, 0, 2] : vector<8x2x64xf32> -> vector<2x8x64xf32>
    %206 = vector.shape_cast %201 : vector<8x128xf32> to vector<8x2x64xf32>
    %207 = tpu.transpose %206, [1, 0, 2] : vector<8x2x64xf32> -> vector<2x8x64xf32>
    "tpu.trace_start"() <{level = 10 : i32, message = "hqd,hkd->hqk"}> : () -> ()
    %cst_84 = arith.constant dense<0.000000e+00> : vector<2x8x8xf32>
    %208 = tpu.matmul %203, %205, %cst_84 {dimension_numbers = #tpu.dot_dimension_numbers<[2], [2], [1], [1], [0, 0, 0, 1, 1, 1], [0], [0]>} : vector<2x8x64xf32>, vector<2x8x64xf32>, vector<2x8x8xf32> -> vector<2x8x8xf32>
    "tpu.trace_stop"() : () -> ()
    %cst_85 = arith.constant 1.250000e-01 : f32
    %209 = vector.broadcast %cst_85 : f32 to vector<2x8x8xf32>
    %210 = arith.mulf %208, %209 : vector<2x8x8xf32>
    %211 = vector.broadcast %36 : vector<1x1x8xf32> to vector<2x8x8xf32>
    %212 = arith.addf %210, %211 : vector<2x8x8xf32>
    %cst_86 = arith.constant dense<0xFF800000> : vector<2x8xf32>
    %213 = vector.multi_reduction <maximumf>, %212, %cst_86 [2] : vector<2x8x8xf32> to vector<2x8xf32>
    %214 = vector.shape_cast %213 : vector<2x8xf32> to vector<2x8x1xf32>
    %215 = vector.broadcast %214 : vector<2x8x1xf32> to vector<2x8x8xf32>
    %216 = arith.subf %212, %215 : vector<2x8x8xf32>
    %217 = math.exp %216 : vector<2x8x8xf32>
    %cst_87 = arith.constant dense<0.000000e+00> : vector<2x8xf32>
    %218 = vector.multi_reduction <add>, %217, %cst_87 [2] : vector<2x8x8xf32> to vector<2x8xf32>
    %219 = vector.shape_cast %218 : vector<2x8xf32> to vector<2x8x1xf32>
    %220 = vector.broadcast %219 : vector<2x8x1xf32> to vector<2x8x8xf32>
    %221 = arith.divf %217, %220 : vector<2x8x8xf32>
    "tpu.trace_start"() <{level = 10 : i32, message = "hqk,hkd->hqd"}> : () -> ()
    %cst_88 = arith.constant dense<0.000000e+00> : vector<2x8x64xf32>
    %222 = tpu.matmul %221, %207, %cst_88 {dimension_numbers = #tpu.dot_dimension_numbers<[2], [1], [1], [2], [0, 0, 0, 1, 1, 2], [0], [0]>} : vector<2x8x8xf32>, vector<2x8x64xf32>, vector<2x8x64xf32> -> vector<2x8x64xf32>
    "tpu.trace_stop"() : () -> ()
    %223 = tpu.transpose %222, [1, 0, 2] : vector<2x8x64xf32> -> vector<8x2x64xf32>
    %224 = vector.shape_cast %223 : vector<8x2x64xf32> to vector<8x128xf32>
    %225 = arith.truncf %224 : vector<8x128xf32> to vector<8x128xbf16>
    %c1_89 = arith.constant 1 : index
    %c0_90 = arith.constant 0 : index
    %c0_91 = arith.constant 0 : index
    %226 = vector.load %arg5[%c1_89, %c0_90, %c0_91] : memref<2x128x128xbf16, #tpu.memory_space<vmem>>, vector<1x128x128xbf16>
    %227 = vector.shape_cast %226 : vector<1x128x128xbf16> to vector<128x128xbf16>
    %cst_92 = arith.constant dense<0.000000e+00> : vector<8x128xf32>
    %228 = tpu.matmul %225, %227, %cst_92 {dimension_numbers = #tpu.dot_dimension_numbers<[1], [0], [0], [1], [0, 0, 1, 1], [], []>} : vector<8x128xbf16>, vector<128x128xbf16>, vector<8x128xf32> -> vector<8x128xf32>
    %c1_93 = arith.constant 1 : index
    %c3_94 = arith.constant 3 : index
    %c0_95 = arith.constant 0 : index
    %229 = vector.load %arg8[%c1_93, %c3_94, %c0_95] : memref<2x9x128xf32, #tpu.memory_space<vmem>>, vector<1x1x128xf32>
    %230 = vector.shape_cast %229 : vector<1x1x128xf32> to vector<128xf32>
    %231 = vector.shape_cast %230 : vector<128xf32> to vector<1x128xf32>
    %232 = vector.broadcast %231 : vector<1x128xf32> to vector<8x128xf32>
    %233 = arith.addf %228, %232 : vector<8x128xf32>
    %234 = arith.addf %233, %179 : vector<8x128xf32>
    %c1_96 = arith.constant 1 : index
    %c4_97 = arith.constant 4 : index
    %c0_98 = arith.constant 0 : index
    %235 = vector.load %arg8[%c1_96, %c4_97, %c0_98] : memref<2x9x128xf32, #tpu.memory_space<vmem>>, vector<1x1x128xf32>
    %236 = vector.shape_cast %235 : vector<1x1x128xf32> to vector<128xf32>
    %c1_99 = arith.constant 1 : index
    %c5_100 = arith.constant 5 : index
    %c0_101 = arith.constant 0 : index
    %237 = vector.load %arg8[%c1_99, %c5_100, %c0_101] : memref<2x9x128xf32, #tpu.memory_space<vmem>>, vector<1x1x128xf32>
    %238 = vector.shape_cast %237 : vector<1x1x128xf32> to vector<128xf32>
    %cst_102 = arith.constant dense<0.000000e+00> : vector<8xf32>
    %239 = vector.multi_reduction <add>, %234, %cst_102 [1] : vector<8x128xf32> to vector<8xf32>
    %240 = vector.shape_cast %239 : vector<8xf32> to vector<8x1xf32>
    %cst_103 = arith.constant 1.280000e+02 : f32
    %241 = vector.broadcast %cst_103 : f32 to vector<8x1xf32>
    %242 = arith.divf %240, %241 : vector<8x1xf32>
    %243 = vector.broadcast %242 : vector<8x1xf32> to vector<8x128xf32>
    %244 = arith.subf %234, %243 : vector<8x128xf32>
    %245 = arith.mulf %244, %244 : vector<8x128xf32>
    %cst_104 = arith.constant dense<0.000000e+00> : vector<8xf32>
    %246 = vector.multi_reduction <add>, %245, %cst_104 [1] : vector<8x128xf32> to vector<8xf32>
    %247 = vector.shape_cast %246 : vector<8xf32> to vector<8x1xf32>
    %cst_105 = arith.constant 1.280000e+02 : f32
    %248 = vector.broadcast %cst_105 : f32 to vector<8x1xf32>
    %249 = arith.divf %247, %248 : vector<8x1xf32>
    %250 = vector.broadcast %242 : vector<8x1xf32> to vector<8x128xf32>
    %251 = arith.subf %234, %250 : vector<8x128xf32>
    %cst_106 = arith.constant 9.99999974E-6 : f32
    %252 = vector.broadcast %cst_106 : f32 to vector<8x1xf32>
    %253 = arith.addf %249, %252 : vector<8x1xf32>
    %254 = math.rsqrt %253 : vector<8x1xf32>
    %255 = vector.broadcast %254 : vector<8x1xf32> to vector<8x128xf32>
    %256 = arith.mulf %251, %255 : vector<8x128xf32>
    %257 = vector.shape_cast %236 : vector<128xf32> to vector<1x128xf32>
    %258 = vector.broadcast %257 : vector<1x128xf32> to vector<8x128xf32>
    %259 = arith.mulf %256, %258 : vector<8x128xf32>
    %260 = vector.shape_cast %238 : vector<128xf32> to vector<1x128xf32>
    %261 = vector.broadcast %260 : vector<1x128xf32> to vector<8x128xf32>
    %262 = arith.addf %259, %261 : vector<8x128xf32>
    %263 = arith.truncf %262 : vector<8x128xf32> to vector<8x128xbf16>
    %c1_107 = arith.constant 1 : index
    %c0_108 = arith.constant 0 : index
    %c0_109 = arith.constant 0 : index
    %264 = vector.load %arg6[%c1_107, %c0_108, %c0_109] : memref<2x128x256xbf16, #tpu.memory_space<vmem>>, vector<1x128x256xbf16>
    %265 = vector.shape_cast %264 : vector<1x128x256xbf16> to vector<128x256xbf16>
    %cst_110 = arith.constant dense<0.000000e+00> : vector<8x256xf32>
    %266 = tpu.matmul %263, %265, %cst_110 {dimension_numbers = #tpu.dot_dimension_numbers<[1], [0], [0], [1], [0, 0, 1, 1], [], []>} : vector<8x128xbf16>, vector<128x256xbf16>, vector<8x256xf32> -> vector<8x256xf32>
    %c1_111 = arith.constant 1 : index
    %c0_112 = arith.constant 0 : index
    %267 = vector.load %arg9[%c1_111, %c0_112] : memref<2x256xf32, #tpu.memory_space<vmem>>, vector<1x256xf32>
    %268 = vector.shape_cast %267 : vector<1x256xf32> to vector<256xf32>
    %269 = vector.shape_cast %268 : vector<256xf32> to vector<1x256xf32>
    %270 = vector.broadcast %269 : vector<1x256xf32> to vector<8x256xf32>
    %271 = arith.addf %266, %270 : vector<8x256xf32>
    %cst_113 = arith.constant 5.000000e-01 : f32
    %272 = vector.broadcast %cst_113 : f32 to vector<8x256xf32>
    %273 = arith.mulf %272, %271 : vector<8x256xf32>
    %cst_114 = arith.constant 4.471500e-02 : f32
    %274 = vector.broadcast %cst_114 : f32 to vector<8x256xf32>
    %275 = arith.mulf %274, %271 : vector<8x256xf32>
    %276 = arith.mulf %275, %271 : vector<8x256xf32>
    %277 = arith.mulf %276, %271 : vector<8x256xf32>
    %278 = arith.addf %271, %277 : vector<8x256xf32>
    %cst_115 = arith.constant 0.797884583 : f32
    %279 = vector.broadcast %cst_115 : f32 to vector<8x256xf32>
    %280 = arith.mulf %279, %278 : vector<8x256xf32>
    %281 = math.tanh %280 : vector<8x256xf32>
    %cst_116 = arith.constant 1.000000e+00 : f32
    %282 = vector.broadcast %cst_116 : f32 to vector<8x256xf32>
    %283 = arith.addf %282, %281 : vector<8x256xf32>
    %284 = arith.mulf %273, %283 : vector<8x256xf32>
    %285 = arith.truncf %284 : vector<8x256xf32> to vector<8x256xbf16>
    %c1_117 = arith.constant 1 : index
    %c0_118 = arith.constant 0 : index
    %c0_119 = arith.constant 0 : index
    %286 = vector.load %arg7[%c1_117, %c0_118, %c0_119] : memref<2x256x128xbf16, #tpu.memory_space<vmem>>, vector<1x256x128xbf16>
    %287 = vector.shape_cast %286 : vector<1x256x128xbf16> to vector<256x128xbf16>
    %cst_120 = arith.constant dense<0.000000e+00> : vector<8x128xf32>
    %288 = tpu.matmul %285, %287, %cst_120 {dimension_numbers = #tpu.dot_dimension_numbers<[1], [0], [0], [1], [0, 0, 1, 1], [], []>} : vector<8x256xbf16>, vector<256x128xbf16>, vector<8x128xf32> -> vector<8x128xf32>
    %c1_121 = arith.constant 1 : index
    %c6_122 = arith.constant 6 : index
    %c0_123 = arith.constant 0 : index
    %289 = vector.load %arg8[%c1_121, %c6_122, %c0_123] : memref<2x9x128xf32, #tpu.memory_space<vmem>>, vector<1x1x128xf32>
    %290 = vector.shape_cast %289 : vector<1x1x128xf32> to vector<128xf32>
    %291 = vector.shape_cast %290 : vector<128xf32> to vector<1x128xf32>
    %292 = vector.broadcast %291 : vector<1x128xf32> to vector<8x128xf32>
    %293 = arith.addf %288, %292 : vector<8x128xf32>
    %294 = arith.addf %293, %262 : vector<8x128xf32>
    %c1_124 = arith.constant 1 : index
    %c7_125 = arith.constant 7 : index
    %c0_126 = arith.constant 0 : index
    %295 = vector.load %arg8[%c1_124, %c7_125, %c0_126] : memref<2x9x128xf32, #tpu.memory_space<vmem>>, vector<1x1x128xf32>
    %296 = vector.shape_cast %295 : vector<1x1x128xf32> to vector<128xf32>
    %c1_127 = arith.constant 1 : index
    %c8_128 = arith.constant 8 : index
    %c0_129 = arith.constant 0 : index
    %297 = vector.load %arg8[%c1_127, %c8_128, %c0_129] : memref<2x9x128xf32, #tpu.memory_space<vmem>>, vector<1x1x128xf32>
    %298 = vector.shape_cast %297 : vector<1x1x128xf32> to vector<128xf32>
    %cst_130 = arith.constant dense<0.000000e+00> : vector<8xf32>
    %299 = vector.multi_reduction <add>, %294, %cst_130 [1] : vector<8x128xf32> to vector<8xf32>
    %300 = vector.shape_cast %299 : vector<8xf32> to vector<8x1xf32>
    %cst_131 = arith.constant 1.280000e+02 : f32
    %301 = vector.broadcast %cst_131 : f32 to vector<8x1xf32>
    %302 = arith.divf %300, %301 : vector<8x1xf32>
    %303 = vector.broadcast %302 : vector<8x1xf32> to vector<8x128xf32>
    %304 = arith.subf %294, %303 : vector<8x128xf32>
    %305 = arith.mulf %304, %304 : vector<8x128xf32>
    %cst_132 = arith.constant dense<0.000000e+00> : vector<8xf32>
    %306 = vector.multi_reduction <add>, %305, %cst_132 [1] : vector<8x128xf32> to vector<8xf32>
    %307 = vector.shape_cast %306 : vector<8xf32> to vector<8x1xf32>
    %cst_133 = arith.constant 1.280000e+02 : f32
    %308 = vector.broadcast %cst_133 : f32 to vector<8x1xf32>
    %309 = arith.divf %307, %308 : vector<8x1xf32>
    %310 = vector.broadcast %302 : vector<8x1xf32> to vector<8x128xf32>
    %311 = arith.subf %294, %310 : vector<8x128xf32>
    %cst_134 = arith.constant 9.99999974E-6 : f32
    %312 = vector.broadcast %cst_134 : f32 to vector<8x1xf32>
    %313 = arith.addf %309, %312 : vector<8x1xf32>
    %314 = math.rsqrt %313 : vector<8x1xf32>
    %315 = vector.broadcast %314 : vector<8x1xf32> to vector<8x128xf32>
    %316 = arith.mulf %311, %315 : vector<8x128xf32>
    %317 = vector.shape_cast %296 : vector<128xf32> to vector<1x128xf32>
    %318 = vector.broadcast %317 : vector<1x128xf32> to vector<8x128xf32>
    %319 = arith.mulf %316, %318 : vector<8x128xf32>
    %320 = vector.shape_cast %298 : vector<128xf32> to vector<1x128xf32>
    %321 = vector.broadcast %320 : vector<1x128xf32> to vector<8x128xf32>
    %322 = arith.addf %319, %321 : vector<8x128xf32>
    %323 = vector.extract_strided_slice %322 {offsets = [0, 0], sizes = [1, 128], strides = [1, 1]} : vector<8x128xf32> to vector<1x128xf32>
    %c0_135 = arith.constant 0 : index
    %c0_136 = arith.constant 0 : index
    %324 = vector.load %arg10[%c0_135, %c0_136] : memref<128x256xbf16, #tpu.memory_space<vmem>>, vector<128x256xbf16>
    %325 = arith.truncf %323 : vector<1x128xf32> to vector<1x128xbf16>
    %326 = vector.extract_strided_slice %324 {offsets = [0, 0], sizes = [128, 128], strides = [1, 1]} : vector<128x256xbf16> to vector<128x128xbf16>
    %cst_137 = arith.constant dense<0.000000e+00> : vector<1x128xf32>
    %327 = tpu.matmul %325, %326, %cst_137 {dimension_numbers = #tpu.dot_dimension_numbers<[1], [0], [0], [1], [0, 0, 1, 1], [], []>} : vector<1x128xbf16>, vector<128x128xbf16>, vector<1x128xf32> -> vector<1x128xf32>
    %c2_138 = arith.constant 2 : index
    %c0_139 = arith.constant 0 : index
    %328 = vector.load %arg3[%c2_138, %c0_139] : memref<3x128xf32, #tpu.memory_space<vmem>>, vector<1x128xf32>
    %329 = vector.shape_cast %328 : vector<1x128xf32> to vector<128xf32>
    %330 = vector.shape_cast %329 : vector<128xf32> to vector<1x128xf32>
    %331 = arith.addf %327, %330 : vector<1x128xf32>
    %332 = math.tanh %331 : vector<1x128xf32>
    %333 = arith.truncf %332 : vector<1x128xf32> to vector<1x128xbf16>
    %334 = vector.extract_strided_slice %324 {offsets = [0, 128], sizes = [128, 128], strides = [1, 1]} : vector<128x256xbf16> to vector<128x128xbf16>
    %cst_140 = arith.constant dense<0.000000e+00> : vector<1x128xf32>
    %335 = tpu.matmul %333, %334, %cst_140 {dimension_numbers = #tpu.dot_dimension_numbers<[1], [0], [0], [1], [0, 0, 1, 1], [], []>} : vector<1x128xbf16>, vector<128x128xbf16>, vector<1x128xf32> -> vector<1x128xf32>
    %c0_141 = arith.constant 0 : index
    %c0_142 = arith.constant 0 : index
    %336 = memref.load %arg11[%c0_141, %c0_142] : memref<1x1xf32, #tpu.memory_space<smem>>
    %337 = vector.broadcast %336 : f32 to vector<1x128xf32>
    %338 = arith.addf %335, %337 : vector<1x128xf32>
    %c0_143 = arith.constant 0 : index
    %c0_144 = arith.constant 0 : index
    %c0_145 = arith.constant 0 : index
    %339 = vector.load %arg12[%c0_143, %c0_144, %c0_145] : memref<1x1x128xf32, #tpu.memory_space<vmem>>, vector<1x1x128xf32>
    %340 = vector.shape_cast %339 : vector<1x1x128xf32> to vector<1x128xf32>
    %341 = vector.shape_cast %338 : vector<1x128xf32> to vector<1x1x128xf32>
    tpu.vector_store %arg12[%c0_143, %c0_144, %c0_145], %341 {strides = array<i32>} : memref<1x1x128xf32, #tpu.memory_space<vmem>>, vector<1x1x128xf32>,
    return
  }
  func.func @transform_0(%arg0: i32) -> (i32, i32, i32) {
    %c0_i32 = arith.constant 0 : i32
    %c0_i32_0 = arith.constant 0 : i32
    %c0_i32_1 = arith.constant 0 : i32
    return %arg0, %c0_i32, %c0_i32_0 : i32, i32, i32
  }
  func.func @transform_1(%arg0: i32) -> (i32, i32, i32) {
    %c0_i32 = arith.constant 0 : i32
    %c0_i32_0 = arith.constant 0 : i32
    %c0_i32_1 = arith.constant 0 : i32
    return %arg0, %c0_i32, %c0_i32_0 : i32, i32, i32
  }
  func.func @transform_2(%arg0: i32) -> (i32, i32) {
    %c0_i32 = arith.constant 0 : i32
    %c0_i32_0 = arith.constant 0 : i32
    %c0_i32_1 = arith.constant 0 : i32
    return %c0_i32, %c0_i32_0 : i32, i32
  }
  func.func @transform_3(%arg0: i32) -> (i32, i32, i32) {
    %c0_i32 = arith.constant 0 : i32
    %c0_i32_0 = arith.constant 0 : i32
    %c0_i32_1 = arith.constant 0 : i32
    %c0_i32_2 = arith.constant 0 : i32
    return %c0_i32, %c0_i32_0, %c0_i32_1 : i32, i32, i32
  }
  func.func @transform_4(%arg0: i32) -> (i32, i32, i32) {
    %c0_i32 = arith.constant 0 : i32
    %c0_i32_0 = arith.constant 0 : i32
    %c0_i32_1 = arith.constant 0 : i32
    %c0_i32_2 = arith.constant 0 : i32
    return %c0_i32, %c0_i32_0, %c0_i32_1 : i32, i32, i32
  }
  func.func @transform_5(%arg0: i32) -> (i32, i32, i32) {
    %c0_i32 = arith.constant 0 : i32
    %c0_i32_0 = arith.constant 0 : i32
    %c0_i32_1 = arith.constant 0 : i32
    %c0_i32_2 = arith.constant 0 : i32
    return %c0_i32, %c0_i32_0, %c0_i32_1 : i32, i32, i32
  }
  func.func @transform_6(%arg0: i32) -> (i32, i32, i32) {
    %c0_i32 = arith.constant 0 : i32
    %c0_i32_0 = arith.constant 0 : i32
    %c0_i32_1 = arith.constant 0 : i32
    %c0_i32_2 = arith.constant 0 : i32
    return %c0_i32, %c0_i32_0, %c0_i32_1 : i32, i32, i32
  }
  func.func @transform_7(%arg0: i32) -> (i32, i32, i32) {
    %c0_i32 = arith.constant 0 : i32
    %c0_i32_0 = arith.constant 0 : i32
    %c0_i32_1 = arith.constant 0 : i32
    %c0_i32_2 = arith.constant 0 : i32
    return %c0_i32, %c0_i32_0, %c0_i32_1 : i32, i32, i32
  }
  func.func @transform_8(%arg0: i32) -> (i32, i32) {
    %c0_i32 = arith.constant 0 : i32
    %c0_i32_0 = arith.constant 0 : i32
    %c0_i32_1 = arith.constant 0 : i32
    return %c0_i32, %c0_i32_0 : i32, i32
  }
  func.func @transform_9(%arg0: i32) -> (i32, i32) {
    %c0_i32 = arith.constant 0 : i32
    %c0_i32_0 = arith.constant 0 : i32
    %c0_i32_1 = arith.constant 0 : i32
    return %c0_i32, %c0_i32_0 : i32, i32
  }
  func.func @transform_10(%arg0: i32) -> (i32, i32) {
    %c0_i32 = arith.constant 0 : i32
    %c0_i32_0 = arith.constant 0 : i32
    %c0_i32_1 = arith.constant 0 : i32
    return %c0_i32, %c0_i32_0 : i32, i32
  }
  func.func @transform_11(%arg0: i32) -> (i32, i32, i32) {
    %c0_i32 = arith.constant 0 : i32
    %c0_i32_0 = arith.constant 0 : i32
    %c0_i32_1 = arith.constant 0 : i32
    return %arg0, %c0_i32, %c0_i32_0 : i32, i32, i32
  }
}

</mosaic_0001>

<llo_original>
// kernel: forward.1
$region0: #{forward.1}
  #allocation0 [shape = 'u32[]', space=smem, size = 0x4, offset = 0x4, fixed_abs, tag = 'smem constant byte address 0x4 - core index']
  #allocation1 [shape = 'u32[144,128]{1,0:T(1,128)}', space=vmem, size = 0x12000, scoped, tag = 'internal scratch']
  #allocation2 [shape = 'f32[1,1]{1,0:T(1,128)S(6)}', space=smem, size = 0x200, scoped, tag = 'scoped memory for forward.1']
  %s0 = inlined_call_operand.vmem [shape: f32[2,8,128], index: 0, kind: input, shape index: {}]
  %s1 = inlined_call_operand.vmem [shape: f32[2,1,8], index: 1, kind: input, shape index: {}]
  %s2 = inlined_call_operand.vmem [shape: f32[3,128], index: 2, kind: input, shape index: {}]
  %s3 = inlined_call_operand.hbm [shape: bf16[2,128,384], index: 3, kind: input, shape index: {}]
  %s4 = inlined_call_operand.vmem [shape: bf16[2,128,128], index: 4, kind: input, shape index: {}]
  %s5 = inlined_call_operand.vmem [shape: bf16[2,128,256], index: 5, kind: input, shape index: {}]
  %s6 = inlined_call_operand.hbm [shape: bf16[2,256,128], index: 6, kind: input, shape index: {}]
  %s7 = inlined_call_operand.hbm [shape: f32[2,9,128], index: 7, kind: input, shape index: {}]
  %s8 = inlined_call_operand.vmem [shape: f32[2,256], index: 8, kind: input, shape index: {}]
  %s9 = inlined_call_operand.hbm [shape: bf16[128,256], index: 9, kind: input, shape index: {}]
  %s10 = inlined_call_operand.<no memory space> [shape: f32[1,1], index: 10, kind: input, shape index: {}]
  %s11 = inlined_call_operand.vmem [shape: f32[2,1,128], index: 11, kind: output, shape index: {}]
  %s12 = sld [smem:[#allocation0]]
  $region93: #{forward.1} parent=0
    _
  %s14 = ssub.s32 1, %s12
  %s15 = scalar_select 0, %s14, %s12
  %16 = sst [smem:[#allocation2]] %s10
  $region1: #{forward.1} parent=0
    #allocation3 [shape = 'u8[196608]{0}', space=vmem, size = 0x30000, scoped, tag = 'input window, operand 3, single buffered']
    #allocation4 [shape = 's32[2]{0}', space=sflag, size = 0x8, scoped, tag = 'scoped memory for forward.1']
    #allocation5 [shape = 'u8[131072]{0}', space=vmem, size = 0x20000, scoped, tag = 'input window, operand 6, single buffered']
    #allocation6 [shape = 's32[1]{0}', space=sflag, size = 0x4, scoped, tag = 'scoped memory for forward.1']
    #allocation7 [shape = 'u8[16384]{0}', space=vmem, size = 0x4000, scoped, tag = 'input window, operand 7, single buffered']
    #allocation8 [shape = 'u8[65536]{0}', space=vmem, size = 0x10000, scoped, tag = 'input window, operand 9, single buffered']
    #allocation9 [shape = 's32[1]{0}', space=sflag, size = 0x4, scoped, tag = 'scoped memory for forward.1']
    %17 = vsyncpa [#allocation4], 0
    %18 = vsyncpa [#allocation6], 0
    %19 = vsyncpa [#allocation9], 0
    loop: start=0, step=1, limit=4
    $region2: #{forward.1} parent=1 // loop_pre_header
      _
    $region3: #{forward.1} parent=1 // loop_header
      %s21 = sphi 0, %s25
      %p22 = scmp.ge.s32.totalorder %s21, 4
      %s31 = sphi 0, %s33
      %s34 = sphi 0, %s31
      %s35 = sphi 0, %s34
      %s51 = sphi 0, %s35
      %s57 = sphi 0, %s59
      %s60 = sphi 0, %s57
      %s61 = sphi 0, %s60
      %s77 = sphi 0, %s61
      %s81 = sphi 0, %s81
      %s83 = sphi 0, %s81
      %s84 = sphi 0, %s83
      %s98 = sphi 0, %s84
      %s102 = sphi 0, %s102
      %s104 = sphi 0, %s102
      %s105 = sphi 0, %s104
      %s119 = sphi 0, %s105
      %s123 = sphi 0, %s123
      %s125 = sphi 0, %s123
      %s126 = sphi 0, %s125
      %s140 = sphi 0, %s126
      %s144 = sphi 0, %s144
      %s146 = sphi 0, %s144
      %s147 = sphi 0, %s146
      %s161 = sphi 0, %s147
      %s165 = sphi 0, %s165
      %s167 = sphi 0, %s165
      %s168 = sphi 0, %s167
      %s182 = sphi 0, %s168
      %s186 = sphi 0, %s186
      %s188 = sphi 0, %s186
      %s189 = sphi 0, %s188
      %s203 = sphi 0, %s189
      %s207 = sphi 0, %s207
      %s209 = sphi 0, %s207
      %s210 = sphi 0, %s209
      %s224 = sphi 0, %s210
      %s228 = sphi 0, %s228
      %s230 = sphi 0, %s228
      %s231 = sphi 0, %s230
      %s245 = sphi 0, %s231
      %s249 = sphi 0, %s249
      %s251 = sphi 0, %s249
      %s252 = sphi 0, %s251
      %s266 = sphi 0, %s252
      %s272 = sphi 0, %s274
      %s275 = sphi 0, %s272
      %s276 = sphi 0, %s275
      %s292 = sphi 0, %s276
    $region4: #{forward.1} parent=1 // loop_header_branch
      %24 = sbr.rel (%p22) target = $region8
    $region5: #{forward.1} parent=1 // loop_body
      %s26 = ssub.s32 %s21, 1
      %s27 = ssub.s32 %s21, 2
      %s28 = sadd.s32 %s21, 1
      %s29 = ssub.s32 %s21, %s28
      %p30 = scmp.eq.s32.totalorder %s29, 0
      %s32 = sadd.s32 %s31, 1
      %s33 = scalar_select %p30, %s31, %s32
      %p36 = pneg %p30
      %p37 = scmp.eq.s32.totalorder %s21, 1
      %p38 = por %p36, %p37
      %p39 = scmp.ne.s32.totalorder %s31, %s34
      %p40 = scmp.eq.s32.totalorder %s21, 0
      %p41 = por %p39, %p40
      %p42 = scmp.ne.s32.totalorder %s31, %s34
      %p43 = scmp.eq.s32.totalorder %s26, 1
      %p44 = por %p42, %p43
      %p45 = scmp.ne.s32.totalorder %s34, %s35
      %p46 = scmp.eq.s32.totalorder %s26, 0
      %p47 = por %p45, %p46
      %p48 = scmp.ne.s32.totalorder %s34, %s35
      %p49 = scmp.eq.s32.totalorder %s27, 1
      %p50 = por %p48, %p49
      %p52 = scmp.ne.s32.totalorder %s35, %s51
      %p53 = scmp.eq.s32.totalorder %s27, 0
      %p54 = por %p52, %p53
      %s55 = ssub.s32 %s21, %s28
      %p56 = scmp.eq.s32.totalorder %s55, 0
      %s58 = sadd.s32 %s57, 1
      %s59 = scalar_select %p56, %s57, %s58
      %p62 = pneg %p56
      %p63 = scmp.eq.s32.totalorder %s21, 1
      %p64 = por %p62, %p63
      %p65 = scmp.ne.s32.totalorder %s57, %s60
      %p66 = scmp.eq.s32.totalorder %s21, 0
      %p67 = por %p65, %p66
      %p68 = scmp.ne.s32.totalorder %s57, %s60
      %p69 = scmp.eq.s32.totalorder %s26, 1
      %p70 = por %p68, %p69
      %p71 = scmp.ne.s32.totalorder %s60, %s61
      %p72 = scmp.eq.s32.totalorder %s26, 0
      %p73 = por %p71, %p72
      %p74 = scmp.ne.s32.totalorder %s60, %s61
      %p75 = scmp.eq.s32.totalorder %s27, 1
      %p76 = por %p74, %p75
      %p78 = scmp.ne.s32.totalorder %s61, %s77
      %p79 = scmp.eq.s32.totalorder %s27, 0
      %p80 = por %p78, %p79
      %s82 = sadd.s32 %s81, 1
      %p85 = scmp.eq.s32.totalorder %s21, 1
      %p86 = scmp.ne.s32.totalorder %s81, %s83
      %p87 = scmp.eq.s32.totalorder %s21, 0
      %p88 = por %p86, %p87
      %p89 = scmp.ne.s32.totalorder %s81, %s83
      %p90 = scmp.eq.s32.totalorder %s26, 1
      %p91 = por %p89, %p90
      %p92 = scmp.ne.s32.totalorder %s83, %s84
      %p93 = scmp.eq.s32.totalorder %s26, 0
      %p94 = por %p92, %p93
      %p95 = scmp.ne.s32.totalorder %s83, %s84
      %p96 = scmp.eq.s32.totalorder %s27, 1
      %p97 = por %p95, %p96
      %p99 = scmp.ne.s32.totalorder %s84, %s98
      %p100 = scmp.eq.s32.totalorder %s27, 0
      %p101 = por %p99, %p100
      %s103 = sadd.s32 %s102, 1
      %p106 = scmp.eq.s32.totalorder %s21, 1
      %p107 = scmp.ne.s32.totalorder %s102, %s104
      %p108 = scmp.eq.s32.totalorder %s21, 0
      %p109 = por %p107, %p108
      %p110 = scmp.ne.s32.totalorder %s102, %s104
      %p111 = scmp.eq.s32.totalorder %s26, 1
      %p112 = por %p110, %p111
      %p113 = scmp.ne.s32.totalorder %s104, %s105
      %p114 = scmp.eq.s32.totalorder %s26, 0
      %p115 = por %p113, %p114
      %p116 = scmp.ne.s32.totalorder %s104, %s105
      %p117 = scmp.eq.s32.totalorder %s27, 1
      %p118 = por %p116, %p117
      %p120 = scmp.ne.s32.totalorder %s105, %s119
      %p121 = scmp.eq.s32.totalorder %s27, 0
      %p122 = por %p120, %p121
      %s124 = sadd.s32 %s123, 1
      %p127 = scmp.eq.s32.totalorder %s21, 1
      %p128 = scmp.ne.s32.totalorder %s123, %s125
      %p129 = scmp.eq.s32.totalorder %s21, 0
      %p130 = por %p128, %p129
      %p131 = scmp.ne.s32.totalorder %s123, %s125
      %p132 = scmp.eq.s32.totalorder %s26, 1
      %p133 = por %p131, %p132
      %p134 = scmp.ne.s32.totalorder %s125, %s126
      %p135 = scmp.eq.s32.totalorder %s26, 0
      %p136 = por %p134, %p135
      %p137 = scmp.ne.s32.totalorder %s125, %s126
      %p138 = scmp.eq.s32.totalorder %s27, 1
      %p139 = por %p137, %p138
      %p141 = scmp.ne.s32.totalorder %s126, %s140
      %p142 = scmp.eq.s32.totalorder %s27, 0
      %p143 = por %p141, %p142
      %s145 = sadd.s32 %s144, 1
      %p148 = scmp.eq.s32.totalorder %s21, 1
      %p149 = scmp.ne.s32.totalorder %s144, %s146
      %p150 = scmp.eq.s32.totalorder %s21, 0
      %p151 = por %p149, %p150
      %p152 = scmp.ne.s32.totalorder %s144, %s146
      %p153 = scmp.eq.s32.totalorder %s26, 1
      %p154 = por %p152, %p153
      %p155 = scmp.ne.s32.totalorder %s146, %s147
      %p156 = scmp.eq.s32.totalorder %s26, 0
      %p157 = por %p155, %p156
      %p158 = scmp.ne.s32.totalorder %s146, %s147
      %p159 = scmp.eq.s32.totalorder %s27, 1
      %p160 = por %p158, %p159
      %p162 = scmp.ne.s32.totalorder %s147, %s161
      %p163 = scmp.eq.s32.totalorder %s27, 0
      %p164 = por %p162, %p163
      %s166 = sadd.s32 %s165, 1
      %p169 = scmp.eq.s32.totalorder %s21, 1
      %p170 = scmp.ne.s32.totalorder %s165, %s167
      %p171 = scmp.eq.s32.totalorder %s21, 0
      %p172 = por %p170, %p171
      %p173 = scmp.ne.s32.totalorder %s165, %s167
      %p174 = scmp.eq.s32.totalorder %s26, 1
      %p175 = por %p173, %p174
      %p176 = scmp.ne.s32.totalorder %s167, %s168
      %p177 = scmp.eq.s32.totalorder %s26, 0
      %p178 = por %p176, %p177
      %p179 = scmp.ne.s32.totalorder %s167, %s168
      %p180 = scmp.eq.s32.totalorder %s27, 1
      %p181 = por %p179, %p180
      %p183 = scmp.ne.s32.totalorder %s168, %s182
      %p184 = scmp.eq.s32.totalorder %s27, 0
      %p185 = por %p183, %p184
      %s187 = sadd.s32 %s186, 1
      %p190 = scmp.eq.s32.totalorder %s21, 1
      %p191 = scmp.ne.s32.totalorder %s186, %s188
      %p192 = scmp.eq.s32.totalorder %s21, 0
      %p193 = por %p191, %p192
      %p194 = scmp.ne.s32.totalorder %s186, %s188
      %p195 = scmp.eq.s32.totalorder %s26, 1
      %p196 = por %p194, %p195
      %p197 = scmp.ne.s32.totalorder %s188, %s189
      %p198 = scmp.eq.s32.totalorder %s26, 0
      %p199 = por %p197, %p198
      %p200 = scmp.ne.s32.totalorder %s188, %s189
      %p201 = scmp.eq.s32.totalorder %s27, 1
      %p202 = por %p200, %p201
      %p204 = scmp.ne.s32.totalorder %s189, %s203
      %p205 = scmp.eq.s32.totalorder %s27, 0
      %p206 = por %p204, %p205
      %s208 = sadd.s32 %s207, 1
      %p211 = scmp.eq.s32.totalorder %s21, 1
      %p212 = scmp.ne.s32.totalorder %s207, %s209
      %p213 = scmp.eq.s32.totalorder %s21, 0
      %p214 = por %p212, %p213
      %p215 = scmp.ne.s32.totalorder %s207, %s209
      %p216 = scmp.eq.s32.totalorder %s26, 1
      %p217 = por %p215, %p216
      %p218 = scmp.ne.s32.totalorder %s209, %s210
      %p219 = scmp.eq.s32.totalorder %s26, 0
      %p220 = por %p218, %p219
      %p221 = scmp.ne.s32.totalorder %s209, %s210
      %p222 = scmp.eq.s32.totalorder %s27, 1
      %p223 = por %p221, %p222
      %p225 = scmp.ne.s32.totalorder %s210, %s224
      %p226 = scmp.eq.s32.totalorder %s27, 0
      %p227 = por %p225, %p226
      %s229 = sadd.s32 %s228, 1
      %p232 = scmp.eq.s32.totalorder %s21, 1
      %p233 = scmp.ne.s32.totalorder %s228, %s230
      %p234 = scmp.eq.s32.totalorder %s21, 0
      %p235 = por %p233, %p234
      %p236 = scmp.ne.s32.totalorder %s228, %s230
      %p237 = scmp.eq.s32.totalorder %s26, 1
      %p238 = por %p236, %p237
      %p239 = scmp.ne.s32.totalorder %s230, %s231
      %p240 = scmp.eq.s32.totalorder %s26, 0
      %p241 = por %p239, %p240
      %p242 = scmp.ne.s32.totalorder %s230, %s231
      %p243 = scmp.eq.s32.totalorder %s27, 1
      %p244 = por %p242, %p243
      %p246 = scmp.ne.s32.totalorder %s231, %s245
      %p247 = scmp.eq.s32.totalorder %s27, 0
      %p248 = por %p246, %p247
      %s250 = sadd.s32 %s249, 1
      %p253 = scmp.eq.s32.totalorder %s21, 1
      %p254 = scmp.ne.s32.totalorder %s249, %s251
      %p255 = scmp.eq.s32.totalorder %s21, 0
      %p256 = por %p254, %p255
      %p257 = scmp.ne.s32.totalorder %s249, %s251
      %p258 = scmp.eq.s32.totalorder %s26, 1
      %p259 = por %p257, %p258
      %p260 = scmp.ne.s32.totalorder %s251, %s252
      %p261 = scmp.eq.s32.totalorder %s26, 0
      %p262 = por %p260, %p261
      %p263 = scmp.ne.s32.totalorder %s251, %s252
      %p264 = scmp.eq.s32.totalorder %s27, 1
      %p265 = por %p263, %p264
      %p267 = scmp.ne.s32.totalorder %s252, %s266
      %p268 = scmp.eq.s32.totalorder %s27, 0
      %p269 = por %p267, %p268
      %s270 = ssub.s32 %s21, %s28
      %p271 = scmp.eq.s32.totalorder %s270, 0
      %s273 = sadd.s32 %s272, 1
      %s274 = scalar_select %p271, %s272, %s273
      %p277 = pneg %p271
      %p278 = scmp.eq.s32.totalorder %s21, 1
      %p279 = por %p277, %p278
      %p280 = scmp.ne.s32.totalorder %s272, %s275
      %p281 = scmp.eq.s32.totalorder %s21, 0
      %p282 = por %p280, %p281
      %p283 = scmp.ne.s32.totalorder %s272, %s275
      %p284 = scmp.eq.s32.totalorder %s26, 1
      %p285 = por %p283, %p284
      %p286 = scmp.ne.s32.totalorder %s275, %s276
      %p287 = scmp.eq.s32.totalorder %s26, 0
      %p288 = por %p286, %p287
      %p289 = scmp.ne.s32.totalorder %s275, %s276
      %p290 = scmp.eq.s32.totalorder %s27, 1
      %p291 = por %p289, %p290
      %p293 = scmp.ne.s32.totalorder %s276, %s292
      %p294 = scmp.eq.s32.totalorder %s27, 0
      %p295 = por %p293, %p294
      %p296 = scmp.le.s32.totalorder 1, %s21
      %p297 = scmp.lt.s32.totalorder %s21, 3
      %p298 = pnand %p296, %p297
      %p299 = pneg %p298
      // Predicated region
      $region9: #{forward.1} parent=5 // pred_check
        _
      $region10: #{forward.1} parent=5 // pred_check_branch
        %301 = sbr.rel (%p298) target = $region12
      $region11: #{forward.1} parent=5 // pred_region
        %s302 = ssub.s32 %s21, 1
        // Predicated region
        $region13: #{forward.1} parent=11 // pred_check
          %p303 = pneg %p94
        $region14: #{forward.1} parent=11 // pred_check_branch
          %305 = sbr.rel (%p303) target = $region16
        $region15: #{forward.1} parent=11 // pred_region
          _
        $region16: #{forward.1} parent=11 // pred_fallthru
          _
        // Predicated region
        $region17: #{forward.1} parent=11 // pred_check
          %p306 = pneg %p115
        $region18: #{forward.1} parent=11 // pred_check_branch
          %308 = sbr.rel (%p306) target = $region20
        $region19: #{forward.1} parent=11 // pred_region
          %s310 = ssub.s32 6144, 6144
          %311 = vsyncadd [#allocation4], %s310
          %s312 = sshll.u32 [#allocation3], 4
          %s313 = int_to_ptr.vmem [resolvable:$true] %s312
          %318 = dma.hbm_to_vmem [thread:$0]  %s3, 6144, %s313, [#allocation4], 192, 192, 12
        $region20: #{forward.1} parent=11 // pred_fallthru
          _
        // Predicated region
        $region21: #{forward.1} parent=11 // pred_check
          %p319 = pneg %p136
        $region22: #{forward.1} parent=11 // pred_check_branch
          %321 = sbr.rel (%p319) target = $region24
        $region23: #{forward.1} parent=11 // pred_region
          _
        $region24: #{forward.1} parent=11 // pred_fallthru
          _
        // Predicated region
        $region25: #{forward.1} parent=11 // pred_check
          %p322 = pneg %p157
        $region26: #{forward.1} parent=11 // pred_check_branch
          %324 = sbr.rel (%p322) target = $region28
        $region27: #{forward.1} parent=11 // pred_region
          _
        $region28: #{forward.1} parent=11 // pred_fallthru
          _
        // Predicated region
        $region29: #{forward.1} parent=11 // pred_check
          %p325 = pneg %p178
        $region30: #{forward.1} parent=11 // pred_check_branch
          %327 = sbr.rel (%p325) target = $region32
        $region31: #{forward.1} parent=11 // pred_region
          %s329 = ssub.s32 4096, 4096
          %330 = vsyncadd [#allocation6], %s329
          %s331 = sshll.u32 [#allocation5], 4
          %s332 = int_to_ptr.vmem [resolvable:$true] %s331
          %337 = dma.hbm_to_vmem [thread:$0]  %s6, 4096, %s332, [#allocation6], 64, 64, 4
        $region32: #{forward.1} parent=11 // pred_fallthru
          _
        // Predicated region
        $region33: #{forward.1} parent=11 // pred_check
          %p338 = pneg %p199
        $region34: #{forward.1} parent=11 // pred_check_branch
          %340 = sbr.rel (%p338) target = $region36
        $region35: #{forward.1} parent=11 // pred_region
          %s342 = ssub.s32 512, 512
          %343 = vsyncadd [#allocation6], %s342
          %s344 = sshll.u32 [#allocation7], 4
          %s345 = int_to_ptr.vmem [resolvable:$true] %s344
          %350 = dma.hbm_to_vmem [thread:$0]  %s7, 512, %s345, [#allocation6], 128, 128, 8
        $region36: #{forward.1} parent=11 // pred_fallthru
          _
        // Predicated region
        $region37: #{forward.1} parent=11 // pred_check
          %p351 = pneg %p220
        $region38: #{forward.1} parent=11 // pred_check_branch
          %353 = sbr.rel (%p351) target = $region40
        $region39: #{forward.1} parent=11 // pred_region
          _
        $region40: #{forward.1} parent=11 // pred_fallthru
          _
        // Predicated region
        $region41: #{forward.1} parent=11 // pred_check
          %p354 = pneg %p241
        $region42: #{forward.1} parent=11 // pred_check_branch
          %356 = sbr.rel (%p354) target = $region44
        $region43: #{forward.1} parent=11 // pred_region
          %s358 = ssub.s32 2048, 2048
          %359 = vsyncadd [#allocation9], %s358
          %s360 = sshll.u32 [#allocation8], 4
          %s361 = int_to_ptr.vmem [resolvable:$true] %s360
          %366 = dma.hbm_to_vmem [thread:$0]  %s9, 2048, %s361, [#allocation9], 128, 128, 8
        $region44: #{forward.1} parent=11 // pred_fallthru
          _
        // Predicated region
        $region45: #{forward.1} parent=11 // pred_check
          %p367 = pneg %p262
        $region46: #{forward.1} parent=11 // pred_check_branch
          %369 = sbr.rel (%p367) target = $region48
        $region47: #{forward.1} parent=11 // pred_region
          _
        $region48: #{forward.1} parent=11 // pred_fallthru
          _
      $region12: #{forward.1} parent=5 // pred_fallthru
        _
      %p370 = scmp.lt.s32.totalorder %s21, 2
      // Predicated region
      $region49: #{forward.1} parent=5 // pred_check
        %p371 = pneg %p370
      $region50: #{forward.1} parent=5 // pred_check_branch
        %373 = sbr.rel (%p371) target = $region52
      $region51: #{forward.1} parent=5 // pred_region
        // Predicated region
        $region53: #{forward.1} parent=51 // pred_check
          %p374 = pneg %p41
        $region54: #{forward.1} parent=51 // pred_check_branch
          %376 = sbr.rel (%p374) target = $region56
        $region55: #{forward.1} parent=51 // pred_region
          %p377 = scmp.lt.s32.totalorder %s21, 1
          %s378 = scalar_select %p377, %s21, 1
          %s379 = smul.addr %s378, 8
          %s380 = scalar_lea.vmem %s0, %s379
        $region56: #{forward.1} parent=51 // pred_fallthru
          _
        // Predicated region
        $region57: #{forward.1} parent=51 // pred_check
          %p381 = pneg %p67
        $region58: #{forward.1} parent=51 // pred_check_branch
          %383 = sbr.rel (%p381) target = $region60
        $region59: #{forward.1} parent=51 // pred_region
          %p384 = scmp.lt.s32.totalorder %s21, 1
          %s385 = scalar_select %p384, %s21, 1
          %s386 = scalar_lea.vmem %s1, %s385
        $region60: #{forward.1} parent=51 // pred_fallthru
          _
      $region52: #{forward.1} parent=5 // pred_fallthru
        _
      %p387 = scmp.le.s32.totalorder 1, %s21
      %p388 = scmp.lt.s32.totalorder %s21, 3
      %p389 = pnand %p387, %p388
      %p390 = pneg %p389
      // Predicated region
      $region61: #{forward.1} parent=5 // pred_check
        _
      $region62: #{forward.1} parent=5 // pred_check_branch
        %392 = sbr.rel (%p389) target = $region64
      $region63: #{forward.1} parent=5 // pred_region
        %s393 = ssub.s32 %s21, 1
        // Predicated region
        $region65: #{forward.1} parent=63 // pred_check
          %p394 = pneg %p115
        $region66: #{forward.1} parent=63 // pred_check_branch
          %396 = sbr.rel (%p394) target = $region68
        $region67: #{forward.1} parent=63 // pred_region
          %397 = dma.done [#allocation4], 6144
        $region68: #{forward.1} parent=63 // pred_fallthru
          _
        // Predicated region
        $region69: #{forward.1} parent=63 // pred_check
          %p398 = pneg %p178
        $region70: #{forward.1} parent=63 // pred_check_branch
          %400 = sbr.rel (%p398) target = $region72
        $region71: #{forward.1} parent=63 // pred_region
          %401 = dma.done [#allocation6], 4096
        $region72: #{forward.1} parent=63 // pred_fallthru
          _
        // Predicated region
        $region73: #{forward.1} parent=63 // pred_check
          %p402 = pneg %p199
        $region74: #{forward.1} parent=63 // pred_check_branch
          %404 = sbr.rel (%p402) target = $region76
        $region75: #{forward.1} parent=63 // pred_region
          %405 = dma.done [#allocation6], 512
        $region76: #{forward.1} parent=63 // pred_fallthru
          _
        // Predicated region
        $region77: #{forward.1} parent=63 // pred_check
          %p406 = pneg %p241
        $region78: #{forward.1} parent=63 // pred_check_branch
          %408 = sbr.rel (%p406) target = $region80
        $region79: #{forward.1} parent=63 // pred_region
          %409 = dma.done [#allocation9], 2048
        $region80: #{forward.1} parent=63 // pred_fallthru
          _
        %p410 = scmp.lt.s32.totalorder %s26, 1
        %s411 = scalar_select %p410, %s26, 1
        %s412 = smul.addr %s411, 8
        %s413 = scalar_lea.vmem %s0, %s412
        %p414 = pneg %p47
        %p415 = pneg %p44
        %p416 = scmp.lt.s32.totalorder %s26, 1
        %s417 = scalar_select %p416, %s26, 1
        %s418 = scalar_lea.vmem %s1, %s417
        %p419 = pneg %p73
        %p420 = pneg %p70
        %p421 = pneg %p94
        %p422 = pneg %p91
        %p423 = pneg %p115
        %p424 = pneg %p112
        %p425 = pneg %p136
        %p426 = pneg %p133
        %p427 = pneg %p157
        %p428 = pneg %p154
        %p429 = pneg %p178
        %p430 = pneg %p175
        %p431 = pneg %p199
        %p432 = pneg %p196
        %p433 = pneg %p220
        %p434 = pneg %p217
        %p435 = pneg %p241
        %p436 = pneg %p238
        %p437 = pneg %p262
        %p438 = pneg %p259
        %p439 = pneg %p288
        %p440 = pneg %p285
        %p441 = scmp.lt.s32.totalorder %s26, 1
        %s442 = scalar_select %p441, %s26, 1
        %s443 = scalar_lea.vmem %s11, %s442
        %p444 = scmp.lt.s32.totalorder %s26, 1
        %s445 = scalar_select %p444, %s26, 1
        %s446 = smul.addr %s445, 8
        %s447 = scalar_lea.vmem %s0, %s446
        %p448 = scmp.lt.s32.totalorder %s26, 1
        %s449 = scalar_select %p448, %s26, 1
        %s450 = scalar_lea.vmem %s1, %s449
        %p451 = scmp.lt.s32.totalorder %s26, 1
        %s452 = scalar_select %p451, %s26, 1
        %s453 = scalar_lea.vmem %s11, %s452
        %v455 = vld [vmem:[%s447] sm:$0xff]
        %v456 = vld [vmem:[%s2] sm:$0x1]
        %v457 = vld [vmem:[%s2 + $0x1] sm:$0x1]
        %458 = vadd.xlane.f32.xlu0 %v455
        %v459 = vpop.xlane.xlu0 %458
        %v460 = vrcp.pop 128.0
        %v461 = vmul.f32 %v459, %v460
        %v462 = vsub.f32 %v455, %v461
        %v463 = vmul.f32 %v462, %v462
        %464 = vadd.xlane.f32.xlu0 %v463
        %v465 = vpop.xlane.xlu0 %464
        %v466 = vmul.f32 %v465, %v460
        %v467 = vadd.f32 %v466, 1e-05
        %v468 = vrsqrt.pop %v467
        %v469 = vmul.f32 %v462, %v468
        %v470 = vlaneseq
        %v471 = vshrl.u32 %v470, 7
        %v472 = vsub.s32 0, %v471
        %v473 = vrot.slane %v456, %v472
        %v474 = vmul.f32 %v469, %v473
        %v475 = vlaneseq
        %v476 = vshrl.u32 %v475, 7
        %v477 = vsub.s32 0, %v476
        %v478 = vrot.slane %v457, %v477
        %v479 = vadd.f32 %v474, %v478
        %v480 = vld [vmem:[%s450] sm:$0x1]
        %v481 = vsub.f32 1.0, %v480
        %v482 = vmul.f32 %v481, -1e+09
        %v483 = vpack.c.bf16 %v479, %v479
        %v484 = vld [vmem:[#allocation3] sm:$0xff]
        %v485 = vld [vmem:[#allocation3 + $0x8] sm:$0xf]
        %v486 = vld [vmem:[#allocation3 + $0xc] sm:$0xff]
        %v487 = vld [vmem:[#allocation3 + $0x14] sm:$0xf]
        %v488 = vld [vmem:[#allocation3 + $0x18] sm:$0xff]
        %v489 = vld [vmem:[#allocation3 + $0x20] sm:$0xf]
        %v490 = vld [vmem:[#allocation3 + $0x24] sm:$0xff]
        %v491 = vld [vmem:[#allocation3 + $0x2c] sm:$0xf]
        %v492 = vld [vmem:[#allocation3 + $0x30] sm:$0xff]
        %v493 = vld [vmem:[#allocation3 + $0x38] sm:$0xf]
        %v494 = vld [vmem:[#allocation3 + $0x3c] sm:$0xff]
        %v495 = vld [vmem:[#allocation3 + $0x44] sm:$0xf]
        %v496 = vld [vmem:[#allocation3 + $0x48] sm:$0xff]
        %v497 = vld [vmem:[#allocation3 + $0x50] sm:$0xf]
        %v498 = vld [vmem:[#allocation3 + $0x54] sm:$0xff]
        %v499 = vld [vmem:[#allocation3 + $0x5c] sm:$0xf]
        %v500 = vld [vmem:[#allocation3 + $0x60] sm:$0xff]
        %v501 = vld [vmem:[#allocation3 + $0x68] sm:$0xf]
        %v502 = vld [vmem:[#allocation3 + $0x6c] sm:$0xff]
        %v503 = vld [vmem:[#allocation3 + $0x74] sm:$0xf]
        %v504 = vld [vmem:[#allocation3 + $0x78] sm:$0xff]
        %v505 = vld [vmem:[#allocation3 + $0x80] sm:$0xf]
        %v506 = vld [vmem:[#allocation3 + $0x84] sm:$0xff]
        %v507 = vld [vmem:[#allocation3 + $0x8c] sm:$0xf]
        %v508 = vld [vmem:[#allocation3 + $0x90] sm:$0xff]
        %v509 = vld [vmem:[#allocation3 + $0x98] sm:$0xf]
        %v510 = vld [vmem:[#allocation3 + $0x9c] sm:$0xff]
        %v511 = vld [vmem:[#allocation3 + $0xa4] sm:$0xf]
        %v512 = vld [vmem:[#allocation3 + $0xa8] sm:$0xff]
        %v513 = vld [vmem:[#allocation3 + $0xb0] sm:$0xf]
        %v514 = vld [vmem:[#allocation3 + $0xb4] sm:$0xff]
        %v515 = vld [vmem:[#allocation3 + $0xbc] sm:$0xf]
        %v548 = vunpack.c.l.b16 %v484
        %v549 = vunpack.c.h.b16 %v484
        %v550 = vunpack.c.l.b16 %v485
        %v551 = vunpack.c.l.b16 %v486
        %v552 = vunpack.c.h.b16 %v486
        %v553 = vunpack.c.l.b16 %v487
        %v554 = vunpack.c.l.b16 %v488
        %v555 = vunpack.c.h.b16 %v488
        %v556 = vunpack.c.l.b16 %v489
        %v557 = vunpack.c.l.b16 %v490
        %v558 = vunpack.c.h.b16 %v490
        %v559 = vunpack.c.l.b16 %v491
        %v560 = vunpack.c.l.b16 %v492
        %v561 = vunpack.c.h.b16 %v492
        %v562 = vunpack.c.l.b16 %v493
        %v563 = vunpack.c.l.b16 %v494
        %v564 = vunpack.c.h.b16 %v494
        %v565 = vunpack.c.l.b16 %v495
        %v566 = vunpack.c.l.b16 %v496
        %v567 = vunpack.c.h.b16 %v496
        %v568 = vunpack.c.l.b16 %v497
        %v569 = vunpack.c.l.b16 %v498
        %v570 = vunpack.c.h.b16 %v498
        %v571 = vunpack.c.l.b16 %v499
        %v572 = vunpack.c.l.b16 %v500
        %v573 = vunpack.c.h.b16 %v500
        %v574 = vunpack.c.l.b16 %v501
        %v575 = vunpack.c.l.b16 %v502
        %v576 = vunpack.c.h.b16 %v502
        %v577 = vunpack.c.l.b16 %v503
        %v578 = vunpack.c.l.b16 %v504
        %v579 = vunpack.c.h.b16 %v504
        %v580 = vunpack.c.l.b16 %v505
        %v581 = vunpack.c.l.b16 %v506
        %v582 = vunpack.c.h.b16 %v506
        %v583 = vunpack.c.l.b16 %v507
        %v584 = vunpack.c.l.b16 %v508
        %v585 = vunpack.c.h.b16 %v508
        %v586 = vunpack.c.l.b16 %v509
        %v587 = vunpack.c.l.b16 %v510
        %v588 = vunpack.c.h.b16 %v510
        %v589 = vunpack.c.l.b16 %v511
        %v590 = vunpack.c.l.b16 %v512
        %v591 = vunpack.c.h.b16 %v512
        %v592 = vunpack.c.l.b16 %v513
        %v593 = vunpack.c.l.b16 %v514
        %v594 = vunpack.c.h.b16 %v514
        %v595 = vunpack.c.l.b16 %v515
        %v596 = vpack.c.b16 %v551, %v548
        %v597 = vpack.c.b16 %v552, %v549
        %v598 = vpack.c.b16 %v553, %v550
        %v599 = vpack.c.b16 %v557, %v554
        %v600 = vpack.c.b16 %v558, %v555
        %v601 = vpack.c.b16 %v559, %v556
        %v602 = vpack.c.b16 %v563, %v560
        %v603 = vpack.c.b16 %v564, %v561
        %v604 = vpack.c.b16 %v565, %v562
        %v605 = vpack.c.b16 %v569, %v566
        %v606 = vpack.c.b16 %v570, %v567
        %v607 = vpack.c.b16 %v571, %v568
        %v608 = vpack.c.b16 %v575, %v572
        %v609 = vpack.c.b16 %v576, %v573
        %v610 = vpack.c.b16 %v577, %v574
        %v611 = vpack.c.b16 %v581, %v578
        %v612 = vpack.c.b16 %v582, %v579
        %v613 = vpack.c.b16 %v583, %v580
        %v614 = vpack.c.b16 %v587, %v584
        %v615 = vpack.c.b16 %v588, %v585
        %v616 = vpack.c.b16 %v589, %v586
        %v617 = vpack.c.b16 %v593, %v590
        %v618 = vpack.c.b16 %v594, %v591
        %v619 = vpack.c.b16 %v595, %v592
        %644 = vmatprep.subr.bf16.mxu0 %v618
        %645 = vmatpush1.bf16.msra.mxu0 %v617
        %646 = vmatprep.subr.bf16.mxu0 %v615
        %647 = vmatpush1.bf16.msra.mxu0 %v614
        %648 = vmatprep.subr.bf16.mxu0 %v612
        %649 = vmatpush1.bf16.msra.mxu0 %v611
        %650 = vmatprep.subr.bf16.mxu0 %v609
        %651 = vmatpush1.bf16.msra.mxu0 %v608
        %652 = vmatprep.subr.bf16.mxu0 %v606
        %653 = vmatpush1.bf16.msra.mxu0 %v605
        %654 = vmatprep.subr.bf16.mxu0 %v603
        %655 = vmatpush1.bf16.msra.mxu0 %v602
        %656 = vmatprep.subr.bf16.mxu0 %v600
        %657 = vmatpush1.bf16.msra.mxu0 %v599
        %658 = vmatprep.subr.bf16.mxu0 %v597
        %659 = vmatpush1.bf16.msra.mxu0 %v596
        %660 = vmatprep.subr.bf16.mxu0 0
        %661 = vmatpush2.bf16.msra.mxu0 0
        %662 = vmatprep.subr.bf16.mxu0 0
        %663 = vmatpush2.bf16.msra.mxu0 0
        %664 = vmatprep.subr.bf16.mxu0 0
        %665 = vmatpush2.bf16.msra.mxu0 0
        %666 = vmatprep.subr.bf16.mxu0 0
        %667 = vmatpush2.bf16.msra.mxu0 0
        %668 = vmatprep.subr.bf16.mxu0 0
        %669 = vmatpush2.bf16.msra.mxu0 0
        %670 = vmatprep.subr.bf16.mxu0 0
        %671 = vmatpush2.bf16.msra.mxu0 0
        %672 = vmatprep.subr.bf16.mxu0 0
        %673 = vmatpush2.bf16.msra.mxu0 0
        %674 = vmatprep.subr.bf16.mxu0 0
        %675 = vmatpush2.bf16.msra.mxu0 0
        %676 = vmatprep.mubr.bf16.mxu0 0
        %677 = vmatmul.mubr.bf16.gmra.mxu0 %v483
        %v678 = vpop.f32.mrf.mxu0
        %v679 = vadd.f32 0.0, %v678
        %v680 = vpop.f32.mrf.mxu0
        %v681 = vadd.f32 0.0, %v680
        %v682 = vpop.f32.mrf.mxu0
        %v683 = vpop.f32.mrf.mxu0
        %684 = vdwg.mxu0
        %685 = vmatprep.subr.bf16.mxu0 0
        %686 = vmatpush1.bf16.msra.mxu0 %v619
        %687 = vmatprep.subr.bf16.mxu0 0
        %688 = vmatpush1.bf16.msra.mxu0 %v616
        %689 = vmatprep.subr.bf16.mxu0 0
        %690 = vmatpush1.bf16.msra.mxu0 %v613
        %691 = vmatprep.subr.bf16.mxu0 0
        %692 = vmatpush1.bf16.msra.mxu0 %v610
        %693 = vmatprep.subr.bf16.mxu0 0
        %694 = vmatpush1.bf16.msra.mxu0 %v607
        %695 = vmatprep.subr.bf16.mxu0 0
        %696 = vmatpush1.bf16.msra.mxu0 %v604
        %697 = vmatprep.subr.bf16.mxu0 0
        %698 = vmatpush1.bf16.msra.mxu0 %v601
        %699 = vmatprep.subr.bf16.mxu0 0
        %700 = vmatpush1.bf16.msra.mxu0 %v598
        %701 = vmatprep.subr.bf16.mxu0 0
        %702 = vmatpush2.bf16.msra.mxu0 0
        %703 = vmatprep.subr.bf16.mxu0 0
        %704 = vmatpush2.bf16.msra.mxu0 0
        %705 = vmatprep.subr.bf16.mxu0 0
        %706 = vmatpush2.bf16.msra.mxu0 0
        %707 = vmatprep.subr.bf16.mxu0 0
        %708 = vmatpush2.bf16.msra.mxu0 0
        %709 = vmatprep.subr.bf16.mxu0 0
        %710 = vmatpush2.bf16.msra.mxu0 0
        %711 = vmatprep.subr.bf16.mxu0 0
        %712 = vmatpush2.bf16.msra.mxu0 0
        %713 = vmatprep.subr.bf16.mxu0 0
        %714 = vmatpush2.bf16.msra.mxu0 0
        %715 = vmatprep.subr.bf16.mxu0 0
        %716 = vmatpush2.bf16.msra.mxu0 0
        %717 = vmatprep.mubr.bf16.mxu0 0
        %718 = vmatmul.mubr.bf16.gmra.mxu0 %v483
        %v719 = vpop.f32.mrf.mxu0
        %v720 = vadd.f32 0.0, %v719
        %v721 = vpop.f32.mrf.mxu0
        %v722 = vpop.f32.mrf.mxu0
        %v723 = vpop.f32.mrf.mxu0
        %724 = vdwg.mxu0
        %v725 = vld [vmem:[#allocation7] sm:$0x1]
        %v726 = vlaneseq
        %v727 = vshrl.u32 %v726, 7
        %v728 = vsub.s32 0, %v727
        %v729 = vrot.slane %v725, %v728
        %v730 = vadd.f32 %v679, %v729
        %v731 = vld [vmem:[#allocation7 + $0x1] sm:$0x1]
        %v732 = vlaneseq
        %v733 = vshrl.u32 %v732, 7
        %v734 = vsub.s32 0, %v733
        %v735 = vrot.slane %v731, %v734
        %v736 = vadd.f32 %v681, %v735
        %v737 = vld [vmem:[#allocation7 + $0x2] sm:$0x1]
        %v738 = vlaneseq
        %v739 = vshrl.u32 %v738, 7
        %v740 = vsub.s32 0, %v739
        %v741 = vrot.slane %v737, %v740
        %v742 = vadd.f32 %v720, %v741
        %744 = vrot.lane.b32.xlu0 %v730, 64
        %v745 = vpop.permute.xlu0 %744
        %v747 = vcombine.high %v730, 0.0
        %v749 = vunpack.c.l.s4 1983009808
        %v750 = vunpack.c.0.s8 %v749
        %v751 = vlaneseq
        %v752 = vshrl.u32 %v751, 7
        %v753 = vsub.s32 %v750, %v752
        %v754 = vrot.slane %v730, %v753
        %v756 = vunpack.c.l.s4 1983009808
        %v757 = vunpack.c.0.s8 %v756
        %v758 = vlaneseq
        %v759 = vshrl.u32 %v758, 7
        %v760 = vsub.s32 %v757, %v759
        %v761 = vrot.slane %v747, %v760
        %v762 = vcombine.high %v745, 0.0
        %v764 = vunpack.c.l.s4 1983009808
        %v765 = vunpack.c.0.s8 %v764
        %v766 = vlaneseq
        %v767 = vshrl.u32 %v766, 7
        %v768 = vsub.s32 %v765, %v767
        %v769 = vrot.slane %v745, %v768
        %v771 = vunpack.c.l.s4 1983009808
        %v772 = vunpack.c.0.s8 %v771
        %v773 = vlaneseq
        %v774 = vshrl.u32 %v773, 7
        %v775 = vsub.s32 %v772, %v774
        %v776 = vrot.slane %v762, %v775
        %v777 = vcombine.low %v754, %v769
        %v778 = vcombine.high %v754, %v769
        %v780 = vunpack.c.l.s4 1934713408
        %v781 = vunpack.c.0.s8 %v780
        %v782 = vlaneseq
        %v783 = vshrl.u32 %v782, 7
        %v784 = vsub.s32 %v781, %v783
        %v785 = vrot.slane %v777, %v784
        %v787 = vunpack.c.l.s4 1934713408
        %v788 = vunpack.c.0.s8 %v787
        %v789 = vlaneseq
        %v790 = vshrl.u32 %v789, 7
        %v791 = vsub.s32 %v788, %v790
        %v792 = vrot.slane %v778, %v791
        %v793 = vcombine.low %v761, %v776
        %v794 = vcombine.high %v761, %v776
        %v796 = vunpack.c.l.s4 1934713408
        %v797 = vunpack.c.0.s8 %v796
        %v798 = vlaneseq
        %v799 = vshrl.u32 %v798, 7
        %v800 = vsub.s32 %v797, %v799
        %v801 = vrot.slane %v793, %v800
        %v803 = vunpack.c.l.s4 1934713408
        %v804 = vunpack.c.0.s8 %v803
        %v805 = vlaneseq
        %v806 = vshrl.u32 %v805, 7
        %v807 = vsub.s32 %v804, %v806
        %v808 = vrot.slane %v794, %v807
        %v809 = vcombine.high %v785, 0.0
        %v810 = vcombine.high %v792, 0.0
        %v811 = vcombine.high %v801, 0.0
        %v812 = vcombine.high %v808, 0.0
        %v813 = vcombine.low %v785, %v792
        %v815 = vunpack.c.l.s4 1983009808
        %v816 = vunpack.c.0.s8 %v815
        %v817 = vlaneseq
        %v818 = vshrl.u32 %v817, 7
        %v819 = vsub.s32 %v816, %v818
        %v820 = vrot.slane %v813, %v819
        %v821 = vcombine.low %v809, %v810
        %v823 = vunpack.c.l.s4 1983009808
        %v824 = vunpack.c.0.s8 %v823
        %v825 = vlaneseq
        %v826 = vshrl.u32 %v825, 7
        %v827 = vsub.s32 %v824, %v826
        %v828 = vrot.slane %v821, %v827
        %v829 = vcombine.low %v801, %v808
        %v831 = vunpack.c.l.s4 1983009808
        %v832 = vunpack.c.0.s8 %v831
        %v833 = vlaneseq
        %v834 = vshrl.u32 %v833, 7
        %v835 = vsub.s32 %v832, %v834
        %v836 = vrot.slane %v829, %v835
        %v837 = vcombine.low %v811, %v812
        %v839 = vunpack.c.l.s4 1983009808
        %v840 = vunpack.c.0.s8 %v839
        %v841 = vlaneseq
        %v842 = vshrl.u32 %v841, 7
        %v843 = vsub.s32 %v840, %v842
        %v844 = vrot.slane %v837, %v843
        %v845 = vcombine.low %v820, %v828
        %v847 = vunpack.c.l.s4 1934713408
        %v848 = vunpack.c.0.s8 %v847
        %v849 = vlaneseq
        %v850 = vshrl.u32 %v849, 7
        %v851 = vsub.s32 %v848, %v850
        %v852 = vrot.slane %v845, %v851
        %v853 = vcombine.low %v836, %v844
        %v855 = vunpack.c.l.s4 1934713408
        %v856 = vunpack.c.0.s8 %v855
        %v857 = vlaneseq
        %v858 = vshrl.u32 %v857, 7
        %v859 = vsub.s32 %v856, %v858
        %v860 = vrot.slane %v853, %v859
        %v861 = vcombine.low %v852, %v860
        %v862 = vcombine.high %v852, %v860
        %864 = vrot.lane.b32.xlu0 %v736, 64
        %v865 = vpop.permute.xlu0 %864
        %v867 = vcombine.high %v736, 0.0
        %v869 = vunpack.c.l.s4 1983009808
        %v870 = vunpack.c.0.s8 %v869
        %v871 = vlaneseq
        %v872 = vshrl.u32 %v871, 7
        %v873 = vsub.s32 %v870, %v872
        %v874 = vrot.slane %v736, %v873
        %v876 = vunpack.c.l.s4 1983009808
        %v877 = vunpack.c.0.s8 %v876
        %v878 = vlaneseq
        %v879 = vshrl.u32 %v878, 7
        %v880 = vsub.s32 %v877, %v879
        %v881 = vrot.slane %v867, %v880
        %v882 = vcombine.high %v865, 0.0
        %v884 = vunpack.c.l.s4 1983009808
        %v885 = vunpack.c.0.s8 %v884
        %v886 = vlaneseq
        %v887 = vshrl.u32 %v886, 7
        %v888 = vsub.s32 %v885, %v887
        %v889 = vrot.slane %v865, %v888
        %v891 = vunpack.c.l.s4 1983009808
        %v892 = vunpack.c.0.s8 %v891
        %v893 = vlaneseq
        %v894 = vshrl.u32 %v893, 7
        %v895 = vsub.s32 %v892, %v894
        %v896 = vrot.slane %v882, %v895
        %v897 = vcombine.low %v874, %v889
        %v898 = vcombine.high %v874, %v889
        %v900 = vunpack.c.l.s4 1934713408
        %v901 = vunpack.c.0.s8 %v900
        %v902 = vlaneseq
        %v903 = vshrl.u32 %v902, 7
        %v904 = vsub.s32 %v901, %v903
        %v905 = vrot.slane %v897, %v904
        %v907 = vunpack.c.l.s4 1934713408
        %v908 = vunpack.c.0.s8 %v907
        %v909 = vlaneseq
        %v910 = vshrl.u32 %v909, 7
        %v911 = vsub.s32 %v908, %v910
        %v912 = vrot.slane %v898, %v911
        %v913 = vcombine.low %v881, %v896
        %v914 = vcombine.high %v881, %v896
        %v916 = vunpack.c.l.s4 1934713408
        %v917 = vunpack.c.0.s8 %v916
        %v918 = vlaneseq
        %v919 = vshrl.u32 %v918, 7
        %v920 = vsub.s32 %v917, %v919
        %v921 = vrot.slane %v913, %v920
        %v923 = vunpack.c.l.s4 1934713408
        %v924 = vunpack.c.0.s8 %v923
        %v925 = vlaneseq
        %v926 = vshrl.u32 %v925, 7
        %v927 = vsub.s32 %v924, %v926
        %v928 = vrot.slane %v914, %v927
        %v929 = vcombine.high %v905, 0.0
        %v930 = vcombine.high %v912, 0.0
        %v931 = vcombine.high %v921, 0.0
        %v932 = vcombine.high %v928, 0.0
        %v933 = vcombine.low %v905, %v912
        %v935 = vunpack.c.l.s4 1983009808
        %v936 = vunpack.c.0.s8 %v935
        %v937 = vlaneseq
        %v938 = vshrl.u32 %v937, 7
        %v939 = vsub.s32 %v936, %v938
        %v940 = vrot.slane %v933, %v939
        %v941 = vcombine.low %v929, %v930
        %v943 = vunpack.c.l.s4 1983009808
        %v944 = vunpack.c.0.s8 %v943
        %v945 = vlaneseq
        %v946 = vshrl.u32 %v945, 7
        %v947 = vsub.s32 %v944, %v946
        %v948 = vrot.slane %v941, %v947
        %v949 = vcombine.low %v921, %v928
        %v951 = vunpack.c.l.s4 1983009808
        %v952 = vunpack.c.0.s8 %v951
        %v953 = vlaneseq
        %v954 = vshrl.u32 %v953, 7
        %v955 = vsub.s32 %v952, %v954
        %v956 = vrot.slane %v949, %v955
        %v957 = vcombine.low %v931, %v932
        %v959 = vunpack.c.l.s4 1983009808
        %v960 = vunpack.c.0.s8 %v959
        %v961 = vlaneseq
        %v962 = vshrl.u32 %v961, 7
        %v963 = vsub.s32 %v960, %v962
        %v964 = vrot.slane %v957, %v963
        %v965 = vcombine.low %v940, %v948
        %v967 = vunpack.c.l.s4 1934713408
        %v968 = vunpack.c.0.s8 %v967
        %v969 = vlaneseq
        %v970 = vshrl.u32 %v969, 7
        %v971 = vsub.s32 %v968, %v970
        %v972 = vrot.slane %v965, %v971
        %v973 = vcombine.low %v956, %v964
        %v975 = vunpack.c.l.s4 1934713408
        %v976 = vunpack.c.0.s8 %v975
        %v977 = vlaneseq
        %v978 = vshrl.u32 %v977, 7
        %v979 = vsub.s32 %v976, %v978
        %v980 = vrot.slane %v973, %v979
        %v981 = vcombine.low %v972, %v980
        %v982 = vcombine.high %v972, %v980
        %984 = vrot.lane.b32.xlu0 %v742, 64
        %v985 = vpop.permute.xlu0 %984
        %v987 = vcombine.high %v742, 0.0
        %v989 = vunpack.c.l.s4 1983009808
        %v990 = vunpack.c.0.s8 %v989
        %v991 = vlaneseq
        %v992 = vshrl.u32 %v991, 7
        %v993 = vsub.s32 %v990, %v992
        %v994 = vrot.slane %v742, %v993
        %v996 = vunpack.c.l.s4 1983009808
        %v997 = vunpack.c.0.s8 %v996
        %v998 = vlaneseq
        %v999 = vshrl.u32 %v998, 7
        %v1000 = vsub.s32 %v997, %v999
        %v1001 = vrot.slane %v987, %v1000
        %v1002 = vcombine.high %v985, 0.0
        %v1004 = vunpack.c.l.s4 1983009808
        %v1005 = vunpack.c.0.s8 %v1004
        %v1006 = vlaneseq
        %v1007 = vshrl.u32 %v1006, 7
        %v1008 = vsub.s32 %v1005, %v1007
        %v1009 = vrot.slane %v985, %v1008
        %v1011 = vunpack.c.l.s4 1983009808
        %v1012 = vunpack.c.0.s8 %v1011
        %v1013 = vlaneseq
        %v1014 = vshrl.u32 %v1013, 7
        %v1015 = vsub.s32 %v1012, %v1014
        %v1016 = vrot.slane %v1002, %v1015
        %v1017 = vcombine.low %v994, %v1009
        %v1018 = vcombine.high %v994, %v1009
        %v1020 = vunpack.c.l.s4 1934713408
        %v1021 = vunpack.c.0.s8 %v1020
        %v1022 = vlaneseq
        %v1023 = vshrl.u32 %v1022, 7
        %v1024 = vsub.s32 %v1021, %v1023
        %v1025 = vrot.slane %v1017, %v1024
        %v1027 = vunpack.c.l.s4 1934713408
        %v1028 = vunpack.c.0.s8 %v1027
        %v1029 = vlaneseq
        %v1030 = vshrl.u32 %v1029, 7
        %v1031 = vsub.s32 %v1028, %v1030
        %v1032 = vrot.slane %v1018, %v1031
        %v1033 = vcombine.low %v1001, %v1016
        %v1034 = vcombine.high %v1001, %v1016
        %v1036 = vunpack.c.l.s4 1934713408
        %v1037 = vunpack.c.0.s8 %v1036
        %v1038 = vlaneseq
        %v1039 = vshrl.u32 %v1038, 7
        %v1040 = vsub.s32 %v1037, %v1039
        %v1041 = vrot.slane %v1033, %v1040
        %v1043 = vunpack.c.l.s4 1934713408
        %v1044 = vunpack.c.0.s8 %v1043
        %v1045 = vlaneseq
        %v1046 = vshrl.u32 %v1045, 7
        %v1047 = vsub.s32 %v1044, %v1046
        %v1048 = vrot.slane %v1034, %v1047
        %v1049 = vcombine.high %v1025, 0.0
        %v1050 = vcombine.high %v1032, 0.0
        %v1051 = vcombine.high %v1041, 0.0
        %v1052 = vcombine.high %v1048, 0.0
        %v1053 = vcombine.low %v1025, %v1032
        %v1055 = vunpack.c.l.s4 1983009808
        %v1056 = vunpack.c.0.s8 %v1055
        %v1057 = vlaneseq
        %v1058 = vshrl.u32 %v1057, 7
        %v1059 = vsub.s32 %v1056, %v1058
        %v1060 = vrot.slane %v1053, %v1059
        %v1061 = vcombine.low %v1049, %v1050
        %v1063 = vunpack.c.l.s4 1983009808
        %v1064 = vunpack.c.0.s8 %v1063
        %v1065 = vlaneseq
        %v1066 = vshrl.u32 %v1065, 7
        %v1067 = vsub.s32 %v1064, %v1066
        %v1068 = vrot.slane %v1061, %v1067
        %v1069 = vcombine.low %v1041, %v1048
        %v1071 = vunpack.c.l.s4 1983009808
        %v1072 = vunpack.c.0.s8 %v1071
        %v1073 = vlaneseq
        %v1074 = vshrl.u32 %v1073, 7
        %v1075 = vsub.s32 %v1072, %v1074
        %v1076 = vrot.slane %v1069, %v1075
        %v1077 = vcombine.low %v1051, %v1052
        %v1079 = vunpack.c.l.s4 1983009808
        %v1080 = vunpack.c.0.s8 %v1079
        %v1081 = vlaneseq
        %v1082 = vshrl.u32 %v1081, 7
        %v1083 = vsub.s32 %v1080, %v1082
        %v1084 = vrot.slane %v1077, %v1083
        %v1085 = vcombine.low %v1060, %v1068
        %v1087 = vunpack.c.l.s4 1934713408
        %v1088 = vunpack.c.0.s8 %v1087
        %v1089 = vlaneseq
        %v1090 = vshrl.u32 %v1089, 7
        %v1091 = vsub.s32 %v1088, %v1090
        %v1092 = vrot.slane %v1085, %v1091
        %v1093 = vcombine.low %v1076, %v1084
        %v1095 = vunpack.c.l.s4 1934713408
        %v1096 = vunpack.c.0.s8 %v1095
        %v1097 = vlaneseq
        %v1098 = vshrl.u32 %v1097, 7
        %v1099 = vsub.s32 %v1096, %v1098
        %v1100 = vrot.slane %v1093, %v1099
        %v1101 = vcombine.low %v1092, %v1100
        %v1102 = vcombine.high %v1092, %v1100
        %vm1103 = vcmask 523264
        %v1105 = vsel %vm1103, %v861, 0
        %v1108 = vsel %vm1103, %v981, 0
        %1110 = vmatprep.subr.mxu0 0.0
        %1111 = vmatpush1.xpose.msra.mxu0 0.0
        %1112 = vmatprep.subr.mxu0 0.0
        %1113 = vmatpush1.xpose.msra.mxu0 0.0
        %1114 = vmatprep.subr.mxu0 0.0
        %1115 = vmatpush1.xpose.msra.mxu0 0.0
        %1116 = vmatprep.subr.mxu0 0.0
        %1117 = vmatpush1.xpose.msra.mxu0 0.0
        %1118 = vmatprep.subr.mxu0 0.0
        %1119 = vmatpush1.xpose.msra.mxu0 0.0
        %1120 = vmatprep.subr.mxu0 0.0
        %1121 = vmatpush1.xpose.msra.mxu0 0.0
        %1122 = vmatprep.subr.mxu0 0.0
        %1123 = vmatpush1.xpose.msra.mxu0 0.0
        %1124 = vmatprep.subr.mxu0 0.0
        %1125 = vmatpush1.xpose.msra.mxu0 0.0
        %1126 = vmatprep.subr.mxu0 0.0
        %1127 = vmatpush1.xpose.msra.mxu0 0.0
        %1128 = vmatprep.subr.mxu0 0.0
        %1129 = vmatpush1.xpose.msra.mxu0 0.0
        %1130 = vmatprep.subr.mxu0 0.0
        %1131 = vmatpush1.xpose.msra.mxu0 0.0
        %1132 = vmatprep.subr.mxu0 0.0
        %1133 = vmatpush1.xpose.msra.mxu0 0.0
        %1134 = vmatprep.subr.mxu0 0.0
        %1135 = vmatpush1.xpose.msra.mxu0 0.0
        %1136 = vmatprep.subr.mxu0 0.0
        %1137 = vmatpush1.xpose.msra.mxu0 0.0
        %1138 = vmatprep.subr.mxu0 0.0
        %1139 = vmatpush1.xpose.msra.mxu0 0.0
        %1140 = vmatprep.subr.mxu0 0.0
        %1141 = vmatpush1.xpose.msra.mxu0 %v1108
        %1142 = vmatprep.subr.mxu0 0.0
        %1143 = vmatpush2.xpose.msra.mxu0 0.0
        %1144 = vmatprep.subr.mxu0 0.0
        %1145 = vmatpush2.xpose.msra.mxu0 0.0
        %1146 = vmatprep.subr.mxu0 0.0
        %1147 = vmatpush2.xpose.msra.mxu0 0.0
        %1148 = vmatprep.subr.mxu0 0.0
        %1149 = vmatpush2.xpose.msra.mxu0 0.0
        %1150 = vmatprep.subr.mxu0 0.0
        %1151 = vmatpush2.xpose.msra.mxu0 0.0
        %1152 = vmatprep.subr.mxu0 0.0
        %1153 = vmatpush2.xpose.msra.mxu0 0.0
        %1154 = vmatprep.subr.mxu0 0.0
        %1155 = vmatpush2.xpose.msra.mxu0 0.0
        %1156 = vmatprep.subr.mxu0 0.0
        %1157 = vmatpush2.xpose.msra.mxu0 0.0
        %1158 = vmatprep.subr.mxu0 0.0
        %1159 = vmatpush2.xpose.msra.mxu0 0.0
        %1160 = vmatprep.subr.mxu0 0.0
        %1161 = vmatpush2.xpose.msra.mxu0 0.0
        %1162 = vmatprep.subr.mxu0 0.0
        %1163 = vmatpush2.xpose.msra.mxu0 0.0
        %1164 = vmatprep.subr.mxu0 0.0
        %1165 = vmatpush2.xpose.msra.mxu0 0.0
        %1166 = vmatprep.subr.mxu0 0.0
        %1167 = vmatpush2.xpose.msra.mxu0 0.0
        %1168 = vmatprep.subr.mxu0 0.0
        %1169 = vmatpush2.xpose.msra.mxu0 0.0
        %1170 = vmatprep.subr.mxu0 0.0
        %1171 = vmatpush2.xpose.msra.mxu0 0.0
        %1172 = vmatprep.subr.mxu0 0.0
        %1173 = vmatpush2.xpose.msra.mxu0 0.0
        %1174 = vmatprep.mubr.f32.mxu0 0.0
        %1175 = vmatmul.mubr.f32.gmra.mxu0 %v1105
        %v1176 = vpop.f32.mrf.mxu0
        %v1177 = vadd.f32 0.0, %v1176
        %v1178 = vpop.f32.mrf.mxu0
        %1179 = vdwg.mxu0
        %v1181 = vsel %vm1103, %v862, 0
        %v1184 = vsel %vm1103, %v982, 0
        %1186 = vmatprep.subr.mxu0 0.0
        %1187 = vmatpush1.xpose.msra.mxu0 0.0
        %1188 = vmatprep.subr.mxu0 0.0
        %1189 = vmatpush1.xpose.msra.mxu0 0.0
        %1190 = vmatprep.subr.mxu0 0.0
        %1191 = vmatpush1.xpose.msra.mxu0 0.0
        %1192 = vmatprep.subr.mxu0 0.0
        %1193 = vmatpush1.xpose.msra.mxu0 0.0
        %1194 = vmatprep.subr.mxu0 0.0
        %1195 = vmatpush1.xpose.msra.mxu0 0.0
        %1196 = vmatprep.subr.mxu0 0.0
        %1197 = vmatpush1.xpose.msra.mxu0 0.0
        %1198 = vmatprep.subr.mxu0 0.0
        %1199 = vmatpush1.xpose.msra.mxu0 0.0
        %1200 = vmatprep.subr.mxu0 0.0
        %1201 = vmatpush1.xpose.msra.mxu0 0.0
        %1202 = vmatprep.subr.mxu0 0.0
        %1203 = vmatpush1.xpose.msra.mxu0 0.0
        %1204 = vmatprep.subr.mxu0 0.0
        %1205 = vmatpush1.xpose.msra.mxu0 0.0
        %1206 = vmatprep.subr.mxu0 0.0
        %1207 = vmatpush1.xpose.msra.mxu0 0.0
        %1208 = vmatprep.subr.mxu0 0.0
        %1209 = vmatpush1.xpose.msra.mxu0 0.0
        %1210 = vmatprep.subr.mxu0 0.0
        %1211 = vmatpush1.xpose.msra.mxu0 0.0
        %1212 = vmatprep.subr.mxu0 0.0
        %1213 = vmatpush1.xpose.msra.mxu0 0.0
        %1214 = vmatprep.subr.mxu0 0.0
        %1215 = vmatpush1.xpose.msra.mxu0 0.0
        %1216 = vmatprep.subr.mxu0 0.0
        %1217 = vmatpush1.xpose.msra.mxu0 %v1184
        %1218 = vmatprep.subr.mxu0 0.0
        %1219 = vmatpush2.xpose.msra.mxu0 0.0
        %1220 = vmatprep.subr.mxu0 0.0
        %1221 = vmatpush2.xpose.msra.mxu0 0.0
        %1222 = vmatprep.subr.mxu0 0.0
        %1223 = vmatpush2.xpose.msra.mxu0 0.0
        %1224 = vmatprep.subr.mxu0 0.0
        %1225 = vmatpush2.xpose.msra.mxu0 0.0
        %1226 = vmatprep.subr.mxu0 0.0
        %1227 = vmatpush2.xpose.msra.mxu0 0.0
        %1228 = vmatprep.subr.mxu0 0.0
        %1229 = vmatpush2.xpose.msra.mxu0 0.0
        %1230 = vmatprep.subr.mxu0 0.0
        %1231 = vmatpush2.xpose.msra.mxu0 0.0
        %1232 = vmatprep.subr.mxu0 0.0
        %1233 = vmatpush2.xpose.msra.mxu0 0.0
        %1234 = vmatprep.subr.mxu0 0.0
        %1235 = vmatpush2.xpose.msra.mxu0 0.0
        %1236 = vmatprep.subr.mxu0 0.0
        %1237 = vmatpush2.xpose.msra.mxu0 0.0
        %1238 = vmatprep.subr.mxu0 0.0
        %1239 = vmatpush2.xpose.msra.mxu0 0.0
        %1240 = vmatprep.subr.mxu0 0.0
        %1241 = vmatpush2.xpose.msra.mxu0 0.0
        %1242 = vmatprep.subr.mxu0 0.0
        %1243 = vmatpush2.xpose.msra.mxu0 0.0
        %1244 = vmatprep.subr.mxu0 0.0
        %1245 = vmatpush2.xpose.msra.mxu0 0.0
        %1246 = vmatprep.subr.mxu0 0.0
        %1247 = vmatpush2.xpose.msra.mxu0 0.0
        %1248 = vmatprep.subr.mxu0 0.0
        %1249 = vmatpush2.xpose.msra.mxu0 0.0
        %1250 = vmatprep.mubr.f32.mxu0 0.0
        %1251 = vmatmul.mubr.f32.gmra.mxu0 %v1181
        %v1252 = vpop.f32.mrf.mxu0
        %v1253 = vadd.f32 0.0, %v1252
        %v1254 = vpop.f32.mrf.mxu0
        %1255 = vdwg.mxu0
        %v1256 = vmul.f32 %v1177, 0.125
        %v1257 = vmul.f32 %v1253, 0.125
        %v1259 = vlaneseq
        %v1260 = vshrl.u32 %v1259, 7
        %v1261 = vsub.s32 0, %v1260
        %v1262 = vrot.slane %v482, %v1261
        %v1264 = vadd.f32 %v1256, %v1262
        %v1265 = vadd.f32 %v1257, %v1262
        %vm1266 = vcmask 64512
        %v1267 = vsel %vm1266, %v1264, -inf
        %1268 = vmax.xlane.f32.xlu0 %v1267
        %v1269 = vpop.xlane.xlu0 %1268
        %v1270 = vsel %vm1266, %v1265, -inf
        %1271 = vmax.xlane.f32.xlu0 %v1270
        %v1272 = vpop.xlane.xlu0 %1271
        %v1273 = vsub.f32 %v1264, %v1269
        %v1274 = vsub.f32 %v1265, %v1272
        %v1275 = vmul.f32 %v1273, 1.442695
        %v1276 = vpow.pop %v1275
        %v1277 = vmul.f32 %v1274, 1.442695
        %v1278 = vpow.pop %v1277
        %v1279 = vsel %vm1266, %v1276, 0.0
        %1280 = vadd.xlane.f32.xlu0 %v1279
        %v1281 = vpop.xlane.xlu0 %1280
        %v1282 = vsel %vm1266, %v1278, 0.0
        %1283 = vadd.xlane.f32.xlu0 %v1282
        %v1284 = vpop.xlane.xlu0 %1283
        %v1285 = vrcp.pop %v1281
        %v1286 = vmul.f32 %v1276, %v1285
        %v1287 = vrcp.pop %v1284
        %v1288 = vmul.f32 %v1278, %v1287
        %v1290 = vsel %vm1266, %v1286, 0
        %1292 = vmatprep.subr.mxu0 0.0
        %1293 = vmatpush1.msra.mxu0 0.0
        %1294 = vmatprep.subr.mxu0 0.0
        %1295 = vmatpush1.msra.mxu0 0.0
        %1296 = vmatprep.subr.mxu0 0.0
        %1297 = vmatpush1.msra.mxu0 0.0
        %1298 = vmatprep.subr.mxu0 0.0
        %1299 = vmatpush1.msra.mxu0 0.0
        %1300 = vmatprep.subr.mxu0 0.0
        %1301 = vmatpush1.msra.mxu0 0.0
        %1302 = vmatprep.subr.mxu0 0.0
        %1303 = vmatpush1.msra.mxu0 0.0
        %1304 = vmatprep.subr.mxu0 0.0
        %1305 = vmatpush1.msra.mxu0 0.0
        %1306 = vmatprep.subr.mxu0 0.0
        %1307 = vmatpush1.msra.mxu0 0.0
        %1308 = vmatprep.subr.mxu0 0.0
        %1309 = vmatpush1.msra.mxu0 0.0
        %1310 = vmatprep.subr.mxu0 0.0
        %1311 = vmatpush1.msra.mxu0 0.0
        %1312 = vmatprep.subr.mxu0 0.0
        %1313 = vmatpush1.msra.mxu0 0.0
        %1314 = vmatprep.subr.mxu0 0.0
        %1315 = vmatpush1.msra.mxu0 0.0
        %1316 = vmatprep.subr.mxu0 0.0
        %1317 = vmatpush1.msra.mxu0 0.0
        %1318 = vmatprep.subr.mxu0 0.0
        %1319 = vmatpush1.msra.mxu0 0.0
        %1320 = vmatprep.subr.mxu0 0.0
        %1321 = vmatpush1.msra.mxu0 0.0
        %1322 = vmatprep.subr.mxu0 0.0
        %1323 = vmatpush1.msra.mxu0 %v1101
        %1324 = vmatprep.subr.mxu0 0.0
        %1325 = vmatpush2.msra.mxu0 0.0
        %1326 = vmatprep.subr.mxu0 0.0
        %1327 = vmatpush2.msra.mxu0 0.0
        %1328 = vmatprep.subr.mxu0 0.0
        %1329 = vmatpush2.msra.mxu0 0.0
        %1330 = vmatprep.subr.mxu0 0.0
        %1331 = vmatpush2.msra.mxu0 0.0
        %1332 = vmatprep.subr.mxu0 0.0
        %1333 = vmatpush2.msra.mxu0 0.0
        %1334 = vmatprep.subr.mxu0 0.0
        %1335 = vmatpush2.msra.mxu0 0.0
        %1336 = vmatprep.subr.mxu0 0.0
        %1337 = vmatpush2.msra.mxu0 0.0
        %1338 = vmatprep.subr.mxu0 0.0
        %1339 = vmatpush2.msra.mxu0 0.0
        %1340 = vmatprep.subr.mxu0 0.0
        %1341 = vmatpush2.msra.mxu0 0.0
        %1342 = vmatprep.subr.mxu0 0.0
        %1343 = vmatpush2.msra.mxu0 0.0
        %1344 = vmatprep.subr.mxu0 0.0
        %1345 = vmatpush2.msra.mxu0 0.0
        %1346 = vmatprep.subr.mxu0 0.0
        %1347 = vmatpush2.msra.mxu0 0.0
        %1348 = vmatprep.subr.mxu0 0.0
        %1349 = vmatpush2.msra.mxu0 0.0
        %1350 = vmatprep.subr.mxu0 0.0
        %1351 = vmatpush2.msra.mxu0 0.0
        %1352 = vmatprep.subr.mxu0 0.0
        %1353 = vmatpush2.msra.mxu0 0.0
        %1354 = vmatprep.subr.mxu0 0.0
        %1355 = vmatpush2.msra.mxu0 0.0
        %1356 = vmatprep.mubr.f32.mxu0 0.0
        %1357 = vmatmul.mubr.f32.gmra.mxu0 %v1290
        %v1358 = vpop.f32.mrf.mxu0
        %v1359 = vadd.f32 0.0, %v1358
        %v1360 = vpop.f32.mrf.mxu0
        %1361 = vdwg.mxu0
        %v1363 = vsel %vm1266, %v1288, 0
        %1365 = vmatprep.subr.mxu0 0.0
        %1366 = vmatpush1.msra.mxu0 0.0
        %1367 = vmatprep.subr.mxu0 0.0
        %1368 = vmatpush1.msra.mxu0 0.0
        %1369 = vmatprep.subr.mxu0 0.0
        %1370 = vmatpush1.msra.mxu0 0.0
        %1371 = vmatprep.subr.mxu0 0.0
        %1372 = vmatpush1.msra.mxu0 0.0
        %1373 = vmatprep.subr.mxu0 0.0
        %1374 = vmatpush1.msra.mxu0 0.0
        %1375 = vmatprep.subr.mxu0 0.0
        %1376 = vmatpush1.msra.mxu0 0.0
        %1377 = vmatprep.subr.mxu0 0.0
        %1378 = vmatpush1.msra.mxu0 0.0
        %1379 = vmatprep.subr.mxu0 0.0
        %1380 = vmatpush1.msra.mxu0 0.0
        %1381 = vmatprep.subr.mxu0 0.0
        %1382 = vmatpush1.msra.mxu0 0.0
        %1383 = vmatprep.subr.mxu0 0.0
        %1384 = vmatpush1.msra.mxu0 0.0
        %1385 = vmatprep.subr.mxu0 0.0
        %1386 = vmatpush1.msra.mxu0 0.0
        %1387 = vmatprep.subr.mxu0 0.0
        %1388 = vmatpush1.msra.mxu0 0.0
        %1389 = vmatprep.subr.mxu0 0.0
        %1390 = vmatpush1.msra.mxu0 0.0
        %1391 = vmatprep.subr.mxu0 0.0
        %1392 = vmatpush1.msra.mxu0 0.0
        %1393 = vmatprep.subr.mxu0 0.0
        %1394 = vmatpush1.msra.mxu0 0.0
        %1395 = vmatprep.subr.mxu0 0.0
        %1396 = vmatpush1.msra.mxu0 %v1102
        %1397 = vmatprep.subr.mxu0 0.0
        %1398 = vmatpush2.msra.mxu0 0.0
        %1399 = vmatprep.subr.mxu0 0.0
        %1400 = vmatpush2.msra.mxu0 0.0
        %1401 = vmatprep.subr.mxu0 0.0
        %1402 = vmatpush2.msra.mxu0 0.0
        %1403 = vmatprep.subr.mxu0 0.0
        %1404 = vmatpush2.msra.mxu0 0.0
        %1405 = vmatprep.subr.mxu0 0.0
        %1406 = vmatpush2.msra.mxu0 0.0
        %1407 = vmatprep.subr.mxu0 0.0
        %1408 = vmatpush2.msra.mxu0 0.0
        %1409 = vmatprep.subr.mxu0 0.0
        %1410 = vmatpush2.msra.mxu0 0.0
        %1411 = vmatprep.subr.mxu0 0.0
        %1412 = vmatpush2.msra.mxu0 0.0
        %1413 = vmatprep.subr.mxu0 0.0
        %1414 = vmatpush2.msra.mxu0 0.0
        %1415 = vmatprep.subr.mxu0 0.0
        %1416 = vmatpush2.msra.mxu0 0.0
        %1417 = vmatprep.subr.mxu0 0.0
        %1418 = vmatpush2.msra.mxu0 0.0
        %1419 = vmatprep.subr.mxu0 0.0
        %1420 = vmatpush2.msra.mxu0 0.0
        %1421 = vmatprep.subr.mxu0 0.0
        %1422 = vmatpush2.msra.mxu0 0.0
        %1423 = vmatprep.subr.mxu0 0.0
        %1424 = vmatpush2.msra.mxu0 0.0
        %1425 = vmatprep.subr.mxu0 0.0
        %1426 = vmatpush2.msra.mxu0 0.0
        %1427 = vmatprep.subr.mxu0 0.0
        %1428 = vmatpush2.msra.mxu0 0.0
        %1429 = vmatprep.mubr.f32.mxu0 0.0
        %1430 = vmatmul.mubr.f32.gmra.mxu0 %v1363
        %v1431 = vpop.f32.mrf.mxu0
        %v1432 = vadd.f32 0.0, %v1431
        %v1433 = vpop.f32.mrf.mxu0
        %1434 = vdwg.mxu0
        %v1435 = vcombine.high %v1359, 0.0
        %v1437 = vunpack.c.l.s4 1983009808
        %v1438 = vunpack.c.0.s8 %v1437
        %v1439 = vlaneseq
        %v1440 = vshrl.u32 %v1439, 7
        %v1441 = vsub.s32 %v1438, %v1440
        %v1442 = vrot.slane %v1359, %v1441
        %v1444 = vunpack.c.l.s4 1983009808
        %v1445 = vunpack.c.0.s8 %v1444
        %v1446 = vlaneseq
        %v1447 = vshrl.u32 %v1446, 7
        %v1448 = vsub.s32 %v1445, %v1447
        %v1449 = vrot.slane %v1435, %v1448
        %v1450 = vcombine.high %v1432, 0.0
        %v1452 = vunpack.c.l.s4 1983009808
        %v1453 = vunpack.c.0.s8 %v1452
        %v1454 = vlaneseq
        %v1455 = vshrl.u32 %v1454, 7
        %v1456 = vsub.s32 %v1453, %v1455
        %v1457 = vrot.slane %v1432, %v1456
        %v1459 = vunpack.c.l.s4 1983009808
        %v1460 = vunpack.c.0.s8 %v1459
        %v1461 = vlaneseq
        %v1462 = vshrl.u32 %v1461, 7
        %v1463 = vsub.s32 %v1460, %v1462
        %v1464 = vrot.slane %v1450, %v1463
        %v1465 = vcombine.low %v1442, %v1457
        %v1466 = vcombine.high %v1442, %v1457
        %v1468 = vunpack.c.l.s4 1934713408
        %v1469 = vunpack.c.0.s8 %v1468
        %v1470 = vlaneseq
        %v1471 = vshrl.u32 %v1470, 7
        %v1472 = vsub.s32 %v1469, %v1471
        %v1473 = vrot.slane %v1465, %v1472
        %v1475 = vunpack.c.l.s4 1934713408
        %v1476 = vunpack.c.0.s8 %v1475
        %v1477 = vlaneseq
        %v1478 = vshrl.u32 %v1477, 7
        %v1479 = vsub.s32 %v1476, %v1478
        %v1480 = vrot.slane %v1466, %v1479
        %v1481 = vcombine.low %v1449, %v1464
        %v1482 = vcombine.high %v1449, %v1464
        %v1484 = vunpack.c.l.s4 1934713408
        %v1485 = vunpack.c.0.s8 %v1484
        %v1486 = vlaneseq
        %v1487 = vshrl.u32 %v1486, 7
        %v1488 = vsub.s32 %v1485, %v1487
        %v1489 = vrot.slane %v1481, %v1488
        %v1491 = vunpack.c.l.s4 1934713408
        %v1492 = vunpack.c.0.s8 %v1491
        %v1493 = vlaneseq
        %v1494 = vshrl.u32 %v1493, 7
        %v1495 = vsub.s32 %v1492, %v1494
        %v1496 = vrot.slane %v1482, %v1495
        %v1497 = vcombine.high %v1473, 0.0
        %v1498 = vcombine.high %v1480, 0.0
        %v1499 = vcombine.high %v1489, 0.0
        %v1500 = vcombine.high %v1496, 0.0
        %v1501 = vcombine.low %v1473, %v1480
        %v1503 = vunpack.c.l.s4 1983009808
        %v1504 = vunpack.c.0.s8 %v1503
        %v1505 = vlaneseq
        %v1506 = vshrl.u32 %v1505, 7
        %v1507 = vsub.s32 %v1504, %v1506
        %v1508 = vrot.slane %v1501, %v1507
        %v1509 = vcombine.low %v1497, %v1498
        %v1511 = vunpack.c.l.s4 1983009808
        %v1512 = vunpack.c.0.s8 %v1511
        %v1513 = vlaneseq
        %v1514 = vshrl.u32 %v1513, 7
        %v1515 = vsub.s32 %v1512, %v1514
        %v1516 = vrot.slane %v1509, %v1515
        %v1517 = vcombine.low %v1489, %v1496
        %v1519 = vunpack.c.l.s4 1983009808
        %v1520 = vunpack.c.0.s8 %v1519
        %v1521 = vlaneseq
        %v1522 = vshrl.u32 %v1521, 7
        %v1523 = vsub.s32 %v1520, %v1522
        %v1524 = vrot.slane %v1517, %v1523
        %v1525 = vcombine.low %v1499, %v1500
        %v1527 = vunpack.c.l.s4 1983009808
        %v1528 = vunpack.c.0.s8 %v1527
        %v1529 = vlaneseq
        %v1530 = vshrl.u32 %v1529, 7
        %v1531 = vsub.s32 %v1528, %v1530
        %v1532 = vrot.slane %v1525, %v1531
        %v1533 = vcombine.low %v1508, %v1516
        %v1535 = vunpack.c.l.s4 1934713408
        %v1536 = vunpack.c.0.s8 %v1535
        %v1537 = vlaneseq
        %v1538 = vshrl.u32 %v1537, 7
        %v1539 = vsub.s32 %v1536, %v1538
        %v1540 = vrot.slane %v1533, %v1539
        %v1541 = vcombine.low %v1524, %v1532
        %v1543 = vunpack.c.l.s4 1934713408
        %v1544 = vunpack.c.0.s8 %v1543
        %v1545 = vlaneseq
        %v1546 = vshrl.u32 %v1545, 7
        %v1547 = vsub.s32 %v1544, %v1546
        %v1548 = vrot.slane %v1541, %v1547
        %v1549 = vcombine.low %v1540, %v1548
        %v1550 = vcombine.high %v1540, %v1548
        %1552 = vrot.lane.b32.xlu0 %v1550, 64
        %v1553 = vpop.permute.xlu0 %1552
        %v1555 = vsel %vm1103, %v1549, %v1553
        %v1556 = vpack.c.bf16 %v1555, %v1555
        %v1557 = vld [vmem:[%s4] sm:$0xf]
        %v1558 = vld [vmem:[%s4 + $0x4] sm:$0xf]
        %v1559 = vld [vmem:[%s4 + $0x8] sm:$0xf]
        %v1560 = vld [vmem:[%s4 + $0xc] sm:$0xf]
        %v1561 = vld [vmem:[%s4 + $0x10] sm:$0xf]
        %v1562 = vld [vmem:[%s4 + $0x14] sm:$0xf]
        %v1563 = vld [vmem:[%s4 + $0x18] sm:$0xf]
        %v1564 = vld [vmem:[%s4 + $0x1c] sm:$0xf]
        %v1565 = vld [vmem:[%s4 + $0x20] sm:$0xf]
        %v1566 = vld [vmem:[%s4 + $0x24] sm:$0xf]
        %v1567 = vld [vmem:[%s4 + $0x28] sm:$0xf]
        %v1568 = vld [vmem:[%s4 + $0x2c] sm:$0xf]
        %v1569 = vld [vmem:[%s4 + $0x30] sm:$0xf]
        %v1570 = vld [vmem:[%s4 + $0x34] sm:$0xf]
        %v1571 = vld [vmem:[%s4 + $0x38] sm:$0xf]
        %v1572 = vld [vmem:[%s4 + $0x3c] sm:$0xf]
        %v1573 = vld [vmem:[#allocation7 + $0x3] sm:$0x1]
        %v1574 = vlaneseq
        %v1575 = vshrl.u32 %v1574, 7
        %v1576 = vsub.s32 0, %v1575
        %v1577 = vrot.slane %v1573, %v1576
        %v1594 = vunpack.c.l.b16 %v1557
        %v1595 = vunpack.c.l.b16 %v1558
        %v1596 = vunpack.c.l.b16 %v1559
        %v1597 = vunpack.c.l.b16 %v1560
        %v1598 = vunpack.c.l.b16 %v1561
        %v1599 = vunpack.c.l.b16 %v1562
        %v1600 = vunpack.c.l.b16 %v1563
        %v1601 = vunpack.c.l.b16 %v1564
        %v1602 = vunpack.c.l.b16 %v1565
        %v1603 = vunpack.c.l.b16 %v1566
        %v1604 = vunpack.c.l.b16 %v1567
        %v1605 = vunpack.c.l.b16 %v1568
        %v1606 = vunpack.c.l.b16 %v1569
        %v1607 = vunpack.c.l.b16 %v1570
        %v1608 = vunpack.c.l.b16 %v1571
        %v1609 = vunpack.c.l.b16 %v1572
        %v1610 = vpack.c.b16 %v1595, %v1594
        %v1611 = vpack.c.b16 %v1597, %v1596
        %v1612 = vpack.c.b16 %v1599, %v1598
        %v1613 = vpack.c.b16 %v1601, %v1600
        %v1614 = vpack.c.b16 %v1603, %v1602
        %v1615 = vpack.c.b16 %v1605, %v1604
        %v1616 = vpack.c.b16 %v1607, %v1606
        %v1617 = vpack.c.b16 %v1609, %v1608
        %1626 = vmatprep.subr.bf16.mxu0 0
        %1627 = vmatpush1.bf16.msra.mxu0 %v1617
        %1628 = vmatprep.subr.bf16.mxu0 0
        %1629 = vmatpush1.bf16.msra.mxu0 %v1616
        %1630 = vmatprep.subr.bf16.mxu0 0
        %1631 = vmatpush1.bf16.msra.mxu0 %v1615
        %1632 = vmatprep.subr.bf16.mxu0 0
        %1633 = vmatpush1.bf16.msra.mxu0 %v1614
        %1634 = vmatprep.subr.bf16.mxu0 0
        %1635 = vmatpush1.bf16.msra.mxu0 %v1613
        %1636 = vmatprep.subr.bf16.mxu0 0
        %1637 = vmatpush1.bf16.msra.mxu0 %v1612
        %1638 = vmatprep.subr.bf16.mxu0 0
        %1639 = vmatpush1.bf16.msra.mxu0 %v1611
        %1640 = vmatprep.subr.bf16.mxu0 0
        %1641 = vmatpush1.bf16.msra.mxu0 %v1610
        %1642 = vmatprep.subr.bf16.mxu0 0
        %1643 = vmatpush2.bf16.msra.mxu0 0
        %1644 = vmatprep.subr.bf16.mxu0 0
        %1645 = vmatpush2.bf16.msra.mxu0 0
        %1646 = vmatprep.subr.bf16.mxu0 0
        %1647 = vmatpush2.bf16.msra.mxu0 0
        %1648 = vmatprep.subr.bf16.mxu0 0
        %1649 = vmatpush2.bf16.msra.mxu0 0
        %1650 = vmatprep.subr.bf16.mxu0 0
        %1651 = vmatpush2.bf16.msra.mxu0 0
        %1652 = vmatprep.subr.bf16.mxu0 0
        %1653 = vmatpush2.bf16.msra.mxu0 0
        %1654 = vmatprep.subr.bf16.mxu0 0
        %1655 = vmatpush2.bf16.msra.mxu0 0
        %1656 = vmatprep.subr.bf16.mxu0 0
        %1657 = vmatpush2.bf16.msra.mxu0 0
        %1658 = vmatprep.mubr.bf16.mxu0 0
        %1659 = vmatmul.mubr.bf16.gmra.mxu0 %v1556
        %v1660 = vpop.f32.mrf.mxu0
        %v1661 = vadd.f32 %v1577, %v1660
        %v1662 = vpop.f32.mrf.mxu0
        %v1663 = vpop.f32.mrf.mxu0
        %v1664 = vpop.f32.mrf.mxu0
        %1665 = vdwg.mxu0
        %v1666 = vadd.f32 %v1661, %v479
        %v1667 = vld [vmem:[#allocation7 + $0x4] sm:$0x1]
        %v1668 = vld [vmem:[#allocation7 + $0x5] sm:$0x1]
        %1669 = vadd.xlane.f32.xlu0 %v1666
        %v1670 = vpop.xlane.xlu0 %1669
        %v1671 = vmul.f32 %v1670, %v460
        %v1672 = vsub.f32 %v1666, %v1671
        %v1673 = vmul.f32 %v1672, %v1672
        %1674 = vadd.xlane.f32.xlu0 %v1673
        %v1675 = vpop.xlane.xlu0 %1674
        %v1676 = vmul.f32 %v1675, %v460
        %v1677 = vadd.f32 %v1676, 1e-05
        %v1678 = vrsqrt.pop %v1677
        %v1679 = vmul.f32 %v1672, %v1678
        %v1680 = vlaneseq
        %v1681 = vshrl.u32 %v1680, 7
        %v1682 = vsub.s32 0, %v1681
        %v1683 = vrot.slane %v1667, %v1682
        %v1684 = vmul.f32 %v1679, %v1683
        %v1685 = vlaneseq
        %v1686 = vshrl.u32 %v1685, 7
        %v1687 = vsub.s32 0, %v1686
        %v1688 = vrot.slane %v1668, %v1687
        %v1689 = vadd.f32 %v1684, %v1688
        %v1690 = vpack.c.bf16 %v1689, %v1689
        %v1691 = vld [vmem:[%s5] sm:$0xff]
        %v1692 = vld [vmem:[%s5 + $0x8] sm:$0xff]
        %v1693 = vld [vmem:[%s5 + $0x10] sm:$0xff]
        %v1694 = vld [vmem:[%s5 + $0x18] sm:$0xff]
        %v1695 = vld [vmem:[%s5 + $0x20] sm:$0xff]
        %v1696 = vld [vmem:[%s5 + $0x28] sm:$0xff]
        %v1697 = vld [vmem:[%s5 + $0x30] sm:$0xff]
        %v1698 = vld [vmem:[%s5 + $0x38] sm:$0xff]
        %v1699 = vld [vmem:[%s5 + $0x40] sm:$0xff]
        %v1700 = vld [vmem:[%s5 + $0x48] sm:$0xff]
        %v1701 = vld [vmem:[%s5 + $0x50] sm:$0xff]
        %v1702 = vld [vmem:[%s5 + $0x58] sm:$0xff]
        %v1703 = vld [vmem:[%s5 + $0x60] sm:$0xff]
        %v1704 = vld [vmem:[%s5 + $0x68] sm:$0xff]
        %v1705 = vld [vmem:[%s5 + $0x70] sm:$0xff]
        %v1706 = vld [vmem:[%s5 + $0x78] sm:$0xff]
        %v1707 = vld [vmem:[%s8] ss:$2 sm:$0x3]
        %v1709 = vlaneseq
        %v1710 = vshrl.u32 %v1709, 7
        %v1711 = vsub.s32 0, %v1710
        %v1712 = vrot.slane %v1707, %v1711
        %v1713 = vlaneseq
        %v1714 = vshrl.u32 %v1713, 7
        %v1715 = vsub.s32 1, %v1714
        %v1716 = vrot.slane %v1707, %v1715
        %v1735 = vunpack.c.l.b16 %v1691
        %v1736 = vunpack.c.h.b16 %v1691
        %v1737 = vunpack.c.l.b16 %v1692
        %v1738 = vunpack.c.h.b16 %v1692
        %v1739 = vunpack.c.l.b16 %v1693
        %v1740 = vunpack.c.h.b16 %v1693
        %v1741 = vunpack.c.l.b16 %v1694
        %v1742 = vunpack.c.h.b16 %v1694
        %v1743 = vunpack.c.l.b16 %v1695
        %v1744 = vunpack.c.h.b16 %v1695
        %v1745 = vunpack.c.l.b16 %v1696
        %v1746 = vunpack.c.h.b16 %v1696
        %v1747 = vunpack.c.l.b16 %v1697
        %v1748 = vunpack.c.h.b16 %v1697
        %v1749 = vunpack.c.l.b16 %v1698
        %v1750 = vunpack.c.h.b16 %v1698
        %v1751 = vunpack.c.l.b16 %v1699
        %v1752 = vunpack.c.h.b16 %v1699
        %v1753 = vunpack.c.l.b16 %v1700
        %v1754 = vunpack.c.h.b16 %v1700
        %v1755 = vunpack.c.l.b16 %v1701
        %v1756 = vunpack.c.h.b16 %v1701
        %v1757 = vunpack.c.l.b16 %v1702
        %v1758 = vunpack.c.h.b16 %v1702
        %v1759 = vunpack.c.l.b16 %v1703
        %v1760 = vunpack.c.h.b16 %v1703
        %v1761 = vunpack.c.l.b16 %v1704
        %v1762 = vunpack.c.h.b16 %v1704
        %v1763 = vunpack.c.l.b16 %v1705
        %v1764 = vunpack.c.h.b16 %v1705
        %v1765 = vunpack.c.l.b16 %v1706
        %v1766 = vunpack.c.h.b16 %v1706
        %v1767 = vpack.c.b16 %v1737, %v1735
        %v1768 = vpack.c.b16 %v1738, %v1736
        %v1769 = vpack.c.b16 %v1741, %v1739
        %v1770 = vpack.c.b16 %v1742, %v1740
        %v1771 = vpack.c.b16 %v1745, %v1743
        %v1772 = vpack.c.b16 %v1746, %v1744
        %v1773 = vpack.c.b16 %v1749, %v1747
        %v1774 = vpack.c.b16 %v1750, %v1748
        %v1775 = vpack.c.b16 %v1753, %v1751
        %v1776 = vpack.c.b16 %v1754, %v1752
        %v1777 = vpack.c.b16 %v1757, %v1755
        %v1778 = vpack.c.b16 %v1758, %v1756
        %v1779 = vpack.c.b16 %v1761, %v1759
        %v1780 = vpack.c.b16 %v1762, %v1760
        %v1781 = vpack.c.b16 %v1765, %v1763
        %v1782 = vpack.c.b16 %v1766, %v1764
        %1799 = vmatprep.subr.bf16.mxu0 %v1782
        %1800 = vmatpush1.bf16.msra.mxu0 %v1781
        %1801 = vmatprep.subr.bf16.mxu0 %v1780
        %1802 = vmatpush1.bf16.msra.mxu0 %v1779
        %1803 = vmatprep.subr.bf16.mxu0 %v1778
        %1804 = vmatpush1.bf16.msra.mxu0 %v1777
        %1805 = vmatprep.subr.bf16.mxu0 %v1776
        %1806 = vmatpush1.bf16.msra.mxu0 %v1775
        %1807 = vmatprep.subr.bf16.mxu0 %v1774
        %1808 = vmatpush1.bf16.msra.mxu0 %v1773
        %1809 = vmatprep.subr.bf16.mxu0 %v1772
        %1810 = vmatpush1.bf16.msra.mxu0 %v1771
        %1811 = vmatprep.subr.bf16.mxu0 %v1770
        %1812 = vmatpush1.bf16.msra.mxu0 %v1769
        %1813 = vmatprep.subr.bf16.mxu0 %v1768
        %1814 = vmatpush1.bf16.msra.mxu0 %v1767
        %1815 = vmatprep.subr.bf16.mxu0 0
        %1816 = vmatpush2.bf16.msra.mxu0 0
        %1817 = vmatprep.subr.bf16.mxu0 0
        %1818 = vmatpush2.bf16.msra.mxu0 0
        %1819 = vmatprep.subr.bf16.mxu0 0
        %1820 = vmatpush2.bf16.msra.mxu0 0
        %1821 = vmatprep.subr.bf16.mxu0 0
        %1822 = vmatpush2.bf16.msra.mxu0 0
        %1823 = vmatprep.subr.bf16.mxu0 0
        %1824 = vmatpush2.bf16.msra.mxu0 0
        %1825 = vmatprep.subr.bf16.mxu0 0
        %1826 = vmatpush2.bf16.msra.mxu0 0
        %1827 = vmatprep.subr.bf16.mxu0 0
        %1828 = vmatpush2.bf16.msra.mxu0 0
        %1829 = vmatprep.subr.bf16.mxu0 0
        %1830 = vmatpush2.bf16.msra.mxu0 0
        %1831 = vmatprep.mubr.bf16.mxu0 0
        %1832 = vmatmul.mubr.bf16.gmra.mxu0 %v1690
        %v1833 = vpop.f32.mrf.mxu0
        %v1834 = vadd.f32 %v1712, %v1833
        %v1835 = vpop.f32.mrf.mxu0
        %v1836 = vadd.f32 %v1716, %v1835
        %v1837 = vpop.f32.mrf.mxu0
        %v1838 = vpop.f32.mrf.mxu0
        %1839 = vdwg.mxu0
        %v1840 = vmul.f32 %v1834, 0.5
        %v1841 = vmul.f32 %v1836, 0.5
        %v1842 = vmul.f32 %v1834, 0.044715
        %v1843 = vmul.f32 %v1836, 0.044715
        %v1844 = vmul.f32 %v1842, %v1834
        %v1845 = vmul.f32 %v1843, %v1836
        %v1846 = vmul.f32 %v1844, %v1834
        %v1847 = vmul.f32 %v1845, %v1836
        %v1848 = vadd.f32 %v1834, %v1846
        %v1849 = vadd.f32 %v1836, %v1847
        %v1850 = vmul.f32 %v1848, 0.7978846
        %v1851 = vmul.f32 %v1849, 0.7978846
        %v1852 = vtanh.pop %v1850
        %v1853 = vtanh.pop %v1851
        %v1854 = vadd.f32 %v1852, 1.0
        %v1855 = vadd.f32 %v1853, 1.0
        %v1856 = vmul.f32 %v1840, %v1854
        %v1857 = vmul.f32 %v1841, %v1855
        %v1858 = vpack.c.bf16 %v1856, %v1856
        %v1859 = vpack.c.bf16 %v1857, %v1857
        %v1860 = vld [vmem:[#allocation5] sm:$0xf]
        %v1861 = vld [vmem:[#allocation5 + $0x4] sm:$0xf]
        %v1862 = vld [vmem:[#allocation5 + $0x8] sm:$0xf]
        %v1863 = vld [vmem:[#allocation5 + $0xc] sm:$0xf]
        %v1864 = vld [vmem:[#allocation5 + $0x10] sm:$0xf]
        %v1865 = vld [vmem:[#allocation5 + $0x14] sm:$0xf]
        %v1866 = vld [vmem:[#allocation5 + $0x18] sm:$0xf]
        %v1867 = vld [vmem:[#allocation5 + $0x1c] sm:$0xf]
        %v1868 = vld [vmem:[#allocation5 + $0x20] sm:$0xf]
        %v1869 = vld [vmem:[#allocation5 + $0x24] sm:$0xf]
        %v1870 = vld [vmem:[#allocation5 + $0x28] sm:$0xf]
        %v1871 = vld [vmem:[#allocation5 + $0x2c] sm:$0xf]
        %v1872 = vld [vmem:[#allocation5 + $0x30] sm:$0xf]
        %v1873 = vld [vmem:[#allocation5 + $0x34] sm:$0xf]
        %v1874 = vld [vmem:[#allocation5 + $0x38] sm:$0xf]
        %v1875 = vld [vmem:[#allocation5 + $0x3c] sm:$0xf]
        %v1876 = vld [vmem:[#allocation5 + $0x40] sm:$0xf]
        %v1877 = vld [vmem:[#allocation5 + $0x44] sm:$0xf]
        %v1878 = vld [vmem:[#allocation5 + $0x48] sm:$0xf]
        %v1879 = vld [vmem:[#allocation5 + $0x4c] sm:$0xf]
        %v1880 = vld [vmem:[#allocation5 + $0x50] sm:$0xf]
        %v1881 = vld [vmem:[#allocation5 + $0x54] sm:$0xf]
        %v1882 = vld [vmem:[#allocation5 + $0x58] sm:$0xf]
        %v1883 = vld [vmem:[#allocation5 + $0x5c] sm:$0xf]
        %v1884 = vld [vmem:[#allocation5 + $0x60] sm:$0xf]
        %v1885 = vld [vmem:[#allocation5 + $0x64] sm:$0xf]
        %v1886 = vld [vmem:[#allocation5 + $0x68] sm:$0xf]
        %v1887 = vld [vmem:[#allocation5 + $0x6c] sm:$0xf]
        %v1888 = vld [vmem:[#allocation5 + $0x70] sm:$0xf]
        %v1889 = vld [vmem:[#allocation5 + $0x74] sm:$0xf]
        %v1890 = vld [vmem:[#allocation5 + $0x78] sm:$0xf]
        %v1891 = vld [vmem:[#allocation5 + $0x7c] sm:$0xf]
        %v1892 = vld [vmem:[#allocation7 + $0x6] sm:$0x1]
        %v1893 = vlaneseq
        %v1894 = vshrl.u32 %v1893, 7
        %v1895 = vsub.s32 0, %v1894
        %v1896 = vrot.slane %v1892, %v1895
        %v1929 = vunpack.c.l.b16 %v1860
        %v1930 = vunpack.c.l.b16 %v1861
        %v1931 = vunpack.c.l.b16 %v1862
        %v1932 = vunpack.c.l.b16 %v1863
        %v1933 = vunpack.c.l.b16 %v1864
        %v1934 = vunpack.c.l.b16 %v1865
        %v1935 = vunpack.c.l.b16 %v1866
        %v1936 = vunpack.c.l.b16 %v1867
        %v1937 = vunpack.c.l.b16 %v1868
        %v1938 = vunpack.c.l.b16 %v1869
        %v1939 = vunpack.c.l.b16 %v1870
        %v1940 = vunpack.c.l.b16 %v1871
        %v1941 = vunpack.c.l.b16 %v1872
        %v1942 = vunpack.c.l.b16 %v1873
        %v1943 = vunpack.c.l.b16 %v1874
        %v1944 = vunpack.c.l.b16 %v1875
        %v1945 = vunpack.c.l.b16 %v1876
        %v1946 = vunpack.c.l.b16 %v1877
        %v1947 = vunpack.c.l.b16 %v1878
        %v1948 = vunpack.c.l.b16 %v1879
        %v1949 = vunpack.c.l.b16 %v1880
        %v1950 = vunpack.c.l.b16 %v1881
        %v1951 = vunpack.c.l.b16 %v1882
        %v1952 = vunpack.c.l.b16 %v1883
        %v1953 = vunpack.c.l.b16 %v1884
        %v1954 = vunpack.c.l.b16 %v1885
        %v1955 = vunpack.c.l.b16 %v1886
        %v1956 = vunpack.c.l.b16 %v1887
        %v1957 = vunpack.c.l.b16 %v1888
        %v1958 = vunpack.c.l.b16 %v1889
        %v1959 = vunpack.c.l.b16 %v1890
        %v1960 = vunpack.c.l.b16 %v1891
        %v1961 = vpack.c.b16 %v1930, %v1929
        %v1962 = vpack.c.b16 %v1932, %v1931
        %v1963 = vpack.c.b16 %v1934, %v1933
        %v1964 = vpack.c.b16 %v1936, %v1935
        %v1965 = vpack.c.b16 %v1938, %v1937
        %v1966 = vpack.c.b16 %v1940, %v1939
        %v1967 = vpack.c.b16 %v1942, %v1941
        %v1968 = vpack.c.b16 %v1944, %v1943
        %v1969 = vpack.c.b16 %v1946, %v1945
        %v1970 = vpack.c.b16 %v1948, %v1947
        %v1971 = vpack.c.b16 %v1950, %v1949
        %v1972 = vpack.c.b16 %v1952, %v1951
        %v1973 = vpack.c.b16 %v1954, %v1953
        %v1974 = vpack.c.b16 %v1956, %v1955
        %v1975 = vpack.c.b16 %v1958, %v1957
        %v1976 = vpack.c.b16 %v1960, %v1959
        %1993 = vmatprep.subr.bf16.mxu0 0
        %1994 = vmatpush1.bf16.msra.mxu0 %v1968
        %1995 = vmatprep.subr.bf16.mxu0 0
        %1996 = vmatpush1.bf16.msra.mxu0 %v1967
        %1997 = vmatprep.subr.bf16.mxu0 0
        %1998 = vmatpush1.bf16.msra.mxu0 %v1966
        %1999 = vmatprep.subr.bf16.mxu0 0
        %2000 = vmatpush1.bf16.msra.mxu0 %v1965
        %2001 = vmatprep.subr.bf16.mxu0 0
        %2002 = vmatpush1.bf16.msra.mxu0 %v1964
        %2003 = vmatprep.subr.bf16.mxu0 0
        %2004 = vmatpush1.bf16.msra.mxu0 %v1963
        %2005 = vmatprep.subr.bf16.mxu0 0
        %2006 = vmatpush1.bf16.msra.mxu0 %v1962
        %2007 = vmatprep.subr.bf16.mxu0 0
        %2008 = vmatpush1.bf16.msra.mxu0 %v1961
        %2009 = vmatprep.subr.bf16.mxu0 0
        %2010 = vmatpush2.bf16.msra.mxu0 %v1976
        %2011 = vmatprep.subr.bf16.mxu0 0
        %2012 = vmatpush2.bf16.msra.mxu0 %v1975
        %2013 = vmatprep.subr.bf16.mxu0 0
        %2014 = vmatpush2.bf16.msra.mxu0 %v1974
        %2015 = vmatprep.subr.bf16.mxu0 0
        %2016 = vmatpush2.bf16.msra.mxu0 %v1973
        %2017 = vmatprep.subr.bf16.mxu0 0
        %2018 = vmatpush2.bf16.msra.mxu0 %v1972
        %2019 = vmatprep.subr.bf16.mxu0 0
        %2020 = vmatpush2.bf16.msra.mxu0 %v1971
        %2021 = vmatprep.subr.bf16.mxu0 0
        %2022 = vmatpush2.bf16.msra.mxu0 %v1970
        %2023 = vmatprep.subr.bf16.mxu0 0
        %2024 = vmatpush2.bf16.msra.mxu0 %v1969
        %2025 = vmatprep.mubr.bf16.mxu0 %v1859
        %2026 = vmatmul.mubr.bf16.gmra.mxu0 %v1858
        %v2027 = vpop.f32.mrf.mxu0
        %v2028 = vadd.f32 %v1896, %v2027
        %v2029 = vpop.f32.mrf.mxu0
        %v2030 = vpop.f32.mrf.mxu0
        %v2031 = vpop.f32.mrf.mxu0
        %2032 = vdwg.mxu0
        %v2033 = vadd.f32 %v2028, %v1689
        %v2034 = vld [vmem:[#allocation7 + $0x7] sm:$0x1]
        %v2035 = vld [vmem:[#allocation7 + $0x8] sm:$0x1]
        %2036 = vadd.xlane.f32.xlu0 %v2033
        %v2037 = vpop.xlane.xlu0 %2036
        %v2038 = vmul.f32 %v2037, %v460
        %v2039 = vsub.f32 %v2033, %v2038
        %v2040 = vmul.f32 %v2039, %v2039
        %2041 = vadd.xlane.f32.xlu0 %v2040
        %v2042 = vpop.xlane.xlu0 %2041
        %v2043 = vmul.f32 %v2042, %v460
        %v2044 = vadd.f32 %v2043, 1e-05
        %v2045 = vrsqrt.pop %v2044
        %v2046 = vmul.f32 %v2039, %v2045
        %v2047 = vlaneseq
        %v2048 = vshrl.u32 %v2047, 7
        %v2049 = vsub.s32 0, %v2048
        %v2050 = vrot.slane %v2034, %v2049
        %v2051 = vmul.f32 %v2046, %v2050
        %v2052 = vlaneseq
        %v2053 = vshrl.u32 %v2052, 7
        %v2054 = vsub.s32 0, %v2053
        %v2055 = vrot.slane %v2035, %v2054
        %v2056 = vadd.f32 %v2051, %v2055
        %v2057 = vpack.c.bf16 %v2056, %v2056
        %s2058 = scalar_lea.vmem [#allocation3], 192
        %v2059 = vld [vmem:[%s2058] sm:$0xff]
        %v2060 = vld [vmem:[%s2058 + $0x8] sm:$0xf]
        %v2061 = vld [vmem:[%s2058 + $0xc] sm:$0xff]
        %v2062 = vld [vmem:[%s2058 + $0x14] sm:$0xf]
        %v2063 = vld [vmem:[%s2058 + $0x18] sm:$0xff]
        %v2064 = vld [vmem:[%s2058 + $0x20] sm:$0xf]
        %v2065 = vld [vmem:[%s2058 + $0x24] sm:$0xff]
        %v2066 = vld [vmem:[%s2058 + $0x2c] sm:$0xf]
        %v2067 = vld [vmem:[%s2058 + $0x30] sm:$0xff]
        %v2068 = vld [vmem:[%s2058 + $0x38] sm:$0xf]
        %v2069 = vld [vmem:[%s2058 + $0x3c] sm:$0xff]
        %v2070 = vld [vmem:[%s2058 + $0x44] sm:$0xf]
        %v2071 = vld [vmem:[%s2058 + $0x48] sm:$0xff]
        %v2072 = vld [vmem:[%s2058 + $0x50] sm:$0xf]
        %v2073 = vld [vmem:[%s2058 + $0x54] sm:$0xff]
        %v2074 = vld [vmem:[%s2058 + $0x5c] sm:$0xf]
        %v2075 = vld [vmem:[%s2058 + $0x60] sm:$0xff]
        %v2076 = vld [vmem:[%s2058 + $0x68] sm:$0xf]
        %v2077 = vld [vmem:[%s2058 + $0x6c] sm:$0xff]
        %v2078 = vld [vmem:[%s2058 + $0x74] sm:$0xf]
        %v2079 = vld [vmem:[%s2058 + $0x78] sm:$0xff]
        %v2080 = vld [vmem:[%s2058 + $0x80] sm:$0xf]
        %v2081 = vld [vmem:[%s2058 + $0x84] sm:$0xff]
        %v2082 = vld [vmem:[%s2058 + $0x8c] sm:$0xf]
        %v2083 = vld [vmem:[%s2058 + $0x90] sm:$0xff]
        %v2084 = vld [vmem:[%s2058 + $0x98] sm:$0xf]
        %v2085 = vld [vmem:[%s2058 + $0x9c] sm:$0xff]
        %v2086 = vld [vmem:[%s2058 + $0xa4] sm:$0xf]
        %v2087 = vld [vmem:[%s2058 + $0xa8] sm:$0xff]
        %v2088 = vld [vmem:[%s2058 + $0xb0] sm:$0xf]
        %v2089 = vld [vmem:[%s2058 + $0xb4] sm:$0xff]
        %v2090 = vld [vmem:[%s2058 + $0xbc] sm:$0xf]
        %v2123 = vunpack.c.l.b16 %v2059
        %v2124 = vunpack.c.h.b16 %v2059
        %v2125 = vunpack.c.l.b16 %v2060
        %v2126 = vunpack.c.l.b16 %v2061
        %v2127 = vunpack.c.h.b16 %v2061
        %v2128 = vunpack.c.l.b16 %v2062
        %v2129 = vunpack.c.l.b16 %v2063
        %v2130 = vunpack.c.h.b16 %v2063
        %v2131 = vunpack.c.l.b16 %v2064
        %v2132 = vunpack.c.l.b16 %v2065
        %v2133 = vunpack.c.h.b16 %v2065
        %v2134 = vunpack.c.l.b16 %v2066
        %v2135 = vunpack.c.l.b16 %v2067
        %v2136 = vunpack.c.h.b16 %v2067
        %v2137 = vunpack.c.l.b16 %v2068
        %v2138 = vunpack.c.l.b16 %v2069
        %v2139 = vunpack.c.h.b16 %v2069
        %v2140 = vunpack.c.l.b16 %v2070
        %v2141 = vunpack.c.l.b16 %v2071
        %v2142 = vunpack.c.h.b16 %v2071
        %v2143 = vunpack.c.l.b16 %v2072
        %v2144 = vunpack.c.l.b16 %v2073
        %v2145 = vunpack.c.h.b16 %v2073
        %v2146 = vunpack.c.l.b16 %v2074
        %v2147 = vunpack.c.l.b16 %v2075
        %v2148 = vunpack.c.h.b16 %v2075
        %v2149 = vunpack.c.l.b16 %v2076
        %v2150 = vunpack.c.l.b16 %v2077
        %v2151 = vunpack.c.h.b16 %v2077
        %v2152 = vunpack.c.l.b16 %v2078
        %v2153 = vunpack.c.l.b16 %v2079
        %v2154 = vunpack.c.h.b16 %v2079
        %v2155 = vunpack.c.l.b16 %v2080
        %v2156 = vunpack.c.l.b16 %v2081
        %v2157 = vunpack.c.h.b16 %v2081
        %v2158 = vunpack.c.l.b16 %v2082
        %v2159 = vunpack.c.l.b16 %v2083
        %v2160 = vunpack.c.h.b16 %v2083
        %v2161 = vunpack.c.l.b16 %v2084
        %v2162 = vunpack.c.l.b16 %v2085
        %v2163 = vunpack.c.h.b16 %v2085
        %v2164 = vunpack.c.l.b16 %v2086
        %v2165 = vunpack.c.l.b16 %v2087
        %v2166 = vunpack.c.h.b16 %v2087
        %v2167 = vunpack.c.l.b16 %v2088
        %v2168 = vunpack.c.l.b16 %v2089
        %v2169 = vunpack.c.h.b16 %v2089
        %v2170 = vunpack.c.l.b16 %v2090
        %v2171 = vpack.c.b16 %v2126, %v2123
        %v2172 = vpack.c.b16 %v2127, %v2124
        %v2173 = vpack.c.b16 %v2128, %v2125
        %v2174 = vpack.c.b16 %v2132, %v2129
        %v2175 = vpack.c.b16 %v2133, %v2130
        %v2176 = vpack.c.b16 %v2134, %v2131
        %v2177 = vpack.c.b16 %v2138, %v2135
        %v2178 = vpack.c.b16 %v2139, %v2136
        %v2179 = vpack.c.b16 %v2140, %v2137
        %v2180 = vpack.c.b16 %v2144, %v2141
        %v2181 = vpack.c.b16 %v2145, %v2142
        %v2182 = vpack.c.b16 %v2146, %v2143
        %v2183 = vpack.c.b16 %v2150, %v2147
        %v2184 = vpack.c.b16 %v2151, %v2148
        %v2185 = vpack.c.b16 %v2152, %v2149
        %v2186 = vpack.c.b16 %v2156, %v2153
        %v2187 = vpack.c.b16 %v2157, %v2154
        %v2188 = vpack.c.b16 %v2158, %v2155
        %v2189 = vpack.c.b16 %v2162, %v2159
        %v2190 = vpack.c.b16 %v2163, %v2160
        %v2191 = vpack.c.b16 %v2164, %v2161
        %v2192 = vpack.c.b16 %v2168, %v2165
        %v2193 = vpack.c.b16 %v2169, %v2166
        %v2194 = vpack.c.b16 %v2170, %v2167
        %2219 = vmatprep.subr.bf16.mxu0 %v2193
        %2220 = vmatpush1.bf16.msra.mxu0 %v2192
        %2221 = vmatprep.subr.bf16.mxu0 %v2190
        %2222 = vmatpush1.bf16.msra.mxu0 %v2189
        %2223 = vmatprep.subr.bf16.mxu0 %v2187
        %2224 = vmatpush1.bf16.msra.mxu0 %v2186
        %2225 = vmatprep.subr.bf16.mxu0 %v2184
        %2226 = vmatpush1.bf16.msra.mxu0 %v2183
        %2227 = vmatprep.subr.bf16.mxu0 %v2181
        %2228 = vmatpush1.bf16.msra.mxu0 %v2180
        %2229 = vmatprep.subr.bf16.mxu0 %v2178
        %2230 = vmatpush1.bf16.msra.mxu0 %v2177
        %2231 = vmatprep.subr.bf16.mxu0 %v2175
        %2232 = vmatpush1.bf16.msra.mxu0 %v2174
        %2233 = vmatprep.subr.bf16.mxu0 %v2172
        %2234 = vmatpush1.bf16.msra.mxu0 %v2171
        %2235 = vmatprep.subr.bf16.mxu0 0
        %2236 = vmatpush2.bf16.msra.mxu0 0
        %2237 = vmatprep.subr.bf16.mxu0 0
        %2238 = vmatpush2.bf16.msra.mxu0 0
        %2239 = vmatprep.subr.bf16.mxu0 0
        %2240 = vmatpush2.bf16.msra.mxu0 0
        %2241 = vmatprep.subr.bf16.mxu0 0
        %2242 = vmatpush2.bf16.msra.mxu0 0
        %2243 = vmatprep.subr.bf16.mxu0 0
        %2244 = vmatpush2.bf16.msra.mxu0 0
        %2245 = vmatprep.subr.bf16.mxu0 0
        %2246 = vmatpush2.bf16.msra.mxu0 0
        %2247 = vmatprep.subr.bf16.mxu0 0
        %2248 = vmatpush2.bf16.msra.mxu0 0
        %2249 = vmatprep.subr.bf16.mxu0 0
        %2250 = vmatpush2.bf16.msra.mxu0 0
        %2251 = vmatprep.mubr.bf16.mxu0 0
        %2252 = vmatmul.mubr.bf16.gmra.mxu0 %v2057
        %v2253 = vpop.f32.mrf.mxu0
        %v2254 = vadd.f32 0.0, %v2253
        %v2255 = vpop.f32.mrf.mxu0
        %v2256 = vadd.f32 0.0, %v2255
        %v2257 = vpop.f32.mrf.mxu0
        %v2258 = vpop.f32.mrf.mxu0
        %2259 = vdwg.mxu0
        %2260 = vmatprep.subr.bf16.mxu0 0
        %2261 = vmatpush1.bf16.msra.mxu0 %v2194
        %2262 = vmatprep.subr.bf16.mxu0 0
        %2263 = vmatpush1.bf16.msra.mxu0 %v2191
        %2264 = vmatprep.subr.bf16.mxu0 0
        %2265 = vmatpush1.bf16.msra.mxu0 %v2188
        %2266 = vmatprep.subr.bf16.mxu0 0
        %2267 = vmatpush1.bf16.msra.mxu0 %v2185
        %2268 = vmatprep.subr.bf16.mxu0 0
        %2269 = vmatpush1.bf16.msra.mxu0 %v2182
        %2270 = vmatprep.subr.bf16.mxu0 0
        %2271 = vmatpush1.bf16.msra.mxu0 %v2179
        %2272 = vmatprep.subr.bf16.mxu0 0
        %2273 = vmatpush1.bf16.msra.mxu0 %v2176
        %2274 = vmatprep.subr.bf16.mxu0 0
        %2275 = vmatpush1.bf16.msra.mxu0 %v2173
        %2276 = vmatprep.subr.bf16.mxu0 0
        %2277 = vmatpush2.bf16.msra.mxu0 0
        %2278 = vmatprep.subr.bf16.mxu0 0
        %2279 = vmatpush2.bf16.msra.mxu0 0
        %2280 = vmatprep.subr.bf16.mxu0 0
        %2281 = vmatpush2.bf16.msra.mxu0 0
        %2282 = vmatprep.subr.bf16.mxu0 0
        %2283 = vmatpush2.bf16.msra.mxu0 0
        %2284 = vmatprep.subr.bf16.mxu0 0
        %2285 = vmatpush2.bf16.msra.mxu0 0
        %2286 = vmatprep.subr.bf16.mxu0 0
        %2287 = vmatpush2.bf16.msra.mxu0 0
        %2288 = vmatprep.subr.bf16.mxu0 0
        %2289 = vmatpush2.bf16.msra.mxu0 0
        %2290 = vmatprep.subr.bf16.mxu0 0
        %2291 = vmatpush2.bf16.msra.mxu0 0
        %2292 = vmatprep.mubr.bf16.mxu0 0
        %2293 = vmatmul.mubr.bf16.gmra.mxu0 %v2057
        %v2294 = vpop.f32.mrf.mxu0
        %v2295 = vadd.f32 0.0, %v2294
        %v2296 = vpop.f32.mrf.mxu0
        %v2297 = vpop.f32.mrf.mxu0
        %v2298 = vpop.f32.mrf.mxu0
        %2299 = vdwg.mxu0
        %s2300 = scalar_lea.vmem [#allocation7], 16
        %v2301 = vld [vmem:[%s2300] sm:$0x1]
        %v2302 = vlaneseq
        %v2303 = vshrl.u32 %v2302, 7
        %v2304 = vsub.s32 0, %v2303
        %v2305 = vrot.slane %v2301, %v2304
        %v2306 = vadd.f32 %v2254, %v2305
        %v2307 = vld [vmem:[%s2300 + $0x1] sm:$0x1]
        %v2308 = vlaneseq
        %v2309 = vshrl.u32 %v2308, 7
        %v2310 = vsub.s32 0, %v2309
        %v2311 = vrot.slane %v2307, %v2310
        %v2312 = vadd.f32 %v2256, %v2311
        %v2313 = vld [vmem:[%s2300 + $0x2] sm:$0x1]
        %v2314 = vlaneseq
        %v2315 = vshrl.u32 %v2314, 7
        %v2316 = vsub.s32 0, %v2315
        %v2317 = vrot.slane %v2313, %v2316
        %v2318 = vadd.f32 %v2295, %v2317
        %2320 = vrot.lane.b32.xlu0 %v2306, 64
        %v2321 = vpop.permute.xlu0 %2320
        %v2323 = vcombine.high %v2306, 0.0
        %v2325 = vunpack.c.l.s4 1983009808
        %v2326 = vunpack.c.0.s8 %v2325
        %v2327 = vlaneseq
        %v2328 = vshrl.u32 %v2327, 7
        %v2329 = vsub.s32 %v2326, %v2328
        %v2330 = vrot.slane %v2306, %v2329
        %v2332 = vunpack.c.l.s4 1983009808
        %v2333 = vunpack.c.0.s8 %v2332
        %v2334 = vlaneseq
        %v2335 = vshrl.u32 %v2334, 7
        %v2336 = vsub.s32 %v2333, %v2335
        %v2337 = vrot.slane %v2323, %v2336
        %v2338 = vcombine.high %v2321, 0.0
        %v2340 = vunpack.c.l.s4 1983009808
        %v2341 = vunpack.c.0.s8 %v2340
        %v2342 = vlaneseq
        %v2343 = vshrl.u32 %v2342, 7
        %v2344 = vsub.s32 %v2341, %v2343
        %v2345 = vrot.slane %v2321, %v2344
        %v2347 = vunpack.c.l.s4 1983009808
        %v2348 = vunpack.c.0.s8 %v2347
        %v2349 = vlaneseq
        %v2350 = vshrl.u32 %v2349, 7
        %v2351 = vsub.s32 %v2348, %v2350
        %v2352 = vrot.slane %v2338, %v2351
        %v2353 = vcombine.low %v2330, %v2345
        %v2354 = vcombine.high %v2330, %v2345
        %v2356 = vunpack.c.l.s4 1934713408
        %v2357 = vunpack.c.0.s8 %v2356
        %v2358 = vlaneseq
        %v2359 = vshrl.u32 %v2358, 7
        %v2360 = vsub.s32 %v2357, %v2359
        %v2361 = vrot.slane %v2353, %v2360
        %v2363 = vunpack.c.l.s4 1934713408
        %v2364 = vunpack.c.0.s8 %v2363
        %v2365 = vlaneseq
        %v2366 = vshrl.u32 %v2365, 7
        %v2367 = vsub.s32 %v2364, %v2366
        %v2368 = vrot.slane %v2354, %v2367
        %v2369 = vcombine.low %v2337, %v2352
        %v2370 = vcombine.high %v2337, %v2352
        %v2372 = vunpack.c.l.s4 1934713408
        %v2373 = vunpack.c.0.s8 %v2372
        %v2374 = vlaneseq
        %v2375 = vshrl.u32 %v2374, 7
        %v2376 = vsub.s32 %v2373, %v2375
        %v2377 = vrot.slane %v2369, %v2376
        %v2379 = vunpack.c.l.s4 1934713408
        %v2380 = vunpack.c.0.s8 %v2379
        %v2381 = vlaneseq
        %v2382 = vshrl.u32 %v2381, 7
        %v2383 = vsub.s32 %v2380, %v2382
        %v2384 = vrot.slane %v2370, %v2383
        %v2385 = vcombine.high %v2361, 0.0
        %v2386 = vcombine.high %v2368, 0.0
        %v2387 = vcombine.high %v2377, 0.0
        %v2388 = vcombine.high %v2384, 0.0
        %v2389 = vcombine.low %v2361, %v2368
        %v2391 = vunpack.c.l.s4 1983009808
        %v2392 = vunpack.c.0.s8 %v2391
        %v2393 = vlaneseq
        %v2394 = vshrl.u32 %v2393, 7
        %v2395 = vsub.s32 %v2392, %v2394
        %v2396 = vrot.slane %v2389, %v2395
        %v2397 = vcombine.low %v2385, %v2386
        %v2399 = vunpack.c.l.s4 1983009808
        %v2400 = vunpack.c.0.s8 %v2399
        %v2401 = vlaneseq
        %v2402 = vshrl.u32 %v2401, 7
        %v2403 = vsub.s32 %v2400, %v2402
        %v2404 = vrot.slane %v2397, %v2403
        %v2405 = vcombine.low %v2377, %v2384
        %v2407 = vunpack.c.l.s4 1983009808
        %v2408 = vunpack.c.0.s8 %v2407
        %v2409 = vlaneseq
        %v2410 = vshrl.u32 %v2409, 7
        %v2411 = vsub.s32 %v2408, %v2410
        %v2412 = vrot.slane %v2405, %v2411
        %v2413 = vcombine.low %v2387, %v2388
        %v2415 = vunpack.c.l.s4 1983009808
        %v2416 = vunpack.c.0.s8 %v2415
        %v2417 = vlaneseq
        %v2418 = vshrl.u32 %v2417, 7
        %v2419 = vsub.s32 %v2416, %v2418
        %v2420 = vrot.slane %v2413, %v2419
        %v2421 = vcombine.low %v2396, %v2404
        %v2423 = vunpack.c.l.s4 1934713408
        %v2424 = vunpack.c.0.s8 %v2423
        %v2425 = vlaneseq
        %v2426 = vshrl.u32 %v2425, 7
        %v2427 = vsub.s32 %v2424, %v2426
        %v2428 = vrot.slane %v2421, %v2427
        %v2429 = vcombine.low %v2412, %v2420
        %v2431 = vunpack.c.l.s4 1934713408
        %v2432 = vunpack.c.0.s8 %v2431
        %v2433 = vlaneseq
        %v2434 = vshrl.u32 %v2433, 7
        %v2435 = vsub.s32 %v2432, %v2434
        %v2436 = vrot.slane %v2429, %v2435
        %v2437 = vcombine.low %v2428, %v2436
        %v2438 = vcombine.high %v2428, %v2436
        %2440 = vrot.lane.b32.xlu0 %v2312, 64
        %v2441 = vpop.permute.xlu0 %2440
        %v2443 = vcombine.high %v2312, 0.0
        %v2445 = vunpack.c.l.s4 1983009808
        %v2446 = vunpack.c.0.s8 %v2445
        %v2447 = vlaneseq
        %v2448 = vshrl.u32 %v2447, 7
        %v2449 = vsub.s32 %v2446, %v2448
        %v2450 = vrot.slane %v2312, %v2449
        %v2452 = vunpack.c.l.s4 1983009808
        %v2453 = vunpack.c.0.s8 %v2452
        %v2454 = vlaneseq
        %v2455 = vshrl.u32 %v2454, 7
        %v2456 = vsub.s32 %v2453, %v2455
        %v2457 = vrot.slane %v2443, %v2456
        %v2458 = vcombine.high %v2441, 0.0
        %v2460 = vunpack.c.l.s4 1983009808
        %v2461 = vunpack.c.0.s8 %v2460
        %v2462 = vlaneseq
        %v2463 = vshrl.u32 %v2462, 7
        %v2464 = vsub.s32 %v2461, %v2463
        %v2465 = vrot.slane %v2441, %v2464
        %v2467 = vunpack.c.l.s4 1983009808
        %v2468 = vunpack.c.0.s8 %v2467
        %v2469 = vlaneseq
        %v2470 = vshrl.u32 %v2469, 7
        %v2471 = vsub.s32 %v2468, %v2470
        %v2472 = vrot.slane %v2458, %v2471
        %v2473 = vcombine.low %v2450, %v2465
        %v2474 = vcombine.high %v2450, %v2465
        %v2476 = vunpack.c.l.s4 1934713408
        %v2477 = vunpack.c.0.s8 %v2476
        %v2478 = vlaneseq
        %v2479 = vshrl.u32 %v2478, 7
        %v2480 = vsub.s32 %v2477, %v2479
        %v2481 = vrot.slane %v2473, %v2480
        %v2483 = vunpack.c.l.s4 1934713408
        %v2484 = vunpack.c.0.s8 %v2483
        %v2485 = vlaneseq
        %v2486 = vshrl.u32 %v2485, 7
        %v2487 = vsub.s32 %v2484, %v2486
        %v2488 = vrot.slane %v2474, %v2487
        %v2489 = vcombine.low %v2457, %v2472
        %v2490 = vcombine.high %v2457, %v2472
        %v2492 = vunpack.c.l.s4 1934713408
        %v2493 = vunpack.c.0.s8 %v2492
        %v2494 = vlaneseq
        %v2495 = vshrl.u32 %v2494, 7
        %v2496 = vsub.s32 %v2493, %v2495
        %v2497 = vrot.slane %v2489, %v2496
        %v2499 = vunpack.c.l.s4 1934713408
        %v2500 = vunpack.c.0.s8 %v2499
        %v2501 = vlaneseq
        %v2502 = vshrl.u32 %v2501, 7
        %v2503 = vsub.s32 %v2500, %v2502
        %v2504 = vrot.slane %v2490, %v2503
        %v2505 = vcombine.high %v2481, 0.0
        %v2506 = vcombine.high %v2488, 0.0
        %v2507 = vcombine.high %v2497, 0.0
        %v2508 = vcombine.high %v2504, 0.0
        %v2509 = vcombine.low %v2481, %v2488
        %v2511 = vunpack.c.l.s4 1983009808
        %v2512 = vunpack.c.0.s8 %v2511
        %v2513 = vlaneseq
        %v2514 = vshrl.u32 %v2513, 7
        %v2515 = vsub.s32 %v2512, %v2514
        %v2516 = vrot.slane %v2509, %v2515
        %v2517 = vcombine.low %v2505, %v2506
        %v2519 = vunpack.c.l.s4 1983009808
        %v2520 = vunpack.c.0.s8 %v2519
        %v2521 = vlaneseq
        %v2522 = vshrl.u32 %v2521, 7
        %v2523 = vsub.s32 %v2520, %v2522
        %v2524 = vrot.slane %v2517, %v2523
        %v2525 = vcombine.low %v2497, %v2504
        %v2527 = vunpack.c.l.s4 1983009808
        %v2528 = vunpack.c.0.s8 %v2527
        %v2529 = vlaneseq
        %v2530 = vshrl.u32 %v2529, 7
        %v2531 = vsub.s32 %v2528, %v2530
        %v2532 = vrot.slane %v2525, %v2531
        %v2533 = vcombine.low %v2507, %v2508
        %v2535 = vunpack.c.l.s4 1983009808
        %v2536 = vunpack.c.0.s8 %v2535
        %v2537 = vlaneseq
        %v2538 = vshrl.u32 %v2537, 7
        %v2539 = vsub.s32 %v2536, %v2538
        %v2540 = vrot.slane %v2533, %v2539
        %v2541 = vcombine.low %v2516, %v2524
        %v2543 = vunpack.c.l.s4 1934713408
        %v2544 = vunpack.c.0.s8 %v2543
        %v2545 = vlaneseq
        %v2546 = vshrl.u32 %v2545, 7
        %v2547 = vsub.s32 %v2544, %v2546
        %v2548 = vrot.slane %v2541, %v2547
        %v2549 = vcombine.low %v2532, %v2540
        %v2551 = vunpack.c.l.s4 1934713408
        %v2552 = vunpack.c.0.s8 %v2551
        %v2553 = vlaneseq
        %v2554 = vshrl.u32 %v2553, 7
        %v2555 = vsub.s32 %v2552, %v2554
        %v2556 = vrot.slane %v2549, %v2555
        %v2557 = vcombine.low %v2548, %v2556
        %v2558 = vcombine.high %v2548, %v2556
        %2560 = vrot.lane.b32.xlu0 %v2318, 64
        %v2561 = vpop.permute.xlu0 %2560
        %v2563 = vcombine.high %v2318, 0.0
        %v2565 = vunpack.c.l.s4 1983009808
        %v2566 = vunpack.c.0.s8 %v2565
        %v2567 = vlaneseq
        %v2568 = vshrl.u32 %v2567, 7
        %v2569 = vsub.s32 %v2566, %v2568
        %v2570 = vrot.slane %v2318, %v2569
        %v2572 = vunpack.c.l.s4 1983009808
        %v2573 = vunpack.c.0.s8 %v2572
        %v2574 = vlaneseq
        %v2575 = vshrl.u32 %v2574, 7
        %v2576 = vsub.s32 %v2573, %v2575
        %v2577 = vrot.slane %v2563, %v2576
        %v2578 = vcombine.high %v2561, 0.0
        %v2580 = vunpack.c.l.s4 1983009808
        %v2581 = vunpack.c.0.s8 %v2580
        %v2582 = vlaneseq
        %v2583 = vshrl.u32 %v2582, 7
        %v2584 = vsub.s32 %v2581, %v2583
        %v2585 = vrot.slane %v2561, %v2584
        %v2587 = vunpack.c.l.s4 1983009808
        %v2588 = vunpack.c.0.s8 %v2587
        %v2589 = vlaneseq
        %v2590 = vshrl.u32 %v2589, 7
        %v2591 = vsub.s32 %v2588, %v2590
        %v2592 = vrot.slane %v2578, %v2591
        %v2593 = vcombine.low %v2570, %v2585
        %v2594 = vcombine.high %v2570, %v2585
        %v2596 = vunpack.c.l.s4 1934713408
        %v2597 = vunpack.c.0.s8 %v2596
        %v2598 = vlaneseq
        %v2599 = vshrl.u32 %v2598, 7
        %v2600 = vsub.s32 %v2597, %v2599
        %v2601 = vrot.slane %v2593, %v2600
        %v2603 = vunpack.c.l.s4 1934713408
        %v2604 = vunpack.c.0.s8 %v2603
        %v2605 = vlaneseq
        %v2606 = vshrl.u32 %v2605, 7
        %v2607 = vsub.s32 %v2604, %v2606
        %v2608 = vrot.slane %v2594, %v2607
        %v2609 = vcombine.low %v2577, %v2592
        %v2610 = vcombine.high %v2577, %v2592
        %v2612 = vunpack.c.l.s4 1934713408
        %v2613 = vunpack.c.0.s8 %v2612
        %v2614 = vlaneseq
        %v2615 = vshrl.u32 %v2614, 7
        %v2616 = vsub.s32 %v2613, %v2615
        %v2617 = vrot.slane %v2609, %v2616
        %v2619 = vunpack.c.l.s4 1934713408
        %v2620 = vunpack.c.0.s8 %v2619
        %v2621 = vlaneseq
        %v2622 = vshrl.u32 %v2621, 7
        %v2623 = vsub.s32 %v2620, %v2622
        %v2624 = vrot.slane %v2610, %v2623
        %v2625 = vcombine.high %v2601, 0.0
        %v2626 = vcombine.high %v2608, 0.0
        %v2627 = vcombine.high %v2617, 0.0
        %v2628 = vcombine.high %v2624, 0.0
        %v2629 = vcombine.low %v2601, %v2608
        %v2631 = vunpack.c.l.s4 1983009808
        %v2632 = vunpack.c.0.s8 %v2631
        %v2633 = vlaneseq
        %v2634 = vshrl.u32 %v2633, 7
        %v2635 = vsub.s32 %v2632, %v2634
        %v2636 = vrot.slane %v2629, %v2635
        %v2637 = vcombine.low %v2625, %v2626
        %v2639 = vunpack.c.l.s4 1983009808
        %v2640 = vunpack.c.0.s8 %v2639
        %v2641 = vlaneseq
        %v2642 = vshrl.u32 %v2641, 7
        %v2643 = vsub.s32 %v2640, %v2642
        %v2644 = vrot.slane %v2637, %v2643
        %v2645 = vcombine.low %v2617, %v2624
        %v2647 = vunpack.c.l.s4 1983009808
        %v2648 = vunpack.c.0.s8 %v2647
        %v2649 = vlaneseq
        %v2650 = vshrl.u32 %v2649, 7
        %v2651 = vsub.s32 %v2648, %v2650
        %v2652 = vrot.slane %v2645, %v2651
        %v2653 = vcombine.low %v2627, %v2628
        %v2655 = vunpack.c.l.s4 1983009808
        %v2656 = vunpack.c.0.s8 %v2655
        %v2657 = vlaneseq
        %v2658 = vshrl.u32 %v2657, 7
        %v2659 = vsub.s32 %v2656, %v2658
        %v2660 = vrot.slane %v2653, %v2659
        %v2661 = vcombine.low %v2636, %v2644
        %v2663 = vunpack.c.l.s4 1934713408
        %v2664 = vunpack.c.0.s8 %v2663
        %v2665 = vlaneseq
        %v2666 = vshrl.u32 %v2665, 7
        %v2667 = vsub.s32 %v2664, %v2666
        %v2668 = vrot.slane %v2661, %v2667
        %v2669 = vcombine.low %v2652, %v2660
        %v2671 = vunpack.c.l.s4 1934713408
        %v2672 = vunpack.c.0.s8 %v2671
        %v2673 = vlaneseq
        %v2674 = vshrl.u32 %v2673, 7
        %v2675 = vsub.s32 %v2672, %v2674
        %v2676 = vrot.slane %v2669, %v2675
        %v2677 = vcombine.low %v2668, %v2676
        %v2678 = vcombine.high %v2668, %v2676
        %v2680 = vsel %vm1103, %v2437, 0
        %v2683 = vsel %vm1103, %v2557, 0
        %2685 = vmatprep.subr.mxu0 0.0
        %2686 = vmatpush1.xpose.msra.mxu0 0.0
        %2687 = vmatprep.subr.mxu0 0.0
        %2688 = vmatpush1.xpose.msra.mxu0 0.0
        %2689 = vmatprep.subr.mxu0 0.0
        %2690 = vmatpush1.xpose.msra.mxu0 0.0
        %2691 = vmatprep.subr.mxu0 0.0
        %2692 = vmatpush1.xpose.msra.mxu0 0.0
        %2693 = vmatprep.subr.mxu0 0.0
        %2694 = vmatpush1.xpose.msra.mxu0 0.0
        %2695 = vmatprep.subr.mxu0 0.0
        %2696 = vmatpush1.xpose.msra.mxu0 0.0
        %2697 = vmatprep.subr.mxu0 0.0
        %2698 = vmatpush1.xpose.msra.mxu0 0.0
        %2699 = vmatprep.subr.mxu0 0.0
        %2700 = vmatpush1.xpose.msra.mxu0 0.0
        %2701 = vmatprep.subr.mxu0 0.0
        %2702 = vmatpush1.xpose.msra.mxu0 0.0
        %2703 = vmatprep.subr.mxu0 0.0
        %2704 = vmatpush1.xpose.msra.mxu0 0.0
        %2705 = vmatprep.subr.mxu0 0.0
        %2706 = vmatpush1.xpose.msra.mxu0 0.0
        %2707 = vmatprep.subr.mxu0 0.0
        %2708 = vmatpush1.xpose.msra.mxu0 0.0
        %2709 = vmatprep.subr.mxu0 0.0
        %2710 = vmatpush1.xpose.msra.mxu0 0.0
        %2711 = vmatprep.subr.mxu0 0.0
        %2712 = vmatpush1.xpose.msra.mxu0 0.0
        %2713 = vmatprep.subr.mxu0 0.0
        %2714 = vmatpush1.xpose.msra.mxu0 0.0
        %2715 = vmatprep.subr.mxu0 0.0
        %2716 = vmatpush1.xpose.msra.mxu0 %v2683
        %2717 = vmatprep.subr.mxu0 0.0
        %2718 = vmatpush2.xpose.msra.mxu0 0.0
        %2719 = vmatprep.subr.mxu0 0.0
        %2720 = vmatpush2.xpose.msra.mxu0 0.0
        %2721 = vmatprep.subr.mxu0 0.0
        %2722 = vmatpush2.xpose.msra.mxu0 0.0
        %2723 = vmatprep.subr.mxu0 0.0
        %2724 = vmatpush2.xpose.msra.mxu0 0.0
        %2725 = vmatprep.subr.mxu0 0.0
        %2726 = vmatpush2.xpose.msra.mxu0 0.0
        %2727 = vmatprep.subr.mxu0 0.0
        %2728 = vmatpush2.xpose.msra.mxu0 0.0
        %2729 = vmatprep.subr.mxu0 0.0
        %2730 = vmatpush2.xpose.msra.mxu0 0.0
        %2731 = vmatprep.subr.mxu0 0.0
        %2732 = vmatpush2.xpose.msra.mxu0 0.0
        %2733 = vmatprep.subr.mxu0 0.0
        %2734 = vmatpush2.xpose.msra.mxu0 0.0
        %2735 = vmatprep.subr.mxu0 0.0
        %2736 = vmatpush2.xpose.msra.mxu0 0.0
        %2737 = vmatprep.subr.mxu0 0.0
        %2738 = vmatpush2.xpose.msra.mxu0 0.0
        %2739 = vmatprep.subr.mxu0 0.0
        %2740 = vmatpush2.xpose.msra.mxu0 0.0
        %2741 = vmatprep.subr.mxu0 0.0
        %2742 = vmatpush2.xpose.msra.mxu0 0.0
        %2743 = vmatprep.subr.mxu0 0.0
        %2744 = vmatpush2.xpose.msra.mxu0 0.0
        %2745 = vmatprep.subr.mxu0 0.0
        %2746 = vmatpush2.xpose.msra.mxu0 0.0
        %2747 = vmatprep.subr.mxu0 0.0
        %2748 = vmatpush2.xpose.msra.mxu0 0.0
        %2749 = vmatprep.mubr.f32.mxu0 0.0
        %2750 = vmatmul.mubr.f32.gmra.mxu0 %v2680
        %v2751 = vpop.f32.mrf.mxu0
        %v2752 = vadd.f32 0.0, %v2751
        %v2753 = vpop.f32.mrf.mxu0
        %2754 = vdwg.mxu0
        %v2756 = vsel %vm1103, %v2438, 0
        %v2759 = vsel %vm1103, %v2558, 0
        %2761 = vmatprep.subr.mxu0 0.0
        %2762 = vmatpush1.xpose.msra.mxu0 0.0
        %2763 = vmatprep.subr.mxu0 0.0
        %2764 = vmatpush1.xpose.msra.mxu0 0.0
        %2765 = vmatprep.subr.mxu0 0.0
        %2766 = vmatpush1.xpose.msra.mxu0 0.0
        %2767 = vmatprep.subr.mxu0 0.0
        %2768 = vmatpush1.xpose.msra.mxu0 0.0
        %2769 = vmatprep.subr.mxu0 0.0
        %2770 = vmatpush1.xpose.msra.mxu0 0.0
        %2771 = vmatprep.subr.mxu0 0.0
        %2772 = vmatpush1.xpose.msra.mxu0 0.0
        %2773 = vmatprep.subr.mxu0 0.0
        %2774 = vmatpush1.xpose.msra.mxu0 0.0
        %2775 = vmatprep.subr.mxu0 0.0
        %2776 = vmatpush1.xpose.msra.mxu0 0.0
        %2777 = vmatprep.subr.mxu0 0.0
        %2778 = vmatpush1.xpose.msra.mxu0 0.0
        %2779 = vmatprep.subr.mxu0 0.0
        %2780 = vmatpush1.xpose.msra.mxu0 0.0
        %2781 = vmatprep.subr.mxu0 0.0
        %2782 = vmatpush1.xpose.msra.mxu0 0.0
        %2783 = vmatprep.subr.mxu0 0.0
        %2784 = vmatpush1.xpose.msra.mxu0 0.0
        %2785 = vmatprep.subr.mxu0 0.0
        %2786 = vmatpush1.xpose.msra.mxu0 0.0
        %2787 = vmatprep.subr.mxu0 0.0
        %2788 = vmatpush1.xpose.msra.mxu0 0.0
        %2789 = vmatprep.subr.mxu0 0.0
        %2790 = vmatpush1.xpose.msra.mxu0 0.0
        %2791 = vmatprep.subr.mxu0 0.0
        %2792 = vmatpush1.xpose.msra.mxu0 %v2759
        %2793 = vmatprep.subr.mxu0 0.0
        %2794 = vmatpush2.xpose.msra.mxu0 0.0
        %2795 = vmatprep.subr.mxu0 0.0
        %2796 = vmatpush2.xpose.msra.mxu0 0.0
        %2797 = vmatprep.subr.mxu0 0.0
        %2798 = vmatpush2.xpose.msra.mxu0 0.0
        %2799 = vmatprep.subr.mxu0 0.0
        %2800 = vmatpush2.xpose.msra.mxu0 0.0
        %2801 = vmatprep.subr.mxu0 0.0
        %2802 = vmatpush2.xpose.msra.mxu0 0.0
        %2803 = vmatprep.subr.mxu0 0.0
        %2804 = vmatpush2.xpose.msra.mxu0 0.0
        %2805 = vmatprep.subr.mxu0 0.0
        %2806 = vmatpush2.xpose.msra.mxu0 0.0
        %2807 = vmatprep.subr.mxu0 0.0
        %2808 = vmatpush2.xpose.msra.mxu0 0.0
        %2809 = vmatprep.subr.mxu0 0.0
        %2810 = vmatpush2.xpose.msra.mxu0 0.0
        %2811 = vmatprep.subr.mxu0 0.0
        %2812 = vmatpush2.xpose.msra.mxu0 0.0
        %2813 = vmatprep.subr.mxu0 0.0
        %2814 = vmatpush2.xpose.msra.mxu0 0.0
        %2815 = vmatprep.subr.mxu0 0.0
        %2816 = vmatpush2.xpose.msra.mxu0 0.0
        %2817 = vmatprep.subr.mxu0 0.0
        %2818 = vmatpush2.xpose.msra.mxu0 0.0
        %2819 = vmatprep.subr.mxu0 0.0
        %2820 = vmatpush2.xpose.msra.mxu0 0.0
        %2821 = vmatprep.subr.mxu0 0.0
        %2822 = vmatpush2.xpose.msra.mxu0 0.0
        %2823 = vmatprep.subr.mxu0 0.0
        %2824 = vmatpush2.xpose.msra.mxu0 0.0
        %2825 = vmatprep.mubr.f32.mxu0 0.0
        %2826 = vmatmul.mubr.f32.gmra.mxu0 %v2756
        %v2827 = vpop.f32.mrf.mxu0
        %v2828 = vadd.f32 0.0, %v2827
        %v2829 = vpop.f32.mrf.mxu0
        %2830 = vdwg.mxu0
        %v2831 = vmul.f32 %v2752, 0.125
        %v2832 = vmul.f32 %v2828, 0.125
        %v2833 = vadd.f32 %v2831, %v1262
        %v2834 = vadd.f32 %v2832, %v1262
        %v2835 = vsel %vm1266, %v2833, -inf
        %2836 = vmax.xlane.f32.xlu0 %v2835
        %v2837 = vpop.xlane.xlu0 %2836
        %v2838 = vsel %vm1266, %v2834, -inf
        %2839 = vmax.xlane.f32.xlu0 %v2838
        %v2840 = vpop.xlane.xlu0 %2839
        %v2841 = vsub.f32 %v2833, %v2837
        %v2842 = vsub.f32 %v2834, %v2840
        %v2843 = vmul.f32 %v2841, 1.442695
        %v2844 = vpow.pop %v2843
        %v2845 = vmul.f32 %v2842, 1.442695
        %v2846 = vpow.pop %v2845
        %v2847 = vsel %vm1266, %v2844, 0.0
        %2848 = vadd.xlane.f32.xlu0 %v2847
        %v2849 = vpop.xlane.xlu0 %2848
        %v2850 = vsel %vm1266, %v2846, 0.0
        %2851 = vadd.xlane.f32.xlu0 %v2850
        %v2852 = vpop.xlane.xlu0 %2851
        %v2853 = vrcp.pop %v2849
        %v2854 = vmul.f32 %v2844, %v2853
        %v2855 = vrcp.pop %v2852
        %v2856 = vmul.f32 %v2846, %v2855
        %v2858 = vsel %vm1266, %v2854, 0
        %2860 = vmatprep.subr.mxu0 0.0
        %2861 = vmatpush1.msra.mxu0 0.0
        %2862 = vmatprep.subr.mxu0 0.0
        %2863 = vmatpush1.msra.mxu0 0.0
        %2864 = vmatprep.subr.mxu0 0.0
        %2865 = vmatpush1.msra.mxu0 0.0
        %2866 = vmatprep.subr.mxu0 0.0
        %2867 = vmatpush1.msra.mxu0 0.0
        %2868 = vmatprep.subr.mxu0 0.0
        %2869 = vmatpush1.msra.mxu0 0.0
        %2870 = vmatprep.subr.mxu0 0.0
        %2871 = vmatpush1.msra.mxu0 0.0
        %2872 = vmatprep.subr.mxu0 0.0
        %2873 = vmatpush1.msra.mxu0 0.0
        %2874 = vmatprep.subr.mxu0 0.0
        %2875 = vmatpush1.msra.mxu0 0.0
        %2876 = vmatprep.subr.mxu0 0.0
        %2877 = vmatpush1.msra.mxu0 0.0
        %2878 = vmatprep.subr.mxu0 0.0
        %2879 = vmatpush1.msra.mxu0 0.0
        %2880 = vmatprep.subr.mxu0 0.0
        %2881 = vmatpush1.msra.mxu0 0.0
        %2882 = vmatprep.subr.mxu0 0.0
        %2883 = vmatpush1.msra.mxu0 0.0
        %2884 = vmatprep.subr.mxu0 0.0
        %2885 = vmatpush1.msra.mxu0 0.0
        %2886 = vmatprep.subr.mxu0 0.0
        %2887 = vmatpush1.msra.mxu0 0.0
        %2888 = vmatprep.subr.mxu0 0.0
        %2889 = vmatpush1.msra.mxu0 0.0
        %2890 = vmatprep.subr.mxu0 0.0
        %2891 = vmatpush1.msra.mxu0 %v2677
        %2892 = vmatprep.subr.mxu0 0.0
        %2893 = vmatpush2.msra.mxu0 0.0
        %2894 = vmatprep.subr.mxu0 0.0
        %2895 = vmatpush2.msra.mxu0 0.0
        %2896 = vmatprep.subr.mxu0 0.0
        %2897 = vmatpush2.msra.mxu0 0.0
        %2898 = vmatprep.subr.mxu0 0.0
        %2899 = vmatpush2.msra.mxu0 0.0
        %2900 = vmatprep.subr.mxu0 0.0
        %2901 = vmatpush2.msra.mxu0 0.0
        %2902 = vmatprep.subr.mxu0 0.0
        %2903 = vmatpush2.msra.mxu0 0.0
        %2904 = vmatprep.subr.mxu0 0.0
        %2905 = vmatpush2.msra.mxu0 0.0
        %2906 = vmatprep.subr.mxu0 0.0
        %2907 = vmatpush2.msra.mxu0 0.0
        %2908 = vmatprep.subr.mxu0 0.0
        %2909 = vmatpush2.msra.mxu0 0.0
        %2910 = vmatprep.subr.mxu0 0.0
        %2911 = vmatpush2.msra.mxu0 0.0
        %2912 = vmatprep.subr.mxu0 0.0
        %2913 = vmatpush2.msra.mxu0 0.0
        %2914 = vmatprep.subr.mxu0 0.0
        %2915 = vmatpush2.msra.mxu0 0.0
        %2916 = vmatprep.subr.mxu0 0.0
        %2917 = vmatpush2.msra.mxu0 0.0
        %2918 = vmatprep.subr.mxu0 0.0
        %2919 = vmatpush2.msra.mxu0 0.0
        %2920 = vmatprep.subr.mxu0 0.0
        %2921 = vmatpush2.msra.mxu0 0.0
        %2922 = vmatprep.subr.mxu0 0.0
        %2923 = vmatpush2.msra.mxu0 0.0
        %2924 = vmatprep.mubr.f32.mxu0 0.0
        %2925 = vmatmul.mubr.f32.gmra.mxu0 %v2858
        %v2926 = vpop.f32.mrf.mxu0
        %v2927 = vadd.f32 0.0, %v2926
        %v2928 = vpop.f32.mrf.mxu0
        %2929 = vdwg.mxu0
        %v2931 = vsel %vm1266, %v2856, 0
        %2933 = vmatprep.subr.mxu0 0.0
        %2934 = vmatpush1.msra.mxu0 0.0
        %2935 = vmatprep.subr.mxu0 0.0
        %2936 = vmatpush1.msra.mxu0 0.0
        %2937 = vmatprep.subr.mxu0 0.0
        %2938 = vmatpush1.msra.mxu0 0.0
        %2939 = vmatprep.subr.mxu0 0.0
        %2940 = vmatpush1.msra.mxu0 0.0
        %2941 = vmatprep.subr.mxu0 0.0
        %2942 = vmatpush1.msra.mxu0 0.0
        %2943 = vmatprep.subr.mxu0 0.0
        %2944 = vmatpush1.msra.mxu0 0.0
        %2945 = vmatprep.subr.mxu0 0.0
        %2946 = vmatpush1.msra.mxu0 0.0
        %2947 = vmatprep.subr.mxu0 0.0
        %2948 = vmatpush1.msra.mxu0 0.0
        %2949 = vmatprep.subr.mxu0 0.0
        %2950 = vmatpush1.msra.mxu0 0.0
        %2951 = vmatprep.subr.mxu0 0.0
        %2952 = vmatpush1.msra.mxu0 0.0
        %2953 = vmatprep.subr.mxu0 0.0
        %2954 = vmatpush1.msra.mxu0 0.0
        %2955 = vmatprep.subr.mxu0 0.0
        %2956 = vmatpush1.msra.mxu0 0.0
        %2957 = vmatprep.subr.mxu0 0.0
        %2958 = vmatpush1.msra.mxu0 0.0
        %2959 = vmatprep.subr.mxu0 0.0
        %2960 = vmatpush1.msra.mxu0 0.0
        %2961 = vmatprep.subr.mxu0 0.0
        %2962 = vmatpush1.msra.mxu0 0.0
        %2963 = vmatprep.subr.mxu0 0.0
        %2964 = vmatpush1.msra.mxu0 %v2678
        %2965 = vmatprep.subr.mxu0 0.0
        %2966 = vmatpush2.msra.mxu0 0.0
        %2967 = vmatprep.subr.mxu0 0.0
        %2968 = vmatpush2.msra.mxu0 0.0
        %2969 = vmatprep.subr.mxu0 0.0
        %2970 = vmatpush2.msra.mxu0 0.0
        %2971 = vmatprep.subr.mxu0 0.0
        %2972 = vmatpush2.msra.mxu0 0.0
        %2973 = vmatprep.subr.mxu0 0.0
        %2974 = vmatpush2.msra.mxu0 0.0
        %2975 = vmatprep.subr.mxu0 0.0
        %2976 = vmatpush2.msra.mxu0 0.0
        %2977 = vmatprep.subr.mxu0 0.0
        %2978 = vmatpush2.msra.mxu0 0.0
        %2979 = vmatprep.subr.mxu0 0.0
        %2980 = vmatpush2.msra.mxu0 0.0
        %2981 = vmatprep.subr.mxu0 0.0
        %2982 = vmatpush2.msra.mxu0 0.0
        %2983 = vmatprep.subr.mxu0 0.0
        %2984 = vmatpush2.msra.mxu0 0.0
        %2985 = vmatprep.subr.mxu0 0.0
        %2986 = vmatpush2.msra.mxu0 0.0
        %2987 = vmatprep.subr.mxu0 0.0
        %2988 = vmatpush2.msra.mxu0 0.0
        %2989 = vmatprep.subr.mxu0 0.0
        %2990 = vmatpush2.msra.mxu0 0.0
        %2991 = vmatprep.subr.mxu0 0.0
        %2992 = vmatpush2.msra.mxu0 0.0
        %2993 = vmatprep.subr.mxu0 0.0
        %2994 = vmatpush2.msra.mxu0 0.0
        %2995 = vmatprep.subr.mxu0 0.0
        %2996 = vmatpush2.msra.mxu0 0.0
        %2997 = vmatprep.mubr.f32.mxu0 0.0
        %2998 = vmatmul.mubr.f32.gmra.mxu0 %v2931
        %v2999 = vpop.f32.mrf.mxu0
        %v3000 = vadd.f32 0.0, %v2999
        %v3001 = vpop.f32.mrf.mxu0
        %3002 = vdwg.mxu0
        %v3003 = vcombine.high %v2927, 0.0
        %v3005 = vunpack.c.l.s4 1983009808
        %v3006 = vunpack.c.0.s8 %v3005
        %v3007 = vlaneseq
        %v3008 = vshrl.u32 %v3007, 7
        %v3009 = vsub.s32 %v3006, %v3008
        %v3010 = vrot.slane %v2927, %v3009
        %v3012 = vunpack.c.l.s4 1983009808
        %v3013 = vunpack.c.0.s8 %v3012
        %v3014 = vlaneseq
        %v3015 = vshrl.u32 %v3014, 7
        %v3016 = vsub.s32 %v3013, %v3015
        %v3017 = vrot.slane %v3003, %v3016
        %v3018 = vcombine.high %v3000, 0.0
        %v3020 = vunpack.c.l.s4 1983009808
        %v3021 = vunpack.c.0.s8 %v3020
        %v3022 = vlaneseq
        %v3023 = vshrl.u32 %v3022, 7
        %v3024 = vsub.s32 %v3021, %v3023
        %v3025 = vrot.slane %v3000, %v3024
        %v3027 = vunpack.c.l.s4 1983009808
        %v3028 = vunpack.c.0.s8 %v3027
        %v3029 = vlaneseq
        %v3030 = vshrl.u32 %v3029, 7
        %v3031 = vsub.s32 %v3028, %v3030
        %v3032 = vrot.slane %v3018, %v3031
        %v3033 = vcombine.low %v3010, %v3025
        %v3034 = vcombine.high %v3010, %v3025
        %v3036 = vunpack.c.l.s4 1934713408
        %v3037 = vunpack.c.0.s8 %v3036
        %v3038 = vlaneseq
        %v3039 = vshrl.u32 %v3038, 7
        %v3040 = vsub.s32 %v3037, %v3039
        %v3041 = vrot.slane %v3033, %v3040
        %v3043 = vunpack.c.l.s4 1934713408
        %v3044 = vunpack.c.0.s8 %v3043
        %v3045 = vlaneseq
        %v3046 = vshrl.u32 %v3045, 7
        %v3047 = vsub.s32 %v3044, %v3046
        %v3048 = vrot.slane %v3034, %v3047
        %v3049 = vcombine.low %v3017, %v3032
        %v3050 = vcombine.high %v3017, %v3032
        %v3052 = vunpack.c.l.s4 1934713408
        %v3053 = vunpack.c.0.s8 %v3052
        %v3054 = vlaneseq
        %v3055 = vshrl.u32 %v3054, 7
        %v3056 = vsub.s32 %v3053, %v3055
        %v3057 = vrot.slane %v3049, %v3056
        %v3059 = vunpack.c.l.s4 1934713408
        %v3060 = vunpack.c.0.s8 %v3059
        %v3061 = vlaneseq
        %v3062 = vshrl.u32 %v3061, 7
        %v3063 = vsub.s32 %v3060, %v3062
        %v3064 = vrot.slane %v3050, %v3063
        %v3065 = vcombine.high %v3041, 0.0
        %v3066 = vcombine.high %v3048, 0.0
        %v3067 = vcombine.high %v3057, 0.0
        %v3068 = vcombine.high %v3064, 0.0
        %v3069 = vcombine.low %v3041, %v3048
        %v3071 = vunpack.c.l.s4 1983009808
        %v3072 = vunpack.c.0.s8 %v3071
        %v3073 = vlaneseq
        %v3074 = vshrl.u32 %v3073, 7
        %v3075 = vsub.s32 %v3072, %v3074
        %v3076 = vrot.slane %v3069, %v3075
        %v3077 = vcombine.low %v3065, %v3066
        %v3079 = vunpack.c.l.s4 1983009808
        %v3080 = vunpack.c.0.s8 %v3079
        %v3081 = vlaneseq
        %v3082 = vshrl.u32 %v3081, 7
        %v3083 = vsub.s32 %v3080, %v3082
        %v3084 = vrot.slane %v3077, %v3083
        %v3085 = vcombine.low %v3057, %v3064
        %v3087 = vunpack.c.l.s4 1983009808
        %v3088 = vunpack.c.0.s8 %v3087
        %v3089 = vlaneseq
        %v3090 = vshrl.u32 %v3089, 7
        %v3091 = vsub.s32 %v3088, %v3090
        %v3092 = vrot.slane %v3085, %v3091
        %v3093 = vcombine.low %v3067, %v3068
        %v3095 = vunpack.c.l.s4 1983009808
        %v3096 = vunpack.c.0.s8 %v3095
        %v3097 = vlaneseq
        %v3098 = vshrl.u32 %v3097, 7
        %v3099 = vsub.s32 %v3096, %v3098
        %v3100 = vrot.slane %v3093, %v3099
        %v3101 = vcombine.low %v3076, %v3084
        %v3103 = vunpack.c.l.s4 1934713408
        %v3104 = vunpack.c.0.s8 %v3103
        %v3105 = vlaneseq
        %v3106 = vshrl.u32 %v3105, 7
        %v3107 = vsub.s32 %v3104, %v3106
        %v3108 = vrot.slane %v3101, %v3107
        %v3109 = vcombine.low %v3092, %v3100
        %v3111 = vunpack.c.l.s4 1934713408
        %v3112 = vunpack.c.0.s8 %v3111
        %v3113 = vlaneseq
        %v3114 = vshrl.u32 %v3113, 7
        %v3115 = vsub.s32 %v3112, %v3114
        %v3116 = vrot.slane %v3109, %v3115
        %v3117 = vcombine.low %v3108, %v3116
        %v3118 = vcombine.high %v3108, %v3116
        %3120 = vrot.lane.b32.xlu0 %v3118, 64
        %v3121 = vpop.permute.xlu0 %3120
        %v3123 = vsel %vm1103, %v3117, %v3121
        %v3124 = vpack.c.bf16 %v3123, %v3123
        %s3125 = scalar_lea.vmem %s4, 64
        %v3126 = vld [vmem:[%s3125] sm:$0xf]
        %v3127 = vld [vmem:[%s3125 + $0x4] sm:$0xf]
        %v3128 = vld [vmem:[%s3125 + $0x8] sm:$0xf]
        %v3129 = vld [vmem:[%s3125 + $0xc] sm:$0xf]
        %v3130 = vld [vmem:[%s3125 + $0x10] sm:$0xf]
        %v3131 = vld [vmem:[%s3125 + $0x14] sm:$0xf]
        %v3132 = vld [vmem:[%s3125 + $0x18] sm:$0xf]
        %v3133 = vld [vmem:[%s3125 + $0x1c] sm:$0xf]
        %v3134 = vld [vmem:[%s3125 + $0x20] sm:$0xf]
        %v3135 = vld [vmem:[%s3125 + $0x24] sm:$0xf]
        %v3136 = vld [vmem:[%s3125 + $0x28] sm:$0xf]
        %v3137 = vld [vmem:[%s3125 + $0x2c] sm:$0xf]
        %v3138 = vld [vmem:[%s3125 + $0x30] sm:$0xf]
        %v3139 = vld [vmem:[%s3125 + $0x34] sm:$0xf]
        %v3140 = vld [vmem:[%s3125 + $0x38] sm:$0xf]
        %v3141 = vld [vmem:[%s3125 + $0x3c] sm:$0xf]
        %v3142 = vld [vmem:[%s2300 + $0x3] sm:$0x1]
        %v3143 = vlaneseq
        %v3144 = vshrl.u32 %v3143, 7
        %v3145 = vsub.s32 0, %v3144
        %v3146 = vrot.slane %v3142, %v3145
        %v3163 = vunpack.c.l.b16 %v3126
        %v3164 = vunpack.c.l.b16 %v3127
        %v3165 = vunpack.c.l.b16 %v3128
        %v3166 = vunpack.c.l.b16 %v3129
        %v3167 = vunpack.c.l.b16 %v3130
        %v3168 = vunpack.c.l.b16 %v3131
        %v3169 = vunpack.c.l.b16 %v3132
        %v3170 = vunpack.c.l.b16 %v3133
        %v3171 = vunpack.c.l.b16 %v3134
        %v3172 = vunpack.c.l.b16 %v3135
        %v3173 = vunpack.c.l.b16 %v3136
        %v3174 = vunpack.c.l.b16 %v3137
        %v3175 = vunpack.c.l.b16 %v3138
        %v3176 = vunpack.c.l.b16 %v3139
        %v3177 = vunpack.c.l.b16 %v3140
        %v3178 = vunpack.c.l.b16 %v3141
        %v3179 = vpack.c.b16 %v3164, %v3163
        %v3180 = vpack.c.b16 %v3166, %v3165
        %v3181 = vpack.c.b16 %v3168, %v3167
        %v3182 = vpack.c.b16 %v3170, %v3169
        %v3183 = vpack.c.b16 %v3172, %v3171
        %v3184 = vpack.c.b16 %v3174, %v3173
        %v3185 = vpack.c.b16 %v3176, %v3175
        %v3186 = vpack.c.b16 %v3178, %v3177
        %3195 = vmatprep.subr.bf16.mxu0 0
        %3196 = vmatpush1.bf16.msra.mxu0 %v3186
        %3197 = vmatprep.subr.bf16.mxu0 0
        %3198 = vmatpush1.bf16.msra.mxu0 %v3185
        %3199 = vmatprep.subr.bf16.mxu0 0
        %3200 = vmatpush1.bf16.msra.mxu0 %v3184
        %3201 = vmatprep.subr.bf16.mxu0 0
        %3202 = vmatpush1.bf16.msra.mxu0 %v3183
        %3203 = vmatprep.subr.bf16.mxu0 0
        %3204 = vmatpush1.bf16.msra.mxu0 %v3182
        %3205 = vmatprep.subr.bf16.mxu0 0
        %3206 = vmatpush1.bf16.msra.mxu0 %v3181
        %3207 = vmatprep.subr.bf16.mxu0 0
        %3208 = vmatpush1.bf16.msra.mxu0 %v3180
        %3209 = vmatprep.subr.bf16.mxu0 0
        %3210 = vmatpush1.bf16.msra.mxu0 %v3179
        %3211 = vmatprep.subr.bf16.mxu0 0
        %3212 = vmatpush2.bf16.msra.mxu0 0
        %3213 = vmatprep.subr.bf16.mxu0 0
        %3214 = vmatpush2.bf16.msra.mxu0 0
        %3215 = vmatprep.subr.bf16.mxu0 0
        %3216 = vmatpush2.bf16.msra.mxu0 0
        %3217 = vmatprep.subr.bf16.mxu0 0
        %3218 = vmatpush2.bf16.msra.mxu0 0
        %3219 = vmatprep.subr.bf16.mxu0 0
        %3220 = vmatpush2.bf16.msra.mxu0 0
        %3221 = vmatprep.subr.bf16.mxu0 0
        %3222 = vmatpush2.bf16.msra.mxu0 0
        %3223 = vmatprep.subr.bf16.mxu0 0
        %3224 = vmatpush2.bf16.msra.mxu0 0
        %3225 = vmatprep.subr.bf16.mxu0 0
        %3226 = vmatpush2.bf16.msra.mxu0 0
        %3227 = vmatprep.mubr.bf16.mxu0 0
        %3228 = vmatmul.mubr.bf16.gmra.mxu0 %v3124
        %v3229 = vpop.f32.mrf.mxu0
        %v3230 = vadd.f32 %v3146, %v3229
        %v3231 = vpop.f32.mrf.mxu0
        %v3232 = vpop.f32.mrf.mxu0
        %v3233 = vpop.f32.mrf.mxu0
        %3234 = vdwg.mxu0
        %v3235 = vadd.f32 %v3230, %v2056
        %v3236 = vld [vmem:[%s2300 + $0x4] sm:$0x1]
        %v3237 = vld [vmem:[%s2300 + $0x5] sm:$0x1]
        %3238 = vadd.xlane.f32.xlu0 %v3235
        %v3239 = vpop.xlane.xlu0 %3238
        %v3240 = vmul.f32 %v3239, %v460
        %v3241 = vsub.f32 %v3235, %v3240
        %v3242 = vmul.f32 %v3241, %v3241
        %3243 = vadd.xlane.f32.xlu0 %v3242
        %v3244 = vpop.xlane.xlu0 %3243
        %v3245 = vmul.f32 %v3244, %v460
        %v3246 = vadd.f32 %v3245, 1e-05
        %v3247 = vrsqrt.pop %v3246
        %v3248 = vmul.f32 %v3241, %v3247
        %v3249 = vlaneseq
        %v3250 = vshrl.u32 %v3249, 7
        %v3251 = vsub.s32 0, %v3250
        %v3252 = vrot.slane %v3236, %v3251
        %v3253 = vmul.f32 %v3248, %v3252
        %v3254 = vlaneseq
        %v3255 = vshrl.u32 %v3254, 7
        %v3256 = vsub.s32 0, %v3255
        %v3257 = vrot.slane %v3237, %v3256
        %v3258 = vadd.f32 %v3253, %v3257
        %v3259 = vpack.c.bf16 %v3258, %v3258
        %s3260 = scalar_lea.vmem %s5, 128
        %v3261 = vld [vmem:[%s3260] sm:$0xff]
        %v3262 = vld [vmem:[%s3260 + $0x8] sm:$0xff]
        %v3263 = vld [vmem:[%s3260 + $0x10] sm:$0xff]
        %v3264 = vld [vmem:[%s3260 + $0x18] sm:$0xff]
        %v3265 = vld [vmem:[%s3260 + $0x20] sm:$0xff]
        %v3266 = vld [vmem:[%s3260 + $0x28] sm:$0xff]
        %v3267 = vld [vmem:[%s3260 + $0x30] sm:$0xff]
        %v3268 = vld [vmem:[%s3260 + $0x38] sm:$0xff]
        %v3269 = vld [vmem:[%s3260 + $0x40] sm:$0xff]
        %v3270 = vld [vmem:[%s3260 + $0x48] sm:$0xff]
        %v3271 = vld [vmem:[%s3260 + $0x50] sm:$0xff]
        %v3272 = vld [vmem:[%s3260 + $0x58] sm:$0xff]
        %v3273 = vld [vmem:[%s3260 + $0x60] sm:$0xff]
        %v3274 = vld [vmem:[%s3260 + $0x68] sm:$0xff]
        %v3275 = vld [vmem:[%s3260 + $0x70] sm:$0xff]
        %v3276 = vld [vmem:[%s3260 + $0x78] sm:$0xff]
        %s3277 = scalar_lea.vmem %s8, 1
        %v3278 = vld [vmem:[%s3277] ss:$2 sm:$0x3]
        %v3280 = vlaneseq
        %v3281 = vshrl.u32 %v3280, 7
        %v3282 = vsub.s32 0, %v3281
        %v3283 = vrot.slane %v3278, %v3282
        %v3284 = vlaneseq
        %v3285 = vshrl.u32 %v3284, 7
        %v3286 = vsub.s32 1, %v3285
        %v3287 = vrot.slane %v3278, %v3286
        %v3306 = vunpack.c.l.b16 %v3261
        %v3307 = vunpack.c.h.b16 %v3261
        %v3308 = vunpack.c.l.b16 %v3262
        %v3309 = vunpack.c.h.b16 %v3262
        %v3310 = vunpack.c.l.b16 %v3263
        %v3311 = vunpack.c.h.b16 %v3263
        %v3312 = vunpack.c.l.b16 %v3264
        %v3313 = vunpack.c.h.b16 %v3264
        %v3314 = vunpack.c.l.b16 %v3265
        %v3315 = vunpack.c.h.b16 %v3265
        %v3316 = vunpack.c.l.b16 %v3266
        %v3317 = vunpack.c.h.b16 %v3266
        %v3318 = vunpack.c.l.b16 %v3267
        %v3319 = vunpack.c.h.b16 %v3267
        %v3320 = vunpack.c.l.b16 %v3268
        %v3321 = vunpack.c.h.b16 %v3268
        %v3322 = vunpack.c.l.b16 %v3269
        %v3323 = vunpack.c.h.b16 %v3269
        %v3324 = vunpack.c.l.b16 %v3270
        %v3325 = vunpack.c.h.b16 %v3270
        %v3326 = vunpack.c.l.b16 %v3271
        %v3327 = vunpack.c.h.b16 %v3271
        %v3328 = vunpack.c.l.b16 %v3272
        %v3329 = vunpack.c.h.b16 %v3272
        %v3330 = vunpack.c.l.b16 %v3273
        %v3331 = vunpack.c.h.b16 %v3273
        %v3332 = vunpack.c.l.b16 %v3274
        %v3333 = vunpack.c.h.b16 %v3274
        %v3334 = vunpack.c.l.b16 %v3275
        %v3335 = vunpack.c.h.b16 %v3275
        %v3336 = vunpack.c.l.b16 %v3276
        %v3337 = vunpack.c.h.b16 %v3276
        %v3338 = vpack.c.b16 %v3308, %v3306
        %v3339 = vpack.c.b16 %v3309, %v3307
        %v3340 = vpack.c.b16 %v3312, %v3310
        %v3341 = vpack.c.b16 %v3313, %v3311
        %v3342 = vpack.c.b16 %v3316, %v3314
        %v3343 = vpack.c.b16 %v3317, %v3315
        %v3344 = vpack.c.b16 %v3320, %v3318
        %v3345 = vpack.c.b16 %v3321, %v3319
        %v3346 = vpack.c.b16 %v3324, %v3322
        %v3347 = vpack.c.b16 %v3325, %v3323
        %v3348 = vpack.c.b16 %v3328, %v3326
        %v3349 = vpack.c.b16 %v3329, %v3327
        %v3350 = vpack.c.b16 %v3332, %v3330
        %v3351 = vpack.c.b16 %v3333, %v3331
        %v3352 = vpack.c.b16 %v3336, %v3334
        %v3353 = vpack.c.b16 %v3337, %v3335
        %3370 = vmatprep.subr.bf16.mxu0 %v3353
        %3371 = vmatpush1.bf16.msra.mxu0 %v3352
        %3372 = vmatprep.subr.bf16.mxu0 %v3351
        %3373 = vmatpush1.bf16.msra.mxu0 %v3350
        %3374 = vmatprep.subr.bf16.mxu0 %v3349
        %3375 = vmatpush1.bf16.msra.mxu0 %v3348
        %3376 = vmatprep.subr.bf16.mxu0 %v3347
        %3377 = vmatpush1.bf16.msra.mxu0 %v3346
        %3378 = vmatprep.subr.bf16.mxu0 %v3345
        %3379 = vmatpush1.bf16.msra.mxu0 %v3344
        %3380 = vmatprep.subr.bf16.mxu0 %v3343
        %3381 = vmatpush1.bf16.msra.mxu0 %v3342
        %3382 = vmatprep.subr.bf16.mxu0 %v3341
        %3383 = vmatpush1.bf16.msra.mxu0 %v3340
        %3384 = vmatprep.subr.bf16.mxu0 %v3339
        %3385 = vmatpush1.bf16.msra.mxu0 %v3338
        %3386 = vmatprep.subr.bf16.mxu0 0
        %3387 = vmatpush2.bf16.msra.mxu0 0
        %3388 = vmatprep.subr.bf16.mxu0 0
        %3389 = vmatpush2.bf16.msra.mxu0 0
        %3390 = vmatprep.subr.bf16.mxu0 0
        %3391 = vmatpush2.bf16.msra.mxu0 0
        %3392 = vmatprep.subr.bf16.mxu0 0
        %3393 = vmatpush2.bf16.msra.mxu0 0
        %3394 = vmatprep.subr.bf16.mxu0 0
        %3395 = vmatpush2.bf16.msra.mxu0 0
        %3396 = vmatprep.subr.bf16.mxu0 0
        %3397 = vmatpush2.bf16.msra.mxu0 0
        %3398 = vmatprep.subr.bf16.mxu0 0
        %3399 = vmatpush2.bf16.msra.mxu0 0
        %3400 = vmatprep.subr.bf16.mxu0 0
        %3401 = vmatpush2.bf16.msra.mxu0 0
        %3402 = vmatprep.mubr.bf16.mxu0 0
        %3403 = vmatmul.mubr.bf16.gmra.mxu0 %v3259
        %v3404 = vpop.f32.mrf.mxu0
        %v3405 = vadd.f32 %v3283, %v3404
        %v3406 = vpop.f32.mrf.mxu0
        %v3407 = vadd.f32 %v3287, %v3406
        %v3408 = vpop.f32.mrf.mxu0
        %v3409 = vpop.f32.mrf.mxu0
        %3410 = vdwg.mxu0
        %v3411 = vmul.f32 %v3405, 0.5
        %v3412 = vmul.f32 %v3407, 0.5
        %v3413 = vmul.f32 %v3405, 0.044715
        %v3414 = vmul.f32 %v3407, 0.044715
        %v3415 = vmul.f32 %v3413, %v3405
        %v3416 = vmul.f32 %v3414, %v3407
        %v3417 = vmul.f32 %v3415, %v3405
        %v3418 = vmul.f32 %v3416, %v3407
        %v3419 = vadd.f32 %v3405, %v3417
        %v3420 = vadd.f32 %v3407, %v3418
        %v3421 = vmul.f32 %v3419, 0.7978846
        %v3422 = vmul.f32 %v3420, 0.7978846
        %v3423 = vtanh.pop %v3421
        %v3424 = vtanh.pop %v3422
        %v3425 = vadd.f32 %v3423, 1.0
        %v3426 = vadd.f32 %v3424, 1.0
        %v3427 = vmul.f32 %v3411, %v3425
        %v3428 = vmul.f32 %v3412, %v3426
        %v3429 = vpack.c.bf16 %v3427, %v3427
        %v3430 = vpack.c.bf16 %v3428, %v3428
        %s3431 = scalar_lea.vmem [#allocation5], 128
        %v3432 = vld [vmem:[%s3431] sm:$0xf]
        %v3433 = vld [vmem:[%s3431 + $0x4] sm:$0xf]
        %v3434 = vld [vmem:[%s3431 + $0x8] sm:$0xf]
        %v3435 = vld [vmem:[%s3431 + $0xc] sm:$0xf]
        %v3436 = vld [vmem:[%s3431 + $0x10] sm:$0xf]
        %v3437 = vld [vmem:[%s3431 + $0x14] sm:$0xf]
        %v3438 = vld [vmem:[%s3431 + $0x18] sm:$0xf]
        %v3439 = vld [vmem:[%s3431 + $0x1c] sm:$0xf]
        %v3440 = vld [vmem:[%s3431 + $0x20] sm:$0xf]
        %v3441 = vld [vmem:[%s3431 + $0x24] sm:$0xf]
        %v3442 = vld [vmem:[%s3431 + $0x28] sm:$0xf]
        %v3443 = vld [vmem:[%s3431 + $0x2c] sm:$0xf]
        %v3444 = vld [vmem:[%s3431 + $0x30] sm:$0xf]
        %v3445 = vld [vmem:[%s3431 + $0x34] sm:$0xf]
        %v3446 = vld [vmem:[%s3431 + $0x38] sm:$0xf]
        %v3447 = vld [vmem:[%s3431 + $0x3c] sm:$0xf]
        %v3448 = vld [vmem:[%s3431 + $0x40] sm:$0xf]
        %v3449 = vld [vmem:[%s3431 + $0x44] sm:$0xf]
        %v3450 = vld [vmem:[%s3431 + $0x48] sm:$0xf]
        %v3451 = vld [vmem:[%s3431 + $0x4c] sm:$0xf]
        %v3452 = vld [vmem:[%s3431 + $0x50] sm:$0xf]
        %v3453 = vld [vmem:[%s3431 + $0x54] sm:$0xf]
        %v3454 = vld [vmem:[%s3431 + $0x58] sm:$0xf]
        %v3455 = vld [vmem:[%s3431 + $0x5c] sm:$0xf]
        %v3456 = vld [vmem:[%s3431 + $0x60] sm:$0xf]
        %v3457 = vld [vmem:[%s3431 + $0x64] sm:$0xf]
        %v3458 = vld [vmem:[%s3431 + $0x68] sm:$0xf]
        %v3459 = vld [vmem:[%s3431 + $0x6c] sm:$0xf]
        %v3460 = vld [vmem:[%s3431 + $0x70] sm:$0xf]
        %v3461 = vld [vmem:[%s3431 + $0x74] sm:$0xf]
        %v3462 = vld [vmem:[%s3431 + $0x78] sm:$0xf]
        %v3463 = vld [vmem:[%s3431 + $0x7c] sm:$0xf]
        %v3464 = vld [vmem:[%s2300 + $0x6] sm:$0x1]
        %v3465 = vlaneseq
        %v3466 = vshrl.u32 %v3465, 7
        %v3467 = vsub.s32 0, %v3466
        %v3468 = vrot.slane %v3464, %v3467
        %v3501 = vunpack.c.l.b16 %v3432
        %v3502 = vunpack.c.l.b16 %v3433
        %v3503 = vunpack.c.l.b16 %v3434
        %v3504 = vunpack.c.l.b16 %v3435
        %v3505 = vunpack.c.l.b16 %v3436
        %v3506 = vunpack.c.l.b16 %v3437
        %v3507 = vunpack.c.l.b16 %v3438
        %v3508 = vunpack.c.l.b16 %v3439
        %v3509 = vunpack.c.l.b16 %v3440
        %v3510 = vunpack.c.l.b16 %v3441
        %v3511 = vunpack.c.l.b16 %v3442
        %v3512 = vunpack.c.l.b16 %v3443
        %v3513 = vunpack.c.l.b16 %v3444
        %v3514 = vunpack.c.l.b16 %v3445
        %v3515 = vunpack.c.l.b16 %v3446
        %v3516 = vunpack.c.l.b16 %v3447
        %v3517 = vunpack.c.l.b16 %v3448
        %v3518 = vunpack.c.l.b16 %v3449
        %v3519 = vunpack.c.l.b16 %v3450
        %v3520 = vunpack.c.l.b16 %v3451
        %v3521 = vunpack.c.l.b16 %v3452
        %v3522 = vunpack.c.l.b16 %v3453
        %v3523 = vunpack.c.l.b16 %v3454
        %v3524 = vunpack.c.l.b16 %v3455
        %v3525 = vunpack.c.l.b16 %v3456
        %v3526 = vunpack.c.l.b16 %v3457
        %v3527 = vunpack.c.l.b16 %v3458
        %v3528 = vunpack.c.l.b16 %v3459
        %v3529 = vunpack.c.l.b16 %v3460
        %v3530 = vunpack.c.l.b16 %v3461
        %v3531 = vunpack.c.l.b16 %v3462
        %v3532 = vunpack.c.l.b16 %v3463
        %v3533 = vpack.c.b16 %v3502, %v3501
        %v3534 = vpack.c.b16 %v3504, %v3503
        %v3535 = vpack.c.b16 %v3506, %v3505
        %v3536 = vpack.c.b16 %v3508, %v3507
        %v3537 = vpack.c.b16 %v3510, %v3509
        %v3538 = vpack.c.b16 %v3512, %v3511
        %v3539 = vpack.c.b16 %v3514, %v3513
        %v3540 = vpack.c.b16 %v3516, %v3515
        %v3541 = vpack.c.b16 %v3518, %v3517
        %v3542 = vpack.c.b16 %v3520, %v3519
        %v3543 = vpack.c.b16 %v3522, %v3521
        %v3544 = vpack.c.b16 %v3524, %v3523
        %v3545 = vpack.c.b16 %v3526, %v3525
        %v3546 = vpack.c.b16 %v3528, %v3527
        %v3547 = vpack.c.b16 %v3530, %v3529
        %v3548 = vpack.c.b16 %v3532, %v3531
        %3565 = vmatprep.subr.bf16.mxu0 0
        %3566 = vmatpush1.bf16.msra.mxu0 %v3540
        %3567 = vmatprep.subr.bf16.mxu0 0
        %3568 = vmatpush1.bf16.msra.mxu0 %v3539
        %3569 = vmatprep.subr.bf16.mxu0 0
        %3570 = vmatpush1.bf16.msra.mxu0 %v3538
        %3571 = vmatprep.subr.bf16.mxu0 0
        %3572 = vmatpush1.bf16.msra.mxu0 %v3537
        %3573 = vmatprep.subr.bf16.mxu0 0
        %3574 = vmatpush1.bf16.msra.mxu0 %v3536
        %3575 = vmatprep.subr.bf16.mxu0 0
        %3576 = vmatpush1.bf16.msra.mxu0 %v3535
        %3577 = vmatprep.subr.bf16.mxu0 0
        %3578 = vmatpush1.bf16.msra.mxu0 %v3534
        %3579 = vmatprep.subr.bf16.mxu0 0
        %3580 = vmatpush1.bf16.msra.mxu0 %v3533
        %3581 = vmatprep.subr.bf16.mxu0 0
        %3582 = vmatpush2.bf16.msra.mxu0 %v3548
        %3583 = vmatprep.subr.bf16.mxu0 0
        %3584 = vmatpush2.bf16.msra.mxu0 %v3547
        %3585 = vmatprep.subr.bf16.mxu0 0
        %3586 = vmatpush2.bf16.msra.mxu0 %v3546
        %3587 = vmatprep.subr.bf16.mxu0 0
        %3588 = vmatpush2.bf16.msra.mxu0 %v3545
        %3589 = vmatprep.subr.bf16.mxu0 0
        %3590 = vmatpush2.bf16.msra.mxu0 %v3544
        %3591 = vmatprep.subr.bf16.mxu0 0
        %3592 = vmatpush2.bf16.msra.mxu0 %v3543
        %3593 = vmatprep.subr.bf16.mxu0 0
        %3594 = vmatpush2.bf16.msra.mxu0 %v3542
        %3595 = vmatprep.subr.bf16.mxu0 0
        %3596 = vmatpush2.bf16.msra.mxu0 %v3541
        %3597 = vmatprep.mubr.bf16.mxu0 %v3430
        %3598 = vmatmul.mubr.bf16.gmra.mxu0 %v3429
        %v3599 = vpop.f32.mrf.mxu0
        %v3600 = vadd.f32 %v3468, %v3599
        %v3601 = vpop.f32.mrf.mxu0
        %v3602 = vpop.f32.mrf.mxu0
        %v3603 = vpop.f32.mrf.mxu0
        %3604 = vdwg.mxu0
        %v3605 = vadd.f32 %v3600, %v3258
        %v3606 = vld [vmem:[%s2300 + $0x7] sm:$0x1]
        %v3607 = vld [vmem:[%s2300 + $0x8] sm:$0x1]
        %3608 = vadd.xlane.f32.xlu0 %v3605
        %v3609 = vpop.xlane.xlu0 %3608
        %v3610 = vmul.f32 %v3609, %v460
        %v3611 = vsub.f32 %v3605, %v3610
        %v3612 = vmul.f32 %v3611, %v3611
        %3613 = vadd.xlane.f32.xlu0 %v3612
        %v3614 = vpop.xlane.xlu0 %3613
        %v3615 = vmul.f32 %v3614, %v460
        %v3616 = vadd.f32 %v3615, 1e-05
        %v3617 = vrsqrt.pop %v3616
        %v3618 = vmul.f32 %v3611, %v3617
        %v3619 = vlaneseq
        %v3620 = vshrl.u32 %v3619, 7
        %v3621 = vsub.s32 0, %v3620
        %v3622 = vrot.slane %v3606, %v3621
        %v3623 = vmul.f32 %v3618, %v3622
        %v3624 = vlaneseq
        %v3625 = vshrl.u32 %v3624, 7
        %v3626 = vsub.s32 0, %v3625
        %v3627 = vrot.slane %v3607, %v3626
        %v3628 = vadd.f32 %v3623, %v3627
        %v3629 = vld [vmem:[#allocation8] sm:$0xff]
        %v3630 = vld [vmem:[#allocation8 + $0x8] sm:$0xff]
        %v3631 = vld [vmem:[#allocation8 + $0x10] sm:$0xff]
        %v3632 = vld [vmem:[#allocation8 + $0x18] sm:$0xff]
        %v3633 = vld [vmem:[#allocation8 + $0x20] sm:$0xff]
        %v3634 = vld [vmem:[#allocation8 + $0x28] sm:$0xff]
        %v3635 = vld [vmem:[#allocation8 + $0x30] sm:$0xff]
        %v3636 = vld [vmem:[#allocation8 + $0x38] sm:$0xff]
        %v3637 = vld [vmem:[#allocation8 + $0x40] sm:$0xff]
        %v3638 = vld [vmem:[#allocation8 + $0x48] sm:$0xff]
        %v3639 = vld [vmem:[#allocation8 + $0x50] sm:$0xff]
        %v3640 = vld [vmem:[#allocation8 + $0x58] sm:$0xff]
        %v3641 = vld [vmem:[#allocation8 + $0x60] sm:$0xff]
        %v3642 = vld [vmem:[#allocation8 + $0x68] sm:$0xff]
        %v3643 = vld [vmem:[#allocation8 + $0x70] sm:$0xff]
        %v3644 = vld [vmem:[#allocation8 + $0x78] sm:$0xff]
        %v3645 = vpack.c.bf16 %v3628, %v3628
        %v3646 = vld [vmem:[%s2 + $0x2] sm:$0x1]
        %v3663 = vunpack.c.l.b16 %v3629
        %v3664 = vunpack.c.l.b16 %v3630
        %v3665 = vunpack.c.l.b16 %v3631
        %v3666 = vunpack.c.l.b16 %v3632
        %v3667 = vunpack.c.l.b16 %v3633
        %v3668 = vunpack.c.l.b16 %v3634
        %v3669 = vunpack.c.l.b16 %v3635
        %v3670 = vunpack.c.l.b16 %v3636
        %v3671 = vunpack.c.l.b16 %v3637
        %v3672 = vunpack.c.l.b16 %v3638
        %v3673 = vunpack.c.l.b16 %v3639
        %v3674 = vunpack.c.l.b16 %v3640
        %v3675 = vunpack.c.l.b16 %v3641
        %v3676 = vunpack.c.l.b16 %v3642
        %v3677 = vunpack.c.l.b16 %v3643
        %v3678 = vunpack.c.l.b16 %v3644
        %v3679 = vpack.c.b16 %v3664, %v3663
        %v3680 = vpack.c.b16 %v3666, %v3665
        %v3681 = vpack.c.b16 %v3668, %v3667
        %v3682 = vpack.c.b16 %v3670, %v3669
        %v3683 = vpack.c.b16 %v3672, %v3671
        %v3684 = vpack.c.b16 %v3674, %v3673
        %v3685 = vpack.c.b16 %v3676, %v3675
        %v3686 = vpack.c.b16 %v3678, %v3677
        %3695 = vmatprep.subr.bf16.mxu0 0
        %3696 = vmatpush1.bf16.msra.mxu0 %v3686
        %3697 = vmatprep.subr.bf16.mxu0 0
        %3698 = vmatpush1.bf16.msra.mxu0 %v3685
        %3699 = vmatprep.subr.bf16.mxu0 0
        %3700 = vmatpush1.bf16.msra.mxu0 %v3684
        %3701 = vmatprep.subr.bf16.mxu0 0
        %3702 = vmatpush1.bf16.msra.mxu0 %v3683
        %3703 = vmatprep.subr.bf16.mxu0 0
        %3704 = vmatpush1.bf16.msra.mxu0 %v3682
        %3705 = vmatprep.subr.bf16.mxu0 0
        %3706 = vmatpush1.bf16.msra.mxu0 %v3681
        %3707 = vmatprep.subr.bf16.mxu0 0
        %3708 = vmatpush1.bf16.msra.mxu0 %v3680
        %3709 = vmatprep.subr.bf16.mxu0 0
        %3710 = vmatpush1.bf16.msra.mxu0 %v3679
        %3711 = vmatprep.subr.bf16.mxu0 0
        %3712 = vmatpush2.bf16.msra.mxu0 0
        %3713 = vmatprep.subr.bf16.mxu0 0
        %3714 = vmatpush2.bf16.msra.mxu0 0
        %3715 = vmatprep.subr.bf16.mxu0 0
        %3716 = vmatpush2.bf16.msra.mxu0 0
        %3717 = vmatprep.subr.bf16.mxu0 0
        %3718 = vmatpush2.bf16.msra.mxu0 0
        %3719 = vmatprep.subr.bf16.mxu0 0
        %3720 = vmatpush2.bf16.msra.mxu0 0
        %3721 = vmatprep.subr.bf16.mxu0 0
        %3722 = vmatpush2.bf16.msra.mxu0 0
        %3723 = vmatprep.subr.bf16.mxu0 0
        %3724 = vmatpush2.bf16.msra.mxu0 0
        %3725 = vmatprep.subr.bf16.mxu0 0
        %3726 = vmatpush2.bf16.msra.mxu0 0
        %3727 = vmatprep.mubr.bf16.mxu0 0
        %3728 = vmatmul.mubr.bf16.gmra.mxu0 %v3645
        %v3729 = vpop.f32.mrf.mxu0
        %v3730 = vadd.f32 %v3646, %v3729
        %v3731 = vpop.f32.mrf.mxu0
        %v3732 = vpop.f32.mrf.mxu0
        %v3733 = vpop.f32.mrf.mxu0
        %3734 = vdwg.mxu0
        %v3735 = vtanh.pop %v3730
        %v3736 = vpack.c.bf16 %v3735, %v3735
        %s3737 = sld [smem:[#allocation2]]
        %v3738 = vstv %s3737
        %v3739 = vunpack.c.h.b16 %v3629
        %v3740 = vunpack.c.h.b16 %v3630
        %v3741 = vunpack.c.h.b16 %v3631
        %v3742 = vunpack.c.h.b16 %v3632
        %v3743 = vunpack.c.h.b16 %v3633
        %v3744 = vunpack.c.h.b16 %v3634
        %v3745 = vunpack.c.h.b16 %v3635
        %v3746 = vunpack.c.h.b16 %v3636
        %v3747 = vunpack.c.h.b16 %v3637
        %v3748 = vunpack.c.h.b16 %v3638
        %v3749 = vunpack.c.h.b16 %v3639
        %v3750 = vunpack.c.h.b16 %v3640
        %v3751 = vunpack.c.h.b16 %v3641
        %v3752 = vunpack.c.h.b16 %v3642
        %v3753 = vunpack.c.h.b16 %v3643
        %v3754 = vunpack.c.h.b16 %v3644
        %v3755 = vpack.c.b16 %v3740, %v3739
        %v3756 = vpack.c.b16 %v3742, %v3741
        %v3757 = vpack.c.b16 %v3744, %v3743
        %v3758 = vpack.c.b16 %v3746, %v3745
        %v3759 = vpack.c.b16 %v3748, %v3747
        %v3760 = vpack.c.b16 %v3750, %v3749
        %v3761 = vpack.c.b16 %v3752, %v3751
        %v3762 = vpack.c.b16 %v3754, %v3753
        %3771 = vmatprep.subr.bf16.mxu0 0
        %3772 = vmatpush1.bf16.msra.mxu0 %v3762
        %3773 = vmatprep.subr.bf16.mxu0 0
        %3774 = vmatpush1.bf16.msra.mxu0 %v3761
        %3775 = vmatprep.subr.bf16.mxu0 0
        %3776 = vmatpush1.bf16.msra.mxu0 %v3760
        %3777 = vmatprep.subr.bf16.mxu0 0
        %3778 = vmatpush1.bf16.msra.mxu0 %v3759
        %3779 = vmatprep.subr.bf16.mxu0 0
        %3780 = vmatpush1.bf16.msra.mxu0 %v3758
        %3781 = vmatprep.subr.bf16.mxu0 0
        %3782 = vmatpush1.bf16.msra.mxu0 %v3757
        %3783 = vmatprep.subr.bf16.mxu0 0
        %3784 = vmatpush1.bf16.msra.mxu0 %v3756
        %3785 = vmatprep.subr.bf16.mxu0 0
        %3786 = vmatpush1.bf16.msra.mxu0 %v3755
        %3787 = vmatprep.subr.bf16.mxu0 0
        %3788 = vmatpush2.bf16.msra.mxu0 0
        %3789 = vmatprep.subr.bf16.mxu0 0
        %3790 = vmatpush2.bf16.msra.mxu0 0
        %3791 = vmatprep.subr.bf16.mxu0 0
        %3792 = vmatpush2.bf16.msra.mxu0 0
        %3793 = vmatprep.subr.bf16.mxu0 0
        %3794 = vmatpush2.bf16.msra.mxu0 0
        %3795 = vmatprep.subr.bf16.mxu0 0
        %3796 = vmatpush2.bf16.msra.mxu0 0
        %3797 = vmatprep.subr.bf16.mxu0 0
        %3798 = vmatpush2.bf16.msra.mxu0 0
        %3799 = vmatprep.subr.bf16.mxu0 0
        %3800 = vmatpush2.bf16.msra.mxu0 0
        %3801 = vmatprep.subr.bf16.mxu0 0
        %3802 = vmatpush2.bf16.msra.mxu0 0
        %3803 = vmatprep.mubr.bf16.mxu0 0
        %3804 = vmatmul.mubr.bf16.gmra.mxu0 %v3736
        %v3805 = vpop.f32.mrf.mxu0
        %v3806 = vadd.f32 %v3738, %v3805
        %v3807 = vpop.f32.mrf.mxu0
        %v3808 = vpop.f32.mrf.mxu0
        %v3809 = vpop.f32.mrf.mxu0
        %3810 = vdwg.mxu0
        %3811 = vst [vmem:[%s453] sm:$0x1] %v3806
        %p3812 = scmp.lt.s32.totalorder %s26, 1
        %s3813 = scalar_select %p3812, %s26, 1
        %s3814 = scalar_lea.vmem %s11, %s3813
        // Predicated region
        $region81: #{forward.1} parent=63 // pred_check
          %p3815 = pneg %p285
        $region82: #{forward.1} parent=63 // pred_check_branch
          %3817 = sbr.rel (%p3815) target = $region84
        $region83: #{forward.1} parent=63 // pred_region
          _
        $region84: #{forward.1} parent=63 // pred_fallthru
          _
      $region64: #{forward.1} parent=5 // pred_fallthru
        _
      %p3818 = scmp.le.s32.totalorder 2, %s21
      // Predicated region
      $region85: #{forward.1} parent=5 // pred_check
        %p3819 = pneg %p3818
      $region86: #{forward.1} parent=5 // pred_check_branch
        %3821 = sbr.rel (%p3819) target = $region88
      $region87: #{forward.1} parent=5 // pred_region
        %s3822 = ssub.s32 %s21, 2
        // Predicated region
        $region89: #{forward.1} parent=87 // pred_check
          %p3823 = pneg %p291
        $region90: #{forward.1} parent=87 // pred_check_branch
          %3825 = sbr.rel (%p3823) target = $region92
        $region91: #{forward.1} parent=87 // pred_region
          %p3826 = scmp.lt.s32.totalorder %s27, 1
          %s3827 = scalar_select %p3826, %s27, 1
          %s3828 = scalar_lea.vmem %s11, %s3827
        $region92: #{forward.1} parent=87 // pred_fallthru
          _
      $region88: #{forward.1} parent=5 // pred_fallthru
        _
    $region6: #{forward.1} parent=1 // loop_footer
      %s25 = sadd.s32 1, %s21
    $region7: #{forward.1} parent=1 // loop_footer_branch
      %20 = sbr.rel target = $region3
    $region8: #{forward.1} parent=1 // loop_exit
      _
    %3829 = vsyncpa [#allocation4], 1
    %s3830 = scalar_lea.sflag [#allocation4], 1
    %3831 = vsyncpa %s3830, 1
    %3832 = vsyncpa [#allocation6], 1
    %3833 = vsyncpa [#allocation9], 1

</llo_original>
